<compile_context>
chip_gen: v5e
topology: v5e:2x2
jax: 0.10.0
libtpu: 0.0.40
codegen_flags: <defaults>
</compile_context>

<pallas_src>
import jax
import jax.numpy as jnp
import numpy as np
from jax.experimental import pallas as pl
from jax.experimental.pallas import tpu as pltpu


def bottleneck_kernel(x_ref, w1_ref, w2_ref, w3_ref,
                      b1_ref, b2_ref, b3_ref,
                      o_ref, h1p_ref):
    # x_ref block: (1, H, W, Cin) — one image per grid step, NHWC.
    H, W, Cin = x_ref.shape[1], x_ref.shape[2], x_ref.shape[3]
    P = w1_ref.shape[1]
    Cout = o_ref.shape[3]
    cdt = w1_ref.dtype                     # matmul operand dtype (f32 or bf16)

    # Zero the padded scratch ONCE: the [1:H+1, 1:W+1] interior is fully
    # overwritten every step and the border / Wp-pad columns are never
    # written, so zeros persist across grid iterations (scratch is persistent).
    @pl.when(pl.program_id(0) == 0)
    def _():
        h1p_ref[...] = jnp.zeros_like(h1p_ref)

    xf = x_ref[0].reshape(H * W, Cin).astype(cdt)           # (HW, Cin)

    # ---- conv1 (1x1, BN scale pre-folded into w1) + bias + relu ----
    h1 = jnp.dot(xf, w1_ref[...], preferred_element_type=jnp.float32)
    h1 = jnp.maximum(h1 + b1_ref[...], 0.0)                 # (HW, P) f32

    # ---- conv2 (3x3, stride 1, pad 1) ----
    # Write h1 into the zero-padded scratch, then accumulate 9 shifted-window
    # matmuls directly from the scratch (no im2col slab build).
    h1p_ref[pl.ds(1, H), pl.ds(1, W), :] = (
        h1.reshape(H, W, P).astype(h1p_ref.dtype))
    h2 = jnp.zeros((H * W, P), jnp.float32)
    for dh in range(3):
        for dw in range(3):
            win = h1p_ref[pl.ds(dh, H), pl.ds(dw, W), :].reshape(H * W, P)
            h2 = h2 + jnp.dot(win, w2_ref[dh * 3 + dw],
                              preferred_element_type=jnp.float32)
    h2 = jnp.maximum(h2 + b2_ref[...], 0.0)                 # (HW, P) f32

    # ---- conv3 (1x1) + bias + residual add + relu ----
    h3 = jnp.dot(h2.astype(cdt), w3_ref[...],
                 preferred_element_type=jnp.float32)
    h3 = h3 + b3_ref[...]
    res = x_ref[0].reshape(H * W, Cin).astype(jnp.float32)  # re-read, not held
    out = jnp.maximum(h3 + res, 0.0)
    o_ref[0] = out.reshape(H, W, Cout).astype(o_ref.dtype)


def _fold_params(params, compute_dtype):
    """Fold eval-mode BN scale into the conv weights; biases stay f32."""
    w1, w2, w3, s1, b1, s2, b2, s3, b3 = params
    Cin, P = w1.shape
    Cout = w3.shape[1]
    w1s = (w1 * s1.reshape(1, P)).astype(compute_dtype)                  # (Cin, P)
    w2s = (w2 * s2.reshape(1, 1, 1, P)).reshape(9, P, P).astype(compute_dtype)
    w3s = (w3 * s3.reshape(1, Cout)).astype(compute_dtype)               # (P, Cout)
    b1f = b1.reshape(1, P).astype(jnp.float32)
    b2f = b2.reshape(1, P).astype(jnp.float32)
    b3f = b3.reshape(1, Cout).astype(jnp.float32)
    return w1s, w2s, w3s, b1f, b2f, b3f


def bottleneck_pallas_nhwc(x, params, compute_dtype=jnp.float32):
    """Bottleneck forward, NHWC in / NHWC out (no layout transposes).

    x: (N, H, W, Cin), any float dtype (f32 or bf16); output has x.dtype.
    params = (w1, w2, w3, s1, b1, s2, b2, s3, b3) with BN folded to scale/bias.
    """
    N, H, W, Cin = x.shape
    w1s, w2s, w3s, b1f, b2f, b3f = _fold_params(params, compute_dtype)
    P = w1s.shape[1]
    Cout = w3s.shape[1]
    assert Cout == Cin, "downsample=None requires inplanes == planes*4"

    # Padded-scratch width, rounded up so W-windows stay sublane-friendly.
    Wp = ((W + 2 + 7) // 8) * 8

    def full(a):
        return pl.BlockSpec(a.shape, lambda n, _nd=a.ndim: (0,) * _nd)

    # --- VMEM budget: blocks (double-buffered), weights, scratch, temporaries.
    elt_x = jnp.dtype(x.dtype).itemsize
    elt_c = jnp.dtype(compute_dtype).itemsize
    hw = H * W
    io = 2 * (hw * Cin * elt_x + hw * Cout * elt_x)           # x + out blocks, 2-deep
    weights = ((w1s.size + w2s.size + w3s.size) * elt_c
               + (b1f.size + b2f.size + b3f.size) * 4)
    scratch = (H + 2) * Wp * P * elt_c
    temporaries = (hw * Cin * elt_c                           # xf cast copy
                   + 2 * hw * P * 4                           # h1 + h2 accumulator
                   + 2 * hw * P * elt_c                       # live window / cast copies
                   + hw * Cout * 4                            # h3
                   + hw * Cin * 4                             # residual (f32)
                   + hw * Cout * elt_x)                       # output cast
    need = io + weights + scratch + temporaries + (4 << 20)   # + slack
    try:
        cap = int(pltpu.get_tpu_info().vmem_capacity_bytes)
    except Exception:
        cap = 128 << 20
    vmem_limit = int(min(cap * 3 // 4, max(32 << 20, need)))

    out = pl.pallas_call(
        bottleneck_kernel,
        out_shape=jax.ShapeDtypeStruct((N, H, W, Cout), x.dtype),
        grid=(N,),
        in_specs=[pl.BlockSpec((1, H, W, Cin), lambda n: (n, 0, 0, 0)),
                  full(w1s), full(w2s), full(w3s),
                  full(b1f), full(b2f), full(b3f)],
        out_specs=pl.BlockSpec((1, H, W, Cout), lambda n: (n, 0, 0, 0)),
        scratch_shapes=[pltpu.VMEM((H + 2, Wp, P), compute_dtype)],
        compiler_params=pltpu.CompilerParams(
            dimension_semantics=("arbitrary",),   # zero-once scratch needs sequential visits
            vmem_limit_bytes=vmem_limit),
    )(x, w1s, w2s, w3s, b1f, b2f, b3f)
    return out


def bottleneck_pallas_nchw(x_nchw, params, compute_dtype=jnp.float32):
    """PyTorch-layout shim (adds two full-tensor HBM transposes; prefer NHWC)."""
    x = jnp.transpose(x_nchw, (0, 2, 3, 1))
    out = bottleneck_pallas_nhwc(x, params, compute_dtype)
    return jnp.transpose(out, (0, 3, 1, 2))


def bottleneck_ref_nhwc(x_nhwc, params):
    """Pure-JAX NHWC reference (eval-mode BN folded to scale/bias)."""
    w1, w2, w3, s1, b1, s2, b2, s3, b3 = params
    x = x_nhwc.astype(jnp.float32)
    dn = ('NHWC', 'HWIO', 'NHWC')

    def conv(inp, w, pad):
        return jax.lax.conv_general_dilated(inp, w, (1, 1), pad,
                                            dimension_numbers=dn)

    h = conv(x, w1.reshape(1, 1, *w1.shape), 'VALID')
    h = jnp.maximum(h * s1 + b1, 0.0)
    h = conv(h, w2, 'SAME')
    h = jnp.maximum(h * s2 + b2, 0.0)
    h = conv(h, w3.reshape(1, 1, *w3.shape), 'VALID')
    h = h * s3 + b3
    return jnp.maximum(h + x, 0.0)


if __name__ == "__main__":
    key = jax.random.PRNGKey(0)
    N, planes, H, W = 2, 4, 16, 16
    inplanes = planes * 4                                    # expansion = 4

    keys = jax.random.split(key, 16)
    w1 = 0.1 * jax.random.normal(keys[0], (inplanes, planes), jnp.float32)
    w2 = 0.1 * jax.random.normal(keys[1], (3, 3, planes, planes), jnp.float32)
    w3 = 0.1 * jax.random.normal(keys[2], (planes, inplanes), jnp.float32)

    def bn_fold(kg, kb, km, kv, C, eps=1e-5):
        gamma = 1.0 + 0.1 * jax.random.normal(kg, (C,), jnp.float32)
        beta = 0.1 * jax.random.normal(kb, (C,), jnp.float32)
        mean = 0.1 * jax.random.normal(km, (C,), jnp.float32)
        var = jnp.abs(1.0 + 0.1 * jax.random.normal(kv, (C,), jnp.float32))
        scale = gamma / jnp.sqrt(var + eps)
        bias = beta - mean * scale
        return scale.reshape(1, C), bias.reshape(1, C)

    s1, b1 = bn_fold(keys[3], keys[4], keys[5], keys[6], planes)
    s2, b2 = bn_fold(keys[7], keys[8], keys[9], keys[10], planes)
    s3, b3 = bn_fold(keys[11], keys[12], keys[13], keys[14], inplanes)

    x_nhwc = jax.random.normal(keys[15], (N, H, W, inplanes), jnp.float32)
    params = (w1, w2, w3, s1, b1, s2, b2, s3, b3)

    ref = bottleneck_ref_nhwc(x_nhwc, params)

    # f32 activations + f32 matmul operands, NHWC end-to-end (no transposes).
    out = jax.block_until_ready(bottleneck_pallas_nhwc(x_nhwc, params,
                                                       jnp.float32))
    np.testing.assert_allclose(np.asarray(out), np.asarray(ref),
                               atol=1e-4, rtol=1e-4)

    # bf16 activations + bf16 matmul operands; f32 accumulation / epilogue.
    x_bf16 = x_nhwc.astype(jnp.bfloat16)
    out_bf = jax.block_until_ready(bottleneck_pallas_nhwc(x_bf16, params,
                                                          jnp.bfloat16))
    np.testing.assert_allclose(np.asarray(out_bf).astype(np.float32),
                               np.asarray(ref), atol=1e-1, rtol=1e-1)

    # PyTorch-layout (NCHW) shim parity.
    x_nchw = jnp.transpose(x_nhwc, (0, 3, 1, 2))
    out_nchw = jax.block_until_ready(bottleneck_pallas_nchw(x_nchw, params,
                                                            jnp.float32))
    np.testing.assert_allclose(np.asarray(out_nchw),
                               np.asarray(jnp.transpose(ref, (0, 3, 1, 2))),
                               atol=1e-4, rtol=1e-4)

    print("KERNEL_OK")
</pallas_src>

<mosaic_0001>
module attributes {stable_mosaic.version = 11 : i64} {
  func.func @bottleneck_kernel(%arg0: i32, %arg1: memref<1x16x16x16xf32, #tpu.memory_space<vmem>>, %arg2: memref<16x4xf32, #tpu.memory_space<vmem>>, %arg3: memref<9x4x4xf32, #tpu.memory_space<vmem>>, %arg4: memref<4x16xf32, #tpu.memory_space<vmem>>, %arg5: memref<1x4xf32, #tpu.memory_space<vmem>>, %arg6: memref<1x4xf32, #tpu.memory_space<vmem>>, %arg7: memref<1x16xf32, #tpu.memory_space<vmem>>, %arg8: memref<1x16x16x16xf32, #tpu.memory_space<vmem>>, %arg9: memref<18x24x4xf32, #tpu.memory_space<vmem>>) attributes {dimension_semantics = [#tpu.dimension_semantics<arbitrary>], iteration_bounds = array<i64: 2>, scalar_prefetch = 0 : i64, scratch_operands = 1 : i64, tpu.core_type = #tpu.core_type<tc>, window_params = [{transform_indices = @transform_0, window_bounds = array<i64: 1, 16, 16, 16>}, {pipeline_mode = #tpu.pipeline_mode<synchronous>, transform_indices = @transform_1, window_bounds = array<i64: 16, 4>}, {pipeline_mode = #tpu.pipeline_mode<synchronous>, transform_indices = @transform_2, window_bounds = array<i64: 9, 4, 4>}, {pipeline_mode = #tpu.pipeline_mode<synchronous>, transform_indices = @transform_3, window_bounds = array<i64: 4, 16>}, {pipeline_mode = #tpu.pipeline_mode<synchronous>, transform_indices = @transform_4, window_bounds = array<i64: 1, 4>}, {pipeline_mode = #tpu.pipeline_mode<synchronous>, transform_indices = @transform_5, window_bounds = array<i64: 1, 4>}, {pipeline_mode = #tpu.pipeline_mode<synchronous>, transform_indices = @transform_6, window_bounds = array<i64: 1, 16>}, {transform_indices = @transform_7, window_bounds = array<i64: 1, 16, 16, 16>}]} {
    %c0_i32 = arith.constant 0 : i32
    %0 = arith.cmpi eq, %arg0, %c0_i32 : i32
    %1 = arith.extui %0 : i1 to i32
    %c0_i32_0 = arith.constant 0 : i32
    %2 = arith.cmpi ne, %1, %c0_i32_0 : i32
    scf.if %2 {
      %cst_85 = arith.constant 0.000000e+00 : f32
      %90 = vector.broadcast %cst_85 : f32 to vector<18x24x4xf32>
      %c0_86 = arith.constant 0 : index
      %c0_87 = arith.constant 0 : index
      %c0_88 = arith.constant 0 : index
      %91 = vector.load %arg9[%c0_86, %c0_87, %c0_88] : memref<18x24x4xf32, #tpu.memory_space<vmem>>, vector<18x24x4xf32>
      tpu.vector_store %arg9[%c0_86, %c0_87, %c0_88], %90 {strides = array<i32>} : memref<18x24x4xf32, #tpu.memory_space<vmem>>, vector<18x24x4xf32>,
    } else {
    }
    %c0 = arith.constant 0 : index
    %c0_1 = arith.constant 0 : index
    %c0_2 = arith.constant 0 : index
    %c0_3 = arith.constant 0 : index
    %3 = vector.load %arg1[%c0, %c0_1, %c0_2, %c0_3] : memref<1x16x16x16xf32, #tpu.memory_space<vmem>>, vector<1x16x16x16xf32>
    %4 = vector.shape_cast %3 : vector<1x16x16x16xf32> to vector<16x16x16xf32>
    %5 = vector.shape_cast %4 : vector<16x16x16xf32> to vector<256x16xf32>
    %c0_4 = arith.constant 0 : index
    %c0_5 = arith.constant 0 : index
    %6 = vector.load %arg2[%c0_4, %c0_5] : memref<16x4xf32, #tpu.memory_space<vmem>>, vector<16x4xf32>
    %cst = arith.constant dense<0.000000e+00> : vector<256x4xf32>
    %7 = tpu.matmul %5, %6, %cst {dimension_numbers = #tpu.dot_dimension_numbers<[1], [0], [0], [1], [0, 0, 1, 1], [], []>} : vector<256x16xf32>, vector<16x4xf32>, vector<256x4xf32> -> vector<256x4xf32>
    %c0_6 = arith.constant 0 : index
    %c0_7 = arith.constant 0 : index
    %8 = vector.load %arg5[%c0_6, %c0_7] : memref<1x4xf32, #tpu.memory_space<vmem>>, vector<1x4xf32>
    %9 = vector.broadcast %8 : vector<1x4xf32> to vector<256x4xf32>
    %10 = arith.addf %7, %9 : vector<256x4xf32>
    %cst_8 = arith.constant 0.000000e+00 : f32
    %11 = vector.broadcast %cst_8 : f32 to vector<256x4xf32>
    %12 = arith.maximumf %10, %11 : vector<256x4xf32>
    %13 = vector.shape_cast %12 : vector<256x4xf32> to vector<16x16x4xf32>
    %c1 = arith.constant 1 : index
    %c1_9 = arith.constant 1 : index
    %c0_10 = arith.constant 0 : index
    %14 = vector.load %arg9[%c1, %c1_9, %c0_10] : memref<18x24x4xf32, #tpu.memory_space<vmem>>, vector<16x16x4xf32>
    tpu.vector_store %arg9[%c1, %c1_9, %c0_10], %13 {strides = array<i32>} : memref<18x24x4xf32, #tpu.memory_space<vmem>>, vector<16x16x4xf32>,
    %cst_11 = arith.constant 0.000000e+00 : f32
    %15 = vector.broadcast %cst_11 : f32 to vector<256x4xf32>
    %c0_12 = arith.constant 0 : index
    %c0_13 = arith.constant 0 : index
    %c0_14 = arith.constant 0 : index
    %16 = vector.load %arg9[%c0_12, %c0_13, %c0_14] : memref<18x24x4xf32, #tpu.memory_space<vmem>>, vector<16x16x4xf32>
    %17 = vector.shape_cast %16 : vector<16x16x4xf32> to vector<256x4xf32>
    %c0_15 = arith.constant 0 : index
    %c0_16 = arith.constant 0 : index
    %c0_17 = arith.constant 0 : index
    %18 = vector.load %arg3[%c0_15, %c0_16, %c0_17] : memref<9x4x4xf32, #tpu.memory_space<vmem>>, vector<1x4x4xf32>
    %19 = vector.shape_cast %18 : vector<1x4x4xf32> to vector<4x4xf32>
    %cst_18 = arith.constant dense<0.000000e+00> : vector<256x4xf32>
    %20 = tpu.matmul %17, %19, %cst_18 {dimension_numbers = #tpu.dot_dimension_numbers<[1], [0], [0], [1], [0, 0, 1, 1], [], []>} : vector<256x4xf32>, vector<4x4xf32>, vector<256x4xf32> -> vector<256x4xf32>
    %21 = arith.addf %15, %20 : vector<256x4xf32>
    %c0_19 = arith.constant 0 : index
    %c1_20 = arith.constant 1 : index
    %c0_21 = arith.constant 0 : index
    %22 = vector.load %arg9[%c0_19, %c1_20, %c0_21] : memref<18x24x4xf32, #tpu.memory_space<vmem>>, vector<16x16x4xf32>
    %23 = vector.shape_cast %22 : vector<16x16x4xf32> to vector<256x4xf32>
    %c1_22 = arith.constant 1 : index
    %c0_23 = arith.constant 0 : index
    %c0_24 = arith.constant 0 : index
    %24 = vector.load %arg3[%c1_22, %c0_23, %c0_24] : memref<9x4x4xf32, #tpu.memory_space<vmem>>, vector<1x4x4xf32>
    %25 = vector.shape_cast %24 : vector<1x4x4xf32> to vector<4x4xf32>
    %cst_25 = arith.constant dense<0.000000e+00> : vector<256x4xf32>
    %26 = tpu.matmul %23, %25, %cst_25 {dimension_numbers = #tpu.dot_dimension_numbers<[1], [0], [0], [1], [0, 0, 1, 1], [], []>} : vector<256x4xf32>, vector<4x4xf32>, vector<256x4xf32> -> vector<256x4xf32>
    %27 = arith.addf %21, %26 : vector<256x4xf32>
    %c0_26 = arith.constant 0 : index
    %c2 = arith.constant 2 : index
    %c0_27 = arith.constant 0 : index
    %28 = vector.load %arg9[%c0_26, %c2, %c0_27] : memref<18x24x4xf32, #tpu.memory_space<vmem>>, vector<16x16x4xf32>
    %29 = vector.shape_cast %28 : vector<16x16x4xf32> to vector<256x4xf32>
    %c2_28 = arith.constant 2 : index
    %c0_29 = arith.constant 0 : index
    %c0_30 = arith.constant 0 : index
    %30 = vector.load %arg3[%c2_28, %c0_29, %c0_30] : memref<9x4x4xf32, #tpu.memory_space<vmem>>, vector<1x4x4xf32>
    %31 = vector.shape_cast %30 : vector<1x4x4xf32> to vector<4x4xf32>
    %cst_31 = arith.constant dense<0.000000e+00> : vector<256x4xf32>
    %32 = tpu.matmul %29, %31, %cst_31 {dimension_numbers = #tpu.dot_dimension_numbers<[1], [0], [0], [1], [0, 0, 1, 1], [], []>} : vector<256x4xf32>, vector<4x4xf32>, vector<256x4xf32> -> vector<256x4xf32>
    %33 = arith.addf %27, %32 : vector<256x4xf32>
    %c1_32 = arith.constant 1 : index
    %c0_33 = arith.constant 0 : index
    %c0_34 = arith.constant 0 : index
    %34 = vector.load %arg9[%c1_32, %c0_33, %c0_34] : memref<18x24x4xf32, #tpu.memory_space<vmem>>, vector<16x16x4xf32>
    %35 = vector.shape_cast %34 : vector<16x16x4xf32> to vector<256x4xf32>
    %c3 = arith.constant 3 : index
    %c0_35 = arith.constant 0 : index
    %c0_36 = arith.constant 0 : index
    %36 = vector.load %arg3[%c3, %c0_35, %c0_36] : memref<9x4x4xf32, #tpu.memory_space<vmem>>, vector<1x4x4xf32>
    %37 = vector.shape_cast %36 : vector<1x4x4xf32> to vector<4x4xf32>
    %cst_37 = arith.constant dense<0.000000e+00> : vector<256x4xf32>
    %38 = tpu.matmul %35, %37, %cst_37 {dimension_numbers = #tpu.dot_dimension_numbers<[1], [0], [0], [1], [0, 0, 1, 1], [], []>} : vector<256x4xf32>, vector<4x4xf32>, vector<256x4xf32> -> vector<256x4xf32>
    %39 = arith.addf %33, %38 : vector<256x4xf32>
    %c1_38 = arith.constant 1 : index
    %c1_39 = arith.constant 1 : index
    %c0_40 = arith.constant 0 : index
    %40 = vector.load %arg9[%c1_38, %c1_39, %c0_40] : memref<18x24x4xf32, #tpu.memory_space<vmem>>, vector<16x16x4xf32>
    %41 = vector.shape_cast %40 : vector<16x16x4xf32> to vector<256x4xf32>
    %c4 = arith.constant 4 : index
    %c0_41 = arith.constant 0 : index
    %c0_42 = arith.constant 0 : index
    %42 = vector.load %arg3[%c4, %c0_41, %c0_42] : memref<9x4x4xf32, #tpu.memory_space<vmem>>, vector<1x4x4xf32>
    %43 = vector.shape_cast %42 : vector<1x4x4xf32> to vector<4x4xf32>
    %cst_43 = arith.constant dense<0.000000e+00> : vector<256x4xf32>
    %44 = tpu.matmul %41, %43, %cst_43 {dimension_numbers = #tpu.dot_dimension_numbers<[1], [0], [0], [1], [0, 0, 1, 1], [], []>} : vector<256x4xf32>, vector<4x4xf32>, vector<256x4xf32> -> vector<256x4xf32>
    %45 = arith.addf %39, %44 : vector<256x4xf32>
    %c1_44 = arith.constant 1 : index
    %c2_45 = arith.constant 2 : index
    %c0_46 = arith.constant 0 : index
    %46 = vector.load %arg9[%c1_44, %c2_45, %c0_46] : memref<18x24x4xf32, #tpu.memory_space<vmem>>, vector<16x16x4xf32>
    %47 = vector.shape_cast %46 : vector<16x16x4xf32> to vector<256x4xf32>
    %c5 = arith.constant 5 : index
    %c0_47 = arith.constant 0 : index
    %c0_48 = arith.constant 0 : index
    %48 = vector.load %arg3[%c5, %c0_47, %c0_48] : memref<9x4x4xf32, #tpu.memory_space<vmem>>, vector<1x4x4xf32>
    %49 = vector.shape_cast %48 : vector<1x4x4xf32> to vector<4x4xf32>
    %cst_49 = arith.constant dense<0.000000e+00> : vector<256x4xf32>
    %50 = tpu.matmul %47, %49, %cst_49 {dimension_numbers = #tpu.dot_dimension_numbers<[1], [0], [0], [1], [0, 0, 1, 1], [], []>} : vector<256x4xf32>, vector<4x4xf32>, vector<256x4xf32> -> vector<256x4xf32>
    %51 = arith.addf %45, %50 : vector<256x4xf32>
    %c2_50 = arith.constant 2 : index
    %c0_51 = arith.constant 0 : index
    %c0_52 = arith.constant 0 : index
    %52 = vector.load %arg9[%c2_50, %c0_51, %c0_52] : memref<18x24x4xf32, #tpu.memory_space<vmem>>, vector<16x16x4xf32>
    %53 = vector.shape_cast %52 : vector<16x16x4xf32> to vector<256x4xf32>
    %c6 = arith.constant 6 : index
    %c0_53 = arith.constant 0 : index
    %c0_54 = arith.constant 0 : index
    %54 = vector.load %arg3[%c6, %c0_53, %c0_54] : memref<9x4x4xf32, #tpu.memory_space<vmem>>, vector<1x4x4xf32>
    %55 = vector.shape_cast %54 : vector<1x4x4xf32> to vector<4x4xf32>
    %cst_55 = arith.constant dense<0.000000e+00> : vector<256x4xf32>
    %56 = tpu.matmul %53, %55, %cst_55 {dimension_numbers = #tpu.dot_dimension_numbers<[1], [0], [0], [1], [0, 0, 1, 1], [], []>} : vector<256x4xf32>, vector<4x4xf32>, vector<256x4xf32> -> vector<256x4xf32>
    %57 = arith.addf %51, %56 : vector<256x4xf32>
    %c2_56 = arith.constant 2 : index
    %c1_57 = arith.constant 1 : index
    %c0_58 = arith.constant 0 : index
    %58 = vector.load %arg9[%c2_56, %c1_57, %c0_58] : memref<18x24x4xf32, #tpu.memory_space<vmem>>, vector<16x16x4xf32>
    %59 = vector.shape_cast %58 : vector<16x16x4xf32> to vector<256x4xf32>
    %c7 = arith.constant 7 : index
    %c0_59 = arith.constant 0 : index
    %c0_60 = arith.constant 0 : index
    %60 = vector.load %arg3[%c7, %c0_59, %c0_60] : memref<9x4x4xf32, #tpu.memory_space<vmem>>, vector<1x4x4xf32>
    %61 = vector.shape_cast %60 : vector<1x4x4xf32> to vector<4x4xf32>
    %cst_61 = arith.constant dense<0.000000e+00> : vector<256x4xf32>
    %62 = tpu.matmul %59, %61, %cst_61 {dimension_numbers = #tpu.dot_dimension_numbers<[1], [0], [0], [1], [0, 0, 1, 1], [], []>} : vector<256x4xf32>, vector<4x4xf32>, vector<256x4xf32> -> vector<256x4xf32>
    %63 = arith.addf %57, %62 : vector<256x4xf32>
    %c2_62 = arith.constant 2 : index
    %c2_63 = arith.constant 2 : index
    %c0_64 = arith.constant 0 : index
    %64 = vector.load %arg9[%c2_62, %c2_63, %c0_64] : memref<18x24x4xf32, #tpu.memory_space<vmem>>, vector<16x16x4xf32>
    %65 = vector.shape_cast %64 : vector<16x16x4xf32> to vector<256x4xf32>
    %c8 = arith.constant 8 : index
    %c0_65 = arith.constant 0 : index
    %c0_66 = arith.constant 0 : index
    %66 = vector.load %arg3[%c8, %c0_65, %c0_66] : memref<9x4x4xf32, #tpu.memory_space<vmem>>, vector<1x4x4xf32>
    %67 = vector.shape_cast %66 : vector<1x4x4xf32> to vector<4x4xf32>
    %cst_67 = arith.constant dense<0.000000e+00> : vector<256x4xf32>
    %68 = tpu.matmul %65, %67, %cst_67 {dimension_numbers = #tpu.dot_dimension_numbers<[1], [0], [0], [1], [0, 0, 1, 1], [], []>} : vector<256x4xf32>, vector<4x4xf32>, vector<256x4xf32> -> vector<256x4xf32>
    %69 = arith.addf %63, %68 : vector<256x4xf32>
    %c0_68 = arith.constant 0 : index
    %c0_69 = arith.constant 0 : index
    %70 = vector.load %arg6[%c0_68, %c0_69] : memref<1x4xf32, #tpu.memory_space<vmem>>, vector<1x4xf32>
    %71 = vector.broadcast %70 : vector<1x4xf32> to vector<256x4xf32>
    %72 = arith.addf %69, %71 : vector<256x4xf32>
    %cst_70 = arith.constant 0.000000e+00 : f32
    %73 = vector.broadcast %cst_70 : f32 to vector<256x4xf32>
    %74 = arith.maximumf %72, %73 : vector<256x4xf32>
    %c0_71 = arith.constant 0 : index
    %c0_72 = arith.constant 0 : index
    %75 = vector.load %arg4[%c0_71, %c0_72] : memref<4x16xf32, #tpu.memory_space<vmem>>, vector<4x16xf32>
    %cst_73 = arith.constant dense<0.000000e+00> : vector<256x16xf32>
    %76 = tpu.matmul %74, %75, %cst_73 {dimension_numbers = #tpu.dot_dimension_numbers<[1], [0], [0], [1], [0, 0, 1, 1], [], []>} : vector<256x4xf32>, vector<4x16xf32>, vector<256x16xf32> -> vector<256x16xf32>
    %c0_74 = arith.constant 0 : index
    %c0_75 = arith.constant 0 : index
    %77 = vector.load %arg7[%c0_74, %c0_75] : memref<1x16xf32, #tpu.memory_space<vmem>>, vector<1x16xf32>
    %78 = vector.broadcast %77 : vector<1x16xf32> to vector<256x16xf32>
    %79 = arith.addf %76, %78 : vector<256x16xf32>
    %c0_76 = arith.constant 0 : index
    %c0_77 = arith.constant 0 : index
    %c0_78 = arith.constant 0 : index
    %c0_79 = arith.constant 0 : index
    %80 = vector.load %arg1[%c0_76, %c0_77, %c0_78, %c0_79] : memref<1x16x16x16xf32, #tpu.memory_space<vmem>>, vector<1x16x16x16xf32>
    %81 = vector.shape_cast %80 : vector<1x16x16x16xf32> to vector<16x16x16xf32>
    %82 = vector.shape_cast %81 : vector<16x16x16xf32> to vector<256x16xf32>
    %83 = arith.addf %79, %82 : vector<256x16xf32>
    %cst_80 = arith.constant 0.000000e+00 : f32
    %84 = vector.broadcast %cst_80 : f32 to vector<256x16xf32>
    %85 = arith.maximumf %83, %84 : vector<256x16xf32>
    %86 = vector.shape_cast %85 : vector<256x16xf32> to vector<16x16x16xf32>
    %c0_81 = arith.constant 0 : index
    %c0_82 = arith.constant 0 : index
    %c0_83 = arith.constant 0 : index
    %c0_84 = arith.constant 0 : index
    %87 = vector.load %arg8[%c0_81, %c0_82, %c0_83, %c0_84] : memref<1x16x16x16xf32, #tpu.memory_space<vmem>>, vector<1x16x16x16xf32>
    %88 = vector.shape_cast %87 : vector<1x16x16x16xf32> to vector<16x16x16xf32>
    %89 = vector.shape_cast %86 : vector<16x16x16xf32> to vector<1x16x16x16xf32>
    tpu.vector_store %arg8[%c0_81, %c0_82, %c0_83, %c0_84], %89 {strides = array<i32>} : memref<1x16x16x16xf32, #tpu.memory_space<vmem>>, vector<1x16x16x16xf32>,
    return
  }
  func.func @transform_0(%arg0: i32) -> (i32, i32, i32, i32) {
    %c0_i32 = arith.constant 0 : i32
    %c0_i32_0 = arith.constant 0 : i32
    %c0_i32_1 = arith.constant 0 : i32
    %c0_i32_2 = arith.constant 0 : i32
    return %arg0, %c0_i32, %c0_i32_0, %c0_i32_1 : i32, i32, i32, i32
  }
  func.func @transform_1(%arg0: i32) -> (i32, i32) {
    %c0_i32 = arith.constant 0 : i32
    %c0_i32_0 = arith.constant 0 : i32
    %c0_i32_1 = arith.constant 0 : i32
    return %c0_i32, %c0_i32_0 : i32, i32
  }
  func.func @transform_2(%arg0: i32) -> (i32, i32, i32) {
    %c0_i32 = arith.constant 0 : i32
    %c0_i32_0 = arith.constant 0 : i32
    %c0_i32_1 = arith.constant 0 : i32
    %c0_i32_2 = arith.constant 0 : i32
    return %c0_i32, %c0_i32_0, %c0_i32_1 : i32, i32, i32
  }
  func.func @transform_3(%arg0: i32) -> (i32, i32) {
    %c0_i32 = arith.constant 0 : i32
    %c0_i32_0 = arith.constant 0 : i32
    %c0_i32_1 = arith.constant 0 : i32
    return %c0_i32, %c0_i32_0 : i32, i32
  }
  func.func @transform_4(%arg0: i32) -> (i32, i32) {
    %c0_i32 = arith.constant 0 : i32
    %c0_i32_0 = arith.constant 0 : i32
    %c0_i32_1 = arith.constant 0 : i32
    return %c0_i32, %c0_i32_0 : i32, i32
  }
  func.func @transform_5(%arg0: i32) -> (i32, i32) {
    %c0_i32 = arith.constant 0 : i32
    %c0_i32_0 = arith.constant 0 : i32
    %c0_i32_1 = arith.constant 0 : i32
    return %c0_i32, %c0_i32_0 : i32, i32
  }
  func.func @transform_6(%arg0: i32) -> (i32, i32) {
    %c0_i32 = arith.constant 0 : i32
    %c0_i32_0 = arith.constant 0 : i32
    %c0_i32_1 = arith.constant 0 : i32
    return %c0_i32, %c0_i32_0 : i32, i32
  }
  func.func @transform_7(%arg0: i32) -> (i32, i32, i32, i32) {
    %c0_i32 = arith.constant 0 : i32
    %c0_i32_0 = arith.constant 0 : i32
    %c0_i32_1 = arith.constant 0 : i32
    %c0_i32_2 = arith.constant 0 : i32
    return %arg0, %c0_i32, %c0_i32_0, %c0_i32_1 : i32, i32, i32, i32
  }
}

</mosaic_0001>

<llo_original>
// kernel: tpu_custom_call.1
$region0: #{tpu_custom_call.1}
  #allocation0 [shape = 'u32[]', space=smem, size = 0x4, offset = 0x4, fixed_abs, tag = 'smem constant byte address 0x4 - core index']
  #allocation1 [shape = 'u32[72,128]{1,0:T(1,128)}', space=vmem, size = 0x9000, scoped, tag = 'internal scratch']
  #allocation2 [shape = 'f32[18,24,4]{2,1,0:T(8,128)}', space=vmem, size = 0x36000, scoped, tag = 'scratch operand']
  %s0 = inlined_call_operand.hbm [shape: f32[2,16,16,16], index: 0, kind: input, shape index: {}]
  %s1 = inlined_call_operand.vmem [shape: f32[16,4], index: 1, kind: input, shape index: {}]
  %s2 = inlined_call_operand.vmem [shape: f32[9,4,4], index: 2, kind: input, shape index: {}]
  %s3 = inlined_call_operand.vmem [shape: f32[4,16], index: 3, kind: input, shape index: {}]
  %s4 = inlined_call_operand.vmem [shape: f32[1,4], index: 4, kind: input, shape index: {}]
  %s5 = inlined_call_operand.vmem [shape: f32[1,4], index: 5, kind: input, shape index: {}]
  %s6 = inlined_call_operand.vmem [shape: f32[1,16], index: 6, kind: input, shape index: {}]
  %s7 = inlined_call_operand.hbm [shape: f32[2,16,16,16], index: 7, kind: output, shape index: {}]
  %s8 = sld [smem:[#allocation0]]
  $region69: #{tpu_custom_call.1} parent=0
    _
  %s10 = ssub.s32 1, %s8
  %s11 = scalar_select 0, %s10, %s8
  $region1: #{tpu_custom_call.1} parent=0
    #allocation3 [shape = 'u8[262144]{0}', space=vmem, size = 0x40000, scoped, tag = 'input window, operand 0']
    #allocation4 [shape = 's32[2]{0}', space=sflag, size = 0x8, scoped, tag = 'scoped memory for tpu_custom_call.1']
    #allocation5 [shape = 's32[2]{0}', space=sflag, size = 0x8, scoped, tag = 'scoped memory for tpu_custom_call.1']
    #allocation6 [shape = 'u8[262144]{0}', space=vmem, size = 0x40000, scoped, tag = 'output window, operand 0']
    %12 = vsyncpa [#allocation4], 0
    %s13 = scalar_lea.sflag [#allocation4], 1
    %14 = vsyncpa %s13, 0
    %15 = vsyncpa [#allocation5], 0
    %s16 = scalar_lea.sflag [#allocation5], 1
    %17 = vsyncpa %s16, 0
    loop: start=0, step=1, limit=4
    $region2: #{tpu_custom_call.1} parent=1 // loop_pre_header
      _
    $region3: #{tpu_custom_call.1} parent=1 // loop_header
      %s19 = sphi 0, %s23
      %p20 = scmp.ge.s32.totalorder %s19, 4
      %s29 = sphi 0, %s31
      %s32 = sphi 0, %s29
      %s33 = sphi 0, %s32
      %s49 = sphi 0, %s33
      %s53 = sphi 0, %s53
      %s55 = sphi 0, %s53
      %s56 = sphi 0, %s55
      %s70 = sphi 0, %s56
      %s74 = sphi 0, %s74
      %s76 = sphi 0, %s74
      %s77 = sphi 0, %s76
      %s91 = sphi 0, %s77
      %s95 = sphi 0, %s95
      %s97 = sphi 0, %s95
      %s98 = sphi 0, %s97
      %s112 = sphi 0, %s98
      %s116 = sphi 0, %s116
      %s118 = sphi 0, %s116
      %s119 = sphi 0, %s118
      %s133 = sphi 0, %s119
      %s137 = sphi 0, %s137
      %s139 = sphi 0, %s137
      %s140 = sphi 0, %s139
      %s154 = sphi 0, %s140
      %s158 = sphi 0, %s158
      %s160 = sphi 0, %s158
      %s161 = sphi 0, %s160
      %s175 = sphi 0, %s161
      %s181 = sphi 0, %s183
      %s184 = sphi 0, %s181
      %s185 = sphi 0, %s184
      %s201 = sphi 0, %s185
    $region4: #{tpu_custom_call.1} parent=1 // loop_header_branch
      %22 = sbr.rel (%p20) target = $region8
    $region5: #{tpu_custom_call.1} parent=1 // loop_body
      %s24 = ssub.s32 %s19, 1
      %s25 = ssub.s32 %s19, 2
      %s26 = sadd.s32 %s19, 1
      %s27 = ssub.s32 %s19, %s26
      %p28 = scmp.eq.s32.totalorder %s27, 0
      %s30 = sadd.s32 %s29, 1
      %s31 = scalar_select %p28, %s29, %s30
      %p34 = pneg %p28
      %p35 = scmp.eq.s32.totalorder %s19, 1
      %p36 = por %p34, %p35
      %p37 = scmp.ne.s32.totalorder %s29, %s32
      %p38 = scmp.eq.s32.totalorder %s19, 0
      %p39 = por %p37, %p38
      %p40 = scmp.ne.s32.totalorder %s29, %s32
      %p41 = scmp.eq.s32.totalorder %s24, 1
      %p42 = por %p40, %p41
      %p43 = scmp.ne.s32.totalorder %s32, %s33
      %p44 = scmp.eq.s32.totalorder %s24, 0
      %p45 = por %p43, %p44
      %p46 = scmp.ne.s32.totalorder %s32, %s33
      %p47 = scmp.eq.s32.totalorder %s25, 1
      %p48 = por %p46, %p47
      %p50 = scmp.ne.s32.totalorder %s33, %s49
      %p51 = scmp.eq.s32.totalorder %s25, 0
      %p52 = por %p50, %p51
      %s54 = sadd.s32 %s53, 1
      %p57 = scmp.eq.s32.totalorder %s19, 1
      %p58 = scmp.ne.s32.totalorder %s53, %s55
      %p59 = scmp.eq.s32.totalorder %s19, 0
      %p60 = por %p58, %p59
      %p61 = scmp.ne.s32.totalorder %s53, %s55
      %p62 = scmp.eq.s32.totalorder %s24, 1
      %p63 = por %p61, %p62
      %p64 = scmp.ne.s32.totalorder %s55, %s56
      %p65 = scmp.eq.s32.totalorder %s24, 0
      %p66 = por %p64, %p65
      %p67 = scmp.ne.s32.totalorder %s55, %s56
      %p68 = scmp.eq.s32.totalorder %s25, 1
      %p69 = por %p67, %p68
      %p71 = scmp.ne.s32.totalorder %s56, %s70
      %p72 = scmp.eq.s32.totalorder %s25, 0
      %p73 = por %p71, %p72
      %s75 = sadd.s32 %s74, 1
      %p78 = scmp.eq.s32.totalorder %s19, 1
      %p79 = scmp.ne.s32.totalorder %s74, %s76
      %p80 = scmp.eq.s32.totalorder %s19, 0
      %p81 = por %p79, %p80
      %p82 = scmp.ne.s32.totalorder %s74, %s76
      %p83 = scmp.eq.s32.totalorder %s24, 1
      %p84 = por %p82, %p83
      %p85 = scmp.ne.s32.totalorder %s76, %s77
      %p86 = scmp.eq.s32.totalorder %s24, 0
      %p87 = por %p85, %p86
      %p88 = scmp.ne.s32.totalorder %s76, %s77
      %p89 = scmp.eq.s32.totalorder %s25, 1
      %p90 = por %p88, %p89
      %p92 = scmp.ne.s32.totalorder %s77, %s91
      %p93 = scmp.eq.s32.totalorder %s25, 0
      %p94 = por %p92, %p93
      %s96 = sadd.s32 %s95, 1
      %p99 = scmp.eq.s32.totalorder %s19, 1
      %p100 = scmp.ne.s32.totalorder %s95, %s97
      %p101 = scmp.eq.s32.totalorder %s19, 0
      %p102 = por %p100, %p101
      %p103 = scmp.ne.s32.totalorder %s95, %s97
      %p104 = scmp.eq.s32.totalorder %s24, 1
      %p105 = por %p103, %p104
      %p106 = scmp.ne.s32.totalorder %s97, %s98
      %p107 = scmp.eq.s32.totalorder %s24, 0
      %p108 = por %p106, %p107
      %p109 = scmp.ne.s32.totalorder %s97, %s98
      %p110 = scmp.eq.s32.totalorder %s25, 1
      %p111 = por %p109, %p110
      %p113 = scmp.ne.s32.totalorder %s98, %s112
      %p114 = scmp.eq.s32.totalorder %s25, 0
      %p115 = por %p113, %p114
      %s117 = sadd.s32 %s116, 1
      %p120 = scmp.eq.s32.totalorder %s19, 1
      %p121 = scmp.ne.s32.totalorder %s116, %s118
      %p122 = scmp.eq.s32.totalorder %s19, 0
      %p123 = por %p121, %p122
      %p124 = scmp.ne.s32.totalorder %s116, %s118
      %p125 = scmp.eq.s32.totalorder %s24, 1
      %p126 = por %p124, %p125
      %p127 = scmp.ne.s32.totalorder %s118, %s119
      %p128 = scmp.eq.s32.totalorder %s24, 0
      %p129 = por %p127, %p128
      %p130 = scmp.ne.s32.totalorder %s118, %s119
      %p131 = scmp.eq.s32.totalorder %s25, 1
      %p132 = por %p130, %p131
      %p134 = scmp.ne.s32.totalorder %s119, %s133
      %p135 = scmp.eq.s32.totalorder %s25, 0
      %p136 = por %p134, %p135
      %s138 = sadd.s32 %s137, 1
      %p141 = scmp.eq.s32.totalorder %s19, 1
      %p142 = scmp.ne.s32.totalorder %s137, %s139
      %p143 = scmp.eq.s32.totalorder %s19, 0
      %p144 = por %p142, %p143
      %p145 = scmp.ne.s32.totalorder %s137, %s139
      %p146 = scmp.eq.s32.totalorder %s24, 1
      %p147 = por %p145, %p146
      %p148 = scmp.ne.s32.totalorder %s139, %s140
      %p149 = scmp.eq.s32.totalorder %s24, 0
      %p150 = por %p148, %p149
      %p151 = scmp.ne.s32.totalorder %s139, %s140
      %p152 = scmp.eq.s32.totalorder %s25, 1
      %p153 = por %p151, %p152
      %p155 = scmp.ne.s32.totalorder %s140, %s154
      %p156 = scmp.eq.s32.totalorder %s25, 0
      %p157 = por %p155, %p156
      %s159 = sadd.s32 %s158, 1
      %p162 = scmp.eq.s32.totalorder %s19, 1
      %p163 = scmp.ne.s32.totalorder %s158, %s160
      %p164 = scmp.eq.s32.totalorder %s19, 0
      %p165 = por %p163, %p164
      %p166 = scmp.ne.s32.totalorder %s158, %s160
      %p167 = scmp.eq.s32.totalorder %s24, 1
      %p168 = por %p166, %p167
      %p169 = scmp.ne.s32.totalorder %s160, %s161
      %p170 = scmp.eq.s32.totalorder %s24, 0
      %p171 = por %p169, %p170
      %p172 = scmp.ne.s32.totalorder %s160, %s161
      %p173 = scmp.eq.s32.totalorder %s25, 1
      %p174 = por %p172, %p173
      %p176 = scmp.ne.s32.totalorder %s161, %s175
      %p177 = scmp.eq.s32.totalorder %s25, 0
      %p178 = por %p176, %p177
      %s179 = ssub.s32 %s19, %s26
      %p180 = scmp.eq.s32.totalorder %s179, 0
      %s182 = sadd.s32 %s181, 1
      %s183 = scalar_select %p180, %s181, %s182
      %p186 = pneg %p180
      %p187 = scmp.eq.s32.totalorder %s19, 1
      %p188 = por %p186, %p187
      %p189 = scmp.ne.s32.totalorder %s181, %s184
      %p190 = scmp.eq.s32.totalorder %s19, 0
      %p191 = por %p189, %p190
      %p192 = scmp.ne.s32.totalorder %s181, %s184
      %p193 = scmp.eq.s32.totalorder %s24, 1
      %p194 = por %p192, %p193
      %p195 = scmp.ne.s32.totalorder %s184, %s185
      %p196 = scmp.eq.s32.totalorder %s24, 0
      %p197 = por %p195, %p196
      %p198 = scmp.ne.s32.totalorder %s184, %s185
      %p199 = scmp.eq.s32.totalorder %s25, 1
      %p200 = por %p198, %p199
      %p202 = scmp.ne.s32.totalorder %s185, %s201
      %p203 = scmp.eq.s32.totalorder %s25, 0
      %p204 = por %p202, %p203
      %p205 = scmp.le.s32.totalorder 1, %s19
      %p206 = scmp.lt.s32.totalorder %s19, 3
      %p207 = pnand %p205, %p206
      %p208 = pneg %p207
      // Predicated region
      $region9: #{tpu_custom_call.1} parent=5 // pred_check
        _
      $region10: #{tpu_custom_call.1} parent=5 // pred_check_branch
        %210 = sbr.rel (%p207) target = $region12
      $region11: #{tpu_custom_call.1} parent=5 // pred_region
        %s211 = ssub.s32 %s19, 1
        // Predicated region
        $region13: #{tpu_custom_call.1} parent=11 // pred_check
          %p212 = pneg %p66
        $region14: #{tpu_custom_call.1} parent=11 // pred_check_branch
          %214 = sbr.rel (%p212) target = $region16
        $region15: #{tpu_custom_call.1} parent=11 // pred_region
          _
        $region16: #{tpu_custom_call.1} parent=11 // pred_fallthru
          _
        // Predicated region
        $region17: #{tpu_custom_call.1} parent=11 // pred_check
          %p215 = pneg %p87
        $region18: #{tpu_custom_call.1} parent=11 // pred_check_branch
          %217 = sbr.rel (%p215) target = $region20
        $region19: #{tpu_custom_call.1} parent=11 // pred_region
          _
        $region20: #{tpu_custom_call.1} parent=11 // pred_fallthru
          _
        // Predicated region
        $region21: #{tpu_custom_call.1} parent=11 // pred_check
          %p218 = pneg %p108
        $region22: #{tpu_custom_call.1} parent=11 // pred_check_branch
          %220 = sbr.rel (%p218) target = $region24
        $region23: #{tpu_custom_call.1} parent=11 // pred_region
          _
        $region24: #{tpu_custom_call.1} parent=11 // pred_fallthru
          _
        // Predicated region
        $region25: #{tpu_custom_call.1} parent=11 // pred_check
          %p221 = pneg %p129
        $region26: #{tpu_custom_call.1} parent=11 // pred_check_branch
          %223 = sbr.rel (%p221) target = $region28
        $region27: #{tpu_custom_call.1} parent=11 // pred_region
          _
        $region28: #{tpu_custom_call.1} parent=11 // pred_fallthru
          _
        // Predicated region
        $region29: #{tpu_custom_call.1} parent=11 // pred_check
          %p224 = pneg %p150
        $region30: #{tpu_custom_call.1} parent=11 // pred_check_branch
          %226 = sbr.rel (%p224) target = $region32
        $region31: #{tpu_custom_call.1} parent=11 // pred_region
          _
        $region32: #{tpu_custom_call.1} parent=11 // pred_fallthru
          _
        // Predicated region
        $region33: #{tpu_custom_call.1} parent=11 // pred_check
          %p227 = pneg %p171
        $region34: #{tpu_custom_call.1} parent=11 // pred_check_branch
          %229 = sbr.rel (%p227) target = $region36
        $region35: #{tpu_custom_call.1} parent=11 // pred_region
          _
        $region36: #{tpu_custom_call.1} parent=11 // pred_fallthru
          _
      $region12: #{tpu_custom_call.1} parent=5 // pred_fallthru
        _
      %p230 = scmp.lt.s32.totalorder %s19, 2
      // Predicated region
      $region37: #{tpu_custom_call.1} parent=5 // pred_check
        %p231 = pneg %p230
      $region38: #{tpu_custom_call.1} parent=5 // pred_check_branch
        %233 = sbr.rel (%p231) target = $region40
      $region39: #{tpu_custom_call.1} parent=5 // pred_region
        // Predicated region
        $region41: #{tpu_custom_call.1} parent=39 // pred_check
          %p234 = pneg %p39
        $region42: #{tpu_custom_call.1} parent=39 // pred_check_branch
          %236 = sbr.rel (%p234) target = $region44
        $region43: #{tpu_custom_call.1} parent=39 // pred_region
          %s237 = sand.u32 %s29, 1
          %s238 = scalar_lea.sflag [#allocation4], %s237
          %s239 = sand.u32 %s29, 1
          %s240 = smul.addr %s239, 256
          %s241 = scalar_lea.vmem [#allocation3], %s240
          %243 = vsyncadd %s238, 0
          %s244 = smul.addr %s19, 32
          %s245 = smul.addr %s244, 8
          %s246 = scalar_lea.hbm %s0, %s245
          %s247 = sshll.u32 %s246, 4
          %s248 = int_to_ptr.hbm [resolvable:$true] %s247
          %s249 = sshll.u32 %s241, 4
          %s250 = int_to_ptr.vmem [resolvable:$true] %s249
          %255 = dma.hbm_to_vmem [thread:$0]  %s248, 4096, %s250, %s238, 128, 128, 8
        $region44: #{tpu_custom_call.1} parent=39 // pred_fallthru
          _
      $region40: #{tpu_custom_call.1} parent=5 // pred_fallthru
        _
      %p256 = scmp.le.s32.totalorder 1, %s19
      %p257 = scmp.lt.s32.totalorder %s19, 3
      %p258 = pnand %p256, %p257
      %p259 = pneg %p258
      // Predicated region
      $region45: #{tpu_custom_call.1} parent=5 // pred_check
        _
      $region46: #{tpu_custom_call.1} parent=5 // pred_check_branch
        %261 = sbr.rel (%p258) target = $region48
      $region47: #{tpu_custom_call.1} parent=5 // pred_region
        %s262 = ssub.s32 %s19, 1
        %s263 = sand.u32 %s32, 1
        %s264 = scalar_lea.sflag [#allocation4], %s263
        %s265 = sand.u32 %s32, 1
        %s266 = smul.addr %s265, 256
        %s267 = scalar_lea.vmem [#allocation3], %s266
        // Predicated region
        $region49: #{tpu_custom_call.1} parent=47 // pred_check
          %p268 = pneg %p45
        $region50: #{tpu_custom_call.1} parent=47 // pred_check_branch
          %270 = sbr.rel (%p268) target = $region52
        $region51: #{tpu_custom_call.1} parent=47 // pred_region
          %272 = dma.done %s264, 4096
        $region52: #{tpu_custom_call.1} parent=47 // pred_fallthru
          _
        %s273 = sand.u32 %s32, 1
        %s274 = scalar_lea.sflag [#allocation4], %s273
        %s275 = sand.u32 %s32, 1
        %s276 = smul.addr %s275, 256
        %s277 = scalar_lea.vmem [#allocation3], %s276
        %p278 = pneg %p45
        %p279 = pneg %p42
        %p280 = pneg %p66
        %p281 = pneg %p63
        %p282 = pneg %p87
        %p283 = pneg %p84
        %p284 = pneg %p108
        %p285 = pneg %p105
        %p286 = pneg %p129
        %p287 = pneg %p126
        %p288 = pneg %p150
        %p289 = pneg %p147
        %p290 = pneg %p171
        %p291 = pneg %p168
        %p292 = pneg %p197
        %p293 = pneg %p194
        %s294 = sand.u32 %s184, 1
        %s295 = scalar_lea.sflag [#allocation5], %s294
        %s296 = sand.u32 %s184, 1
        %s297 = smul.addr %s296, 256
        %s298 = scalar_lea.vmem [#allocation6], %s297
        %p299 = scmp.eq.s32.totalorder %s24, 0
        // Predicated region
        $region53: #{tpu_custom_call.1} parent=47 // pred_check
          %p300 = pneg %p299
        $region54: #{tpu_custom_call.1} parent=47 // pred_check_branch
          %302 = sbr.rel (%p300) target = $region56
        $region55: #{tpu_custom_call.1} parent=47 // pred_region
          %vm303 = vcmask 31744
          %304 = vst.msk [vmem:[#allocation2] sm:$0xff] %vm303, 0.0
          %305 = vst.msk [vmem:[#allocation2 + $0x8] sm:$0xff] %vm303, 0.0
          %306 = vst.msk [vmem:[#allocation2 + $0x10] sm:$0xff] %vm303, 0.0
          %307 = vst.msk [vmem:[#allocation2 + $0x18] sm:$0xff] %vm303, 0.0
          %308 = vst.msk [vmem:[#allocation2 + $0x20] sm:$0xff] %vm303, 0.0
          %309 = vst.msk [vmem:[#allocation2 + $0x28] sm:$0xff] %vm303, 0.0
          %310 = vst.msk [vmem:[#allocation2 + $0x30] sm:$0xff] %vm303, 0.0
          %311 = vst.msk [vmem:[#allocation2 + $0x38] sm:$0xff] %vm303, 0.0
          %312 = vst.msk [vmem:[#allocation2 + $0x40] sm:$0xff] %vm303, 0.0
          %313 = vst.msk [vmem:[#allocation2 + $0x48] sm:$0xff] %vm303, 0.0
          %314 = vst.msk [vmem:[#allocation2 + $0x50] sm:$0xff] %vm303, 0.0
          %315 = vst.msk [vmem:[#allocation2 + $0x58] sm:$0xff] %vm303, 0.0
          %316 = vst.msk [vmem:[#allocation2 + $0x60] sm:$0xff] %vm303, 0.0
          %317 = vst.msk [vmem:[#allocation2 + $0x68] sm:$0xff] %vm303, 0.0
          %318 = vst.msk [vmem:[#allocation2 + $0x70] sm:$0xff] %vm303, 0.0
          %319 = vst.msk [vmem:[#allocation2 + $0x78] sm:$0xff] %vm303, 0.0
          %320 = vst.msk [vmem:[#allocation2 + $0x80] sm:$0xff] %vm303, 0.0
          %321 = vst.msk [vmem:[#allocation2 + $0x88] sm:$0xff] %vm303, 0.0
          %322 = vst.msk [vmem:[#allocation2 + $0x90] sm:$0xff] %vm303, 0.0
          %323 = vst.msk [vmem:[#allocation2 + $0x98] sm:$0xff] %vm303, 0.0
          %324 = vst.msk [vmem:[#allocation2 + $0xa0] sm:$0xff] %vm303, 0.0
          %325 = vst.msk [vmem:[#allocation2 + $0xa8] sm:$0xff] %vm303, 0.0
          %326 = vst.msk [vmem:[#allocation2 + $0xb0] sm:$0xff] %vm303, 0.0
          %327 = vst.msk [vmem:[#allocation2 + $0xb8] sm:$0xff] %vm303, 0.0
          %328 = vst.msk [vmem:[#allocation2 + $0xc0] sm:$0xff] %vm303, 0.0
          %329 = vst.msk [vmem:[#allocation2 + $0xc8] sm:$0xff] %vm303, 0.0
          %330 = vst.msk [vmem:[#allocation2 + $0xd0] sm:$0xff] %vm303, 0.0
          %331 = vst.msk [vmem:[#allocation2 + $0xd8] sm:$0xff] %vm303, 0.0
          %332 = vst.msk [vmem:[#allocation2 + $0xe0] sm:$0xff] %vm303, 0.0
          %333 = vst.msk [vmem:[#allocation2 + $0xe8] sm:$0xff] %vm303, 0.0
          %334 = vst.msk [vmem:[#allocation2 + $0xf0] sm:$0xff] %vm303, 0.0
          %335 = vst.msk [vmem:[#allocation2 + $0xf8] sm:$0xff] %vm303, 0.0
          %336 = vst.msk [vmem:[#allocation2 + $0x100] sm:$0xff] %vm303, 0.0
          %337 = vst.msk [vmem:[#allocation2 + $0x108] sm:$0xff] %vm303, 0.0
          %338 = vst.msk [vmem:[#allocation2 + $0x110] sm:$0xff] %vm303, 0.0
          %339 = vst.msk [vmem:[#allocation2 + $0x118] sm:$0xff] %vm303, 0.0
          %340 = vst.msk [vmem:[#allocation2 + $0x120] sm:$0xff] %vm303, 0.0
          %341 = vst.msk [vmem:[#allocation2 + $0x128] sm:$0xff] %vm303, 0.0
          %342 = vst.msk [vmem:[#allocation2 + $0x130] sm:$0xff] %vm303, 0.0
          %343 = vst.msk [vmem:[#allocation2 + $0x138] sm:$0xff] %vm303, 0.0
          %344 = vst.msk [vmem:[#allocation2 + $0x140] sm:$0xff] %vm303, 0.0
          %345 = vst.msk [vmem:[#allocation2 + $0x148] sm:$0xff] %vm303, 0.0
          %346 = vst.msk [vmem:[#allocation2 + $0x150] sm:$0xff] %vm303, 0.0
          %347 = vst.msk [vmem:[#allocation2 + $0x158] sm:$0xff] %vm303, 0.0
          %348 = vst.msk [vmem:[#allocation2 + $0x160] sm:$0xff] %vm303, 0.0
          %349 = vst.msk [vmem:[#allocation2 + $0x168] sm:$0xff] %vm303, 0.0
          %350 = vst.msk [vmem:[#allocation2 + $0x170] sm:$0xff] %vm303, 0.0
          %351 = vst.msk [vmem:[#allocation2 + $0x178] sm:$0xff] %vm303, 0.0
          %352 = vst.msk [vmem:[#allocation2 + $0x180] sm:$0xff] %vm303, 0.0
          %353 = vst.msk [vmem:[#allocation2 + $0x188] sm:$0xff] %vm303, 0.0
          %354 = vst.msk [vmem:[#allocation2 + $0x190] sm:$0xff] %vm303, 0.0
          %355 = vst.msk [vmem:[#allocation2 + $0x198] sm:$0xff] %vm303, 0.0
          %356 = vst.msk [vmem:[#allocation2 + $0x1a0] sm:$0xff] %vm303, 0.0
          %357 = vst.msk [vmem:[#allocation2 + $0x1a8] sm:$0xff] %vm303, 0.0
        $region56: #{tpu_custom_call.1} parent=47 // pred_fallthru
          _
        %v358 = vld [vmem:[%s267] sm:$0xff]
        %v359 = vld [vmem:[%s267 + $0x8] sm:$0xff]
        %v360 = vld [vmem:[%s267 + $0x10] sm:$0xff]
        %v361 = vld [vmem:[%s267 + $0x18] sm:$0xff]
        %v362 = vld [vmem:[%s267 + $0x20] sm:$0xff]
        %v363 = vld [vmem:[%s267 + $0x28] sm:$0xff]
        %v364 = vld [vmem:[%s267 + $0x30] sm:$0xff]
        %v365 = vld [vmem:[%s267 + $0x38] sm:$0xff]
        %v366 = vld [vmem:[%s267 + $0x40] sm:$0xff]
        %v367 = vld [vmem:[%s267 + $0x48] sm:$0xff]
        %v368 = vld [vmem:[%s267 + $0x50] sm:$0xff]
        %v369 = vld [vmem:[%s267 + $0x58] sm:$0xff]
        %v370 = vld [vmem:[%s267 + $0x60] sm:$0xff]
        %v371 = vld [vmem:[%s267 + $0x68] sm:$0xff]
        %v372 = vld [vmem:[%s267 + $0x70] sm:$0xff]
        %v373 = vld [vmem:[%s267 + $0x78] sm:$0xff]
        %v374 = vld [vmem:[%s267 + $0x80] sm:$0xff]
        %v375 = vld [vmem:[%s267 + $0x88] sm:$0xff]
        %v376 = vld [vmem:[%s267 + $0x90] sm:$0xff]
        %v377 = vld [vmem:[%s267 + $0x98] sm:$0xff]
        %v378 = vld [vmem:[%s267 + $0xa0] sm:$0xff]
        %v379 = vld [vmem:[%s267 + $0xa8] sm:$0xff]
        %v380 = vld [vmem:[%s267 + $0xb0] sm:$0xff]
        %v381 = vld [vmem:[%s267 + $0xb8] sm:$0xff]
        %v382 = vld [vmem:[%s267 + $0xc0] sm:$0xff]
        %v383 = vld [vmem:[%s267 + $0xc8] sm:$0xff]
        %v384 = vld [vmem:[%s267 + $0xd0] sm:$0xff]
        %v385 = vld [vmem:[%s267 + $0xd8] sm:$0xff]
        %v386 = vld [vmem:[%s267 + $0xe0] sm:$0xff]
        %v387 = vld [vmem:[%s267 + $0xe8] sm:$0xff]
        %v388 = vld [vmem:[%s267 + $0xf0] sm:$0xff]
        %v389 = vld [vmem:[%s267 + $0xf8] sm:$0xff]
        %v390 = vld [vmem:[%s1] sm:$0xff]
        %v391 = vld [vmem:[%s1 + $0x8] sm:$0xff]
        %v392 = vld [vmem:[%s4] sm:$0x1]
        %v394 = vperm.slane %v392, 0
        %vm396 = vcmask 130048
        %v398 = vsel %vm396, %v358, 0
        %v401 = vsel %vm396, %v359, 0
        %v404 = vsel %vm396, %v360, 0
        %v407 = vsel %vm396, %v361, 0
        %v410 = vsel %vm396, %v362, 0
        %v413 = vsel %vm396, %v363, 0
        %v416 = vsel %vm396, %v364, 0
        %v419 = vsel %vm396, %v365, 0
        %v422 = vsel %vm396, %v366, 0
        %v425 = vsel %vm396, %v367, 0
        %v428 = vsel %vm396, %v368, 0
        %v431 = vsel %vm396, %v369, 0
        %v434 = vsel %vm396, %v370, 0
        %v437 = vsel %vm396, %v371, 0
        %v440 = vsel %vm396, %v372, 0
        %v443 = vsel %vm396, %v373, 0
        %v446 = vsel %vm396, %v374, 0
        %v449 = vsel %vm396, %v375, 0
        %v452 = vsel %vm396, %v376, 0
        %v455 = vsel %vm396, %v377, 0
        %v458 = vsel %vm396, %v378, 0
        %v461 = vsel %vm396, %v379, 0
        %v464 = vsel %vm396, %v380, 0
        %v467 = vsel %vm396, %v381, 0
        %v470 = vsel %vm396, %v382, 0
        %v473 = vsel %vm396, %v383, 0
        %v476 = vsel %vm396, %v384, 0
        %v479 = vsel %vm396, %v385, 0
        %v482 = vsel %vm396, %v386, 0
        %v485 = vsel %vm396, %v387, 0
        %v488 = vsel %vm396, %v388, 0
        %v491 = vsel %vm396, %v389, 0
        %493 = vmatpush.msra.mxu0 0.0
        %494 = vmatpush.msra.mxu0 0.0
        %495 = vmatpush.msra.mxu0 0.0
        %496 = vmatpush.msra.mxu0 0.0
        %497 = vmatpush.msra.mxu0 0.0
        %498 = vmatpush.msra.mxu0 0.0
        %499 = vmatpush.msra.mxu0 0.0
        %500 = vmatpush.msra.mxu0 0.0
        %501 = vmatpush.msra.mxu0 0.0
        %502 = vmatpush.msra.mxu0 0.0
        %503 = vmatpush.msra.mxu0 0.0
        %504 = vmatpush.msra.mxu0 0.0
        %505 = vmatpush.msra.mxu0 0.0
        %506 = vmatpush.msra.mxu0 0.0
        %507 = vmatpush.msra.mxu0 %v391
        %508 = vmatpush.msra.mxu0 %v390
        %509 = vmatmul.f32.gmra.mxu0 %v398
        %v510 = vpop.f32.mrf.mxu0
        %v511 = vadd.f32 %v394, %v510
        %512 = vmatmul.f32.gmra.mxu0 %v401
        %v513 = vpop.f32.mrf.mxu0
        %v514 = vadd.f32 %v394, %v513
        %515 = vmatmul.f32.gmra.mxu0 %v404
        %v516 = vpop.f32.mrf.mxu0
        %v517 = vadd.f32 %v394, %v516
        %518 = vmatmul.f32.gmra.mxu0 %v407
        %v519 = vpop.f32.mrf.mxu0
        %v520 = vadd.f32 %v394, %v519
        %521 = vmatmul.f32.gmra.mxu0 %v410
        %v522 = vpop.f32.mrf.mxu0
        %v523 = vadd.f32 %v394, %v522
        %524 = vmatmul.f32.gmra.mxu0 %v413
        %v525 = vpop.f32.mrf.mxu0
        %v526 = vadd.f32 %v394, %v525
        %527 = vmatmul.f32.gmra.mxu0 %v416
        %v528 = vpop.f32.mrf.mxu0
        %v529 = vadd.f32 %v394, %v528
        %530 = vmatmul.f32.gmra.mxu0 %v419
        %v531 = vpop.f32.mrf.mxu0
        %v532 = vadd.f32 %v394, %v531
        %533 = vmatmul.f32.gmra.mxu0 %v422
        %v534 = vpop.f32.mrf.mxu0
        %v535 = vadd.f32 %v394, %v534
        %536 = vmatmul.f32.gmra.mxu0 %v425
        %v537 = vpop.f32.mrf.mxu0
        %v538 = vadd.f32 %v394, %v537
        %539 = vmatmul.f32.gmra.mxu0 %v428
        %v540 = vpop.f32.mrf.mxu0
        %v541 = vadd.f32 %v394, %v540
        %542 = vmatmul.f32.gmra.mxu0 %v431
        %v543 = vpop.f32.mrf.mxu0
        %v544 = vadd.f32 %v394, %v543
        %545 = vmatmul.f32.gmra.mxu0 %v434
        %v546 = vpop.f32.mrf.mxu0
        %v547 = vadd.f32 %v394, %v546
        %548 = vmatmul.f32.gmra.mxu0 %v437
        %v549 = vpop.f32.mrf.mxu0
        %v550 = vadd.f32 %v394, %v549
        %551 = vmatmul.f32.gmra.mxu0 %v440
        %v552 = vpop.f32.mrf.mxu0
        %v553 = vadd.f32 %v394, %v552
        %554 = vmatmul.f32.gmra.mxu0 %v443
        %v555 = vpop.f32.mrf.mxu0
        %v556 = vadd.f32 %v394, %v555
        %557 = vmatmul.f32.gmra.mxu0 %v446
        %v558 = vpop.f32.mrf.mxu0
        %v559 = vadd.f32 %v394, %v558
        %560 = vmatmul.f32.gmra.mxu0 %v449
        %v561 = vpop.f32.mrf.mxu0
        %v562 = vadd.f32 %v394, %v561
        %563 = vmatmul.f32.gmra.mxu0 %v452
        %v564 = vpop.f32.mrf.mxu0
        %v565 = vadd.f32 %v394, %v564
        %566 = vmatmul.f32.gmra.mxu0 %v455
        %v567 = vpop.f32.mrf.mxu0
        %v568 = vadd.f32 %v394, %v567
        %569 = vmatmul.f32.gmra.mxu0 %v458
        %v570 = vpop.f32.mrf.mxu0
        %v571 = vadd.f32 %v394, %v570
        %572 = vmatmul.f32.gmra.mxu0 %v461
        %v573 = vpop.f32.mrf.mxu0
        %v574 = vadd.f32 %v394, %v573
        %575 = vmatmul.f32.gmra.mxu0 %v464
        %v576 = vpop.f32.mrf.mxu0
        %v577 = vadd.f32 %v394, %v576
        %578 = vmatmul.f32.gmra.mxu0 %v467
        %v579 = vpop.f32.mrf.mxu0
        %v580 = vadd.f32 %v394, %v579
        %581 = vmatmul.f32.gmra.mxu0 %v470
        %v582 = vpop.f32.mrf.mxu0
        %v583 = vadd.f32 %v394, %v582
        %584 = vmatmul.f32.gmra.mxu0 %v473
        %v585 = vpop.f32.mrf.mxu0
        %v586 = vadd.f32 %v394, %v585
        %587 = vmatmul.f32.gmra.mxu0 %v476
        %v588 = vpop.f32.mrf.mxu0
        %v589 = vadd.f32 %v394, %v588
        %590 = vmatmul.f32.gmra.mxu0 %v479
        %v591 = vpop.f32.mrf.mxu0
        %v592 = vadd.f32 %v394, %v591
        %593 = vmatmul.f32.gmra.mxu0 %v482
        %v594 = vpop.f32.mrf.mxu0
        %v595 = vadd.f32 %v394, %v594
        %596 = vmatmul.f32.gmra.mxu0 %v485
        %v597 = vpop.f32.mrf.mxu0
        %v598 = vadd.f32 %v394, %v597
        %599 = vmatmul.f32.gmra.mxu0 %v488
        %v600 = vpop.f32.mrf.mxu0
        %v601 = vadd.f32 %v394, %v600
        %602 = vmatmul.f32.gmra.mxu0 %v491
        %v603 = vpop.f32.mrf.mxu0
        %v604 = vadd.f32 %v394, %v603
        %605 = vdwg.mxu0
        %v606 = vmax.f32 %v511, 0.0
        %v607 = vmax.f32 %v514, 0.0
        %v608 = vmax.f32 %v517, 0.0
        %v609 = vmax.f32 %v520, 0.0
        %v610 = vmax.f32 %v523, 0.0
        %v611 = vmax.f32 %v526, 0.0
        %v612 = vmax.f32 %v529, 0.0
        %v613 = vmax.f32 %v532, 0.0
        %v614 = vmax.f32 %v535, 0.0
        %v615 = vmax.f32 %v538, 0.0
        %v616 = vmax.f32 %v541, 0.0
        %v617 = vmax.f32 %v544, 0.0
        %v618 = vmax.f32 %v547, 0.0
        %v619 = vmax.f32 %v550, 0.0
        %v620 = vmax.f32 %v553, 0.0
        %v621 = vmax.f32 %v556, 0.0
        %v622 = vmax.f32 %v559, 0.0
        %v623 = vmax.f32 %v562, 0.0
        %v624 = vmax.f32 %v565, 0.0
        %v625 = vmax.f32 %v568, 0.0
        %v626 = vmax.f32 %v571, 0.0
        %v627 = vmax.f32 %v574, 0.0
        %v628 = vmax.f32 %v577, 0.0
        %v629 = vmax.f32 %v580, 0.0
        %v630 = vmax.f32 %v583, 0.0
        %v631 = vmax.f32 %v586, 0.0
        %v632 = vmax.f32 %v589, 0.0
        %v633 = vmax.f32 %v592, 0.0
        %v634 = vmax.f32 %v595, 0.0
        %v635 = vmax.f32 %v598, 0.0
        %v636 = vmax.f32 %v601, 0.0
        %v637 = vmax.f32 %v604, 0.0
        %s638 = scalar_lea.vmem [#allocation2], 24
        %vm639 = vcmask 31744
        %640 = vst.msk [vmem:[%s638 + $0x1] sm:$0xff] %vm639, %v606
        %641 = vst.msk [vmem:[%s638 + $0x9] sm:$0xff] %vm639, %v607
        %642 = vst.msk [vmem:[%s638 + $0x19] sm:$0xff] %vm639, %v608
        %643 = vst.msk [vmem:[%s638 + $0x21] sm:$0xff] %vm639, %v609
        %644 = vst.msk [vmem:[%s638 + $0x31] sm:$0xff] %vm639, %v610
        %645 = vst.msk [vmem:[%s638 + $0x39] sm:$0xff] %vm639, %v611
        %646 = vst.msk [vmem:[%s638 + $0x49] sm:$0xff] %vm639, %v612
        %647 = vst.msk [vmem:[%s638 + $0x51] sm:$0xff] %vm639, %v613
        %648 = vst.msk [vmem:[%s638 + $0x61] sm:$0xff] %vm639, %v614
        %649 = vst.msk [vmem:[%s638 + $0x69] sm:$0xff] %vm639, %v615
        %650 = vst.msk [vmem:[%s638 + $0x79] sm:$0xff] %vm639, %v616
        %651 = vst.msk [vmem:[%s638 + $0x81] sm:$0xff] %vm639, %v617
        %652 = vst.msk [vmem:[%s638 + $0x91] sm:$0xff] %vm639, %v618
        %653 = vst.msk [vmem:[%s638 + $0x99] sm:$0xff] %vm639, %v619
        %654 = vst.msk [vmem:[%s638 + $0xa9] sm:$0xff] %vm639, %v620
        %655 = vst.msk [vmem:[%s638 + $0xb1] sm:$0xff] %vm639, %v621
        %656 = vst.msk [vmem:[%s638 + $0xc1] sm:$0xff] %vm639, %v622
        %657 = vst.msk [vmem:[%s638 + $0xc9] sm:$0xff] %vm639, %v623
        %658 = vst.msk [vmem:[%s638 + $0xd9] sm:$0xff] %vm639, %v624
        %659 = vst.msk [vmem:[%s638 + $0xe1] sm:$0xff] %vm639, %v625
        %660 = vst.msk [vmem:[%s638 + $0xf1] sm:$0xff] %vm639, %v626
        %661 = vst.msk [vmem:[%s638 + $0xf9] sm:$0xff] %vm639, %v627
        %662 = vst.msk [vmem:[%s638 + $0x109] sm:$0xff] %vm639, %v628
        %663 = vst.msk [vmem:[%s638 + $0x111] sm:$0xff] %vm639, %v629
        %664 = vst.msk [vmem:[%s638 + $0x121] sm:$0xff] %vm639, %v630
        %665 = vst.msk [vmem:[%s638 + $0x129] sm:$0xff] %vm639, %v631
        %666 = vst.msk [vmem:[%s638 + $0x139] sm:$0xff] %vm639, %v632
        %667 = vst.msk [vmem:[%s638 + $0x141] sm:$0xff] %vm639, %v633
        %668 = vst.msk [vmem:[%s638 + $0x151] sm:$0xff] %vm639, %v634
        %669 = vst.msk [vmem:[%s638 + $0x159] sm:$0xff] %vm639, %v635
        %670 = vst.msk [vmem:[%s638 + $0x169] sm:$0xff] %vm639, %v636
        %671 = vst.msk [vmem:[%s638 + $0x171] sm:$0xff] %vm639, %v637
        %v672 = vld [vmem:[#allocation2] sm:$0xff]
        %v673 = vld [vmem:[#allocation2 + $0x8] sm:$0xff]
        %v674 = vld [vmem:[#allocation2 + $0x18] sm:$0xff]
        %v675 = vld [vmem:[#allocation2 + $0x20] sm:$0xff]
        %v676 = vld [vmem:[#allocation2 + $0x30] sm:$0xff]
        %v677 = vld [vmem:[#allocation2 + $0x38] sm:$0xff]
        %v678 = vld [vmem:[#allocation2 + $0x48] sm:$0xff]
        %v679 = vld [vmem:[#allocation2 + $0x50] sm:$0xff]
        %v680 = vld [vmem:[#allocation2 + $0x60] sm:$0xff]
        %v681 = vld [vmem:[#allocation2 + $0x68] sm:$0xff]
        %v682 = vld [vmem:[#allocation2 + $0x78] sm:$0xff]
        %v683 = vld [vmem:[#allocation2 + $0x80] sm:$0xff]
        %v684 = vld [vmem:[#allocation2 + $0x90] sm:$0xff]
        %v685 = vld [vmem:[#allocation2 + $0x98] sm:$0xff]
        %v686 = vld [vmem:[#allocation2 + $0xa8] sm:$0xff]
        %v687 = vld [vmem:[#allocation2 + $0xb0] sm:$0xff]
        %v688 = vld [vmem:[#allocation2 + $0xc0] sm:$0xff]
        %v689 = vld [vmem:[#allocation2 + $0xc8] sm:$0xff]
        %v690 = vld [vmem:[#allocation2 + $0xd8] sm:$0xff]
        %v691 = vld [vmem:[#allocation2 + $0xe0] sm:$0xff]
        %v692 = vld [vmem:[#allocation2 + $0xf0] sm:$0xff]
        %v693 = vld [vmem:[#allocation2 + $0xf8] sm:$0xff]
        %v694 = vld [vmem:[#allocation2 + $0x108] sm:$0xff]
        %v695 = vld [vmem:[#allocation2 + $0x110] sm:$0xff]
        %v696 = vld [vmem:[#allocation2 + $0x120] sm:$0xff]
        %v697 = vld [vmem:[#allocation2 + $0x128] sm:$0xff]
        %v698 = vld [vmem:[#allocation2 + $0x138] sm:$0xff]
        %v699 = vld [vmem:[#allocation2 + $0x140] sm:$0xff]
        %v700 = vld [vmem:[#allocation2 + $0x150] sm:$0xff]
        %v701 = vld [vmem:[#allocation2 + $0x158] sm:$0xff]
        %v702 = vld [vmem:[#allocation2 + $0x168] sm:$0xff]
        %v703 = vld [vmem:[#allocation2 + $0x170] sm:$0xff]
        %v704 = vld [vmem:[%s2] sm:$0xf]
        %v705 = vld [vmem:[#allocation2 + $0x1] sm:$0xff]
        %v706 = vld [vmem:[#allocation2 + $0x9] sm:$0xff]
        %v707 = vld [vmem:[#allocation2 + $0x19] sm:$0xff]
        %v708 = vld [vmem:[#allocation2 + $0x21] sm:$0xff]
        %v709 = vld [vmem:[#allocation2 + $0x31] sm:$0xff]
        %v710 = vld [vmem:[#allocation2 + $0x39] sm:$0xff]
        %v711 = vld [vmem:[#allocation2 + $0x49] sm:$0xff]
        %v712 = vld [vmem:[#allocation2 + $0x51] sm:$0xff]
        %v713 = vld [vmem:[#allocation2 + $0x61] sm:$0xff]
        %v714 = vld [vmem:[#allocation2 + $0x69] sm:$0xff]
        %v715 = vld [vmem:[#allocation2 + $0x79] sm:$0xff]
        %v716 = vld [vmem:[#allocation2 + $0x81] sm:$0xff]
        %v717 = vld [vmem:[#allocation2 + $0x91] sm:$0xff]
        %v718 = vld [vmem:[#allocation2 + $0x99] sm:$0xff]
        %v719 = vld [vmem:[#allocation2 + $0xa9] sm:$0xff]
        %v720 = vld [vmem:[#allocation2 + $0xb1] sm:$0xff]
        %v721 = vld [vmem:[#allocation2 + $0xc1] sm:$0xff]
        %v722 = vld [vmem:[#allocation2 + $0xc9] sm:$0xff]
        %v723 = vld [vmem:[#allocation2 + $0xd9] sm:$0xff]
        %v724 = vld [vmem:[#allocation2 + $0xe1] sm:$0xff]
        %v725 = vld [vmem:[#allocation2 + $0xf1] sm:$0xff]
        %v726 = vld [vmem:[#allocation2 + $0xf9] sm:$0xff]
        %v727 = vld [vmem:[#allocation2 + $0x109] sm:$0xff]
        %v728 = vld [vmem:[#allocation2 + $0x111] sm:$0xff]
        %v729 = vld [vmem:[#allocation2 + $0x121] sm:$0xff]
        %v730 = vld [vmem:[#allocation2 + $0x129] sm:$0xff]
        %v731 = vld [vmem:[#allocation2 + $0x139] sm:$0xff]
        %v732 = vld [vmem:[#allocation2 + $0x141] sm:$0xff]
        %v733 = vld [vmem:[#allocation2 + $0x151] sm:$0xff]
        %v734 = vld [vmem:[#allocation2 + $0x159] sm:$0xff]
        %v735 = vld [vmem:[#allocation2 + $0x169] sm:$0xff]
        %v736 = vld [vmem:[#allocation2 + $0x171] sm:$0xff]
        %s737 = scalar_lea.vmem %s2, 4
        %v738 = vld [vmem:[%s737] sm:$0xf]
        %v740 = vsel %vm639, %v705, 0
        %v743 = vsel %vm639, %v706, 0
        %v746 = vsel %vm639, %v707, 0
        %v749 = vsel %vm639, %v708, 0
        %v752 = vsel %vm639, %v709, 0
        %v755 = vsel %vm639, %v710, 0
        %v758 = vsel %vm639, %v711, 0
        %v761 = vsel %vm639, %v712, 0
        %v764 = vsel %vm639, %v713, 0
        %v767 = vsel %vm639, %v714, 0
        %v770 = vsel %vm639, %v715, 0
        %v773 = vsel %vm639, %v716, 0
        %v776 = vsel %vm639, %v717, 0
        %v779 = vsel %vm639, %v718, 0
        %v782 = vsel %vm639, %v719, 0
        %v785 = vsel %vm639, %v720, 0
        %v788 = vsel %vm639, %v721, 0
        %v791 = vsel %vm639, %v722, 0
        %v794 = vsel %vm639, %v723, 0
        %v797 = vsel %vm639, %v724, 0
        %v800 = vsel %vm639, %v725, 0
        %v803 = vsel %vm639, %v726, 0
        %v806 = vsel %vm639, %v727, 0
        %v809 = vsel %vm639, %v728, 0
        %v812 = vsel %vm639, %v729, 0
        %v815 = vsel %vm639, %v730, 0
        %v818 = vsel %vm639, %v731, 0
        %v821 = vsel %vm639, %v732, 0
        %v824 = vsel %vm639, %v733, 0
        %v827 = vsel %vm639, %v734, 0
        %v830 = vsel %vm639, %v735, 0
        %v833 = vsel %vm639, %v736, 0
        %vm835 = vcmask 1043456
        %v837 = vsel %vm835, %v738, 0
        %839 = vmatpush.msra.mxu0 0.0
        %840 = vmatpush.msra.mxu0 0.0
        %841 = vmatpush.msra.mxu0 0.0
        %842 = vmatpush.msra.mxu0 0.0
        %843 = vmatpush.msra.mxu0 0.0
        %844 = vmatpush.msra.mxu0 0.0
        %845 = vmatpush.msra.mxu0 0.0
        %846 = vmatpush.msra.mxu0 0.0
        %847 = vmatpush.msra.mxu0 0.0
        %848 = vmatpush.msra.mxu0 0.0
        %849 = vmatpush.msra.mxu0 0.0
        %850 = vmatpush.msra.mxu0 0.0
        %851 = vmatpush.msra.mxu0 0.0
        %852 = vmatpush.msra.mxu0 0.0
        %853 = vmatpush.msra.mxu0 0.0
        %854 = vmatpush.msra.mxu0 %v837
        %855 = vmatmul.f32.gmra.mxu0 %v740
        %v856 = vpop.f32.mrf.mxu0
        %v857 = vadd.f32 0.0, %v856
        %858 = vmatmul.f32.gmra.mxu0 %v743
        %v859 = vpop.f32.mrf.mxu0
        %v860 = vadd.f32 0.0, %v859
        %861 = vmatmul.f32.gmra.mxu0 %v746
        %v862 = vpop.f32.mrf.mxu0
        %v863 = vadd.f32 0.0, %v862
        %864 = vmatmul.f32.gmra.mxu0 %v749
        %v865 = vpop.f32.mrf.mxu0
        %v866 = vadd.f32 0.0, %v865
        %867 = vmatmul.f32.gmra.mxu0 %v752
        %v868 = vpop.f32.mrf.mxu0
        %v869 = vadd.f32 0.0, %v868
        %870 = vmatmul.f32.gmra.mxu0 %v755
        %v871 = vpop.f32.mrf.mxu0
        %v872 = vadd.f32 0.0, %v871
        %873 = vmatmul.f32.gmra.mxu0 %v758
        %v874 = vpop.f32.mrf.mxu0
        %v875 = vadd.f32 0.0, %v874
        %876 = vmatmul.f32.gmra.mxu0 %v761
        %v877 = vpop.f32.mrf.mxu0
        %v878 = vadd.f32 0.0, %v877
        %879 = vmatmul.f32.gmra.mxu0 %v764
        %v880 = vpop.f32.mrf.mxu0
        %v881 = vadd.f32 0.0, %v880
        %882 = vmatmul.f32.gmra.mxu0 %v767
        %v883 = vpop.f32.mrf.mxu0
        %v884 = vadd.f32 0.0, %v883
        %885 = vmatmul.f32.gmra.mxu0 %v770
        %v886 = vpop.f32.mrf.mxu0
        %v887 = vadd.f32 0.0, %v886
        %888 = vmatmul.f32.gmra.mxu0 %v773
        %v889 = vpop.f32.mrf.mxu0
        %v890 = vadd.f32 0.0, %v889
        %891 = vmatmul.f32.gmra.mxu0 %v776
        %v892 = vpop.f32.mrf.mxu0
        %v893 = vadd.f32 0.0, %v892
        %894 = vmatmul.f32.gmra.mxu0 %v779
        %v895 = vpop.f32.mrf.mxu0
        %v896 = vadd.f32 0.0, %v895
        %897 = vmatmul.f32.gmra.mxu0 %v782
        %v898 = vpop.f32.mrf.mxu0
        %v899 = vadd.f32 0.0, %v898
        %900 = vmatmul.f32.gmra.mxu0 %v785
        %v901 = vpop.f32.mrf.mxu0
        %v902 = vadd.f32 0.0, %v901
        %903 = vmatmul.f32.gmra.mxu0 %v788
        %v904 = vpop.f32.mrf.mxu0
        %v905 = vadd.f32 0.0, %v904
        %906 = vmatmul.f32.gmra.mxu0 %v791
        %v907 = vpop.f32.mrf.mxu0
        %v908 = vadd.f32 0.0, %v907
        %909 = vmatmul.f32.gmra.mxu0 %v794
        %v910 = vpop.f32.mrf.mxu0
        %v911 = vadd.f32 0.0, %v910
        %912 = vmatmul.f32.gmra.mxu0 %v797
        %v913 = vpop.f32.mrf.mxu0
        %v914 = vadd.f32 0.0, %v913
        %915 = vmatmul.f32.gmra.mxu0 %v800
        %v916 = vpop.f32.mrf.mxu0
        %v917 = vadd.f32 0.0, %v916
        %918 = vmatmul.f32.gmra.mxu0 %v803
        %v919 = vpop.f32.mrf.mxu0
        %v920 = vadd.f32 0.0, %v919
        %921 = vmatmul.f32.gmra.mxu0 %v806
        %v922 = vpop.f32.mrf.mxu0
        %v923 = vadd.f32 0.0, %v922
        %924 = vmatmul.f32.gmra.mxu0 %v809
        %v925 = vpop.f32.mrf.mxu0
        %v926 = vadd.f32 0.0, %v925
        %927 = vmatmul.f32.gmra.mxu0 %v812
        %v928 = vpop.f32.mrf.mxu0
        %v929 = vadd.f32 0.0, %v928
        %930 = vmatmul.f32.gmra.mxu0 %v815
        %v931 = vpop.f32.mrf.mxu0
        %v932 = vadd.f32 0.0, %v931
        %933 = vmatmul.f32.gmra.mxu0 %v818
        %v934 = vpop.f32.mrf.mxu0
        %v935 = vadd.f32 0.0, %v934
        %936 = vmatmul.f32.gmra.mxu0 %v821
        %v937 = vpop.f32.mrf.mxu0
        %v938 = vadd.f32 0.0, %v937
        %939 = vmatmul.f32.gmra.mxu0 %v824
        %v940 = vpop.f32.mrf.mxu0
        %v941 = vadd.f32 0.0, %v940
        %942 = vmatmul.f32.gmra.mxu0 %v827
        %v943 = vpop.f32.mrf.mxu0
        %v944 = vadd.f32 0.0, %v943
        %945 = vmatmul.f32.gmra.mxu0 %v830
        %v946 = vpop.f32.mrf.mxu0
        %v947 = vadd.f32 0.0, %v946
        %948 = vmatmul.f32.gmra.mxu0 %v833
        %v949 = vpop.f32.mrf.mxu0
        %v950 = vadd.f32 0.0, %v949
        %951 = vdwg.mxu0
        %v953 = vsel %vm639, %v672, 0
        %v956 = vsel %vm639, %v673, 0
        %v959 = vsel %vm639, %v674, 0
        %v962 = vsel %vm639, %v675, 0
        %v965 = vsel %vm639, %v676, 0
        %v968 = vsel %vm639, %v677, 0
        %v971 = vsel %vm639, %v678, 0
        %v974 = vsel %vm639, %v679, 0
        %v977 = vsel %vm639, %v680, 0
        %v980 = vsel %vm639, %v681, 0
        %v983 = vsel %vm639, %v682, 0
        %v986 = vsel %vm639, %v683, 0
        %v989 = vsel %vm639, %v684, 0
        %v992 = vsel %vm639, %v685, 0
        %v995 = vsel %vm639, %v686, 0
        %v998 = vsel %vm639, %v687, 0
        %v1001 = vsel %vm639, %v688, 0
        %v1004 = vsel %vm639, %v689, 0
        %v1007 = vsel %vm639, %v690, 0
        %v1010 = vsel %vm639, %v691, 0
        %v1013 = vsel %vm639, %v692, 0
        %v1016 = vsel %vm639, %v693, 0
        %v1019 = vsel %vm639, %v694, 0
        %v1022 = vsel %vm639, %v695, 0
        %v1025 = vsel %vm639, %v696, 0
        %v1028 = vsel %vm639, %v697, 0
        %v1031 = vsel %vm639, %v698, 0
        %v1034 = vsel %vm639, %v699, 0
        %v1037 = vsel %vm639, %v700, 0
        %v1040 = vsel %vm639, %v701, 0
        %v1043 = vsel %vm639, %v702, 0
        %v1046 = vsel %vm639, %v703, 0
        %v1049 = vsel %vm835, %v704, 0
        %1051 = vmatpush.msra.mxu0 0.0
        %1052 = vmatpush.msra.mxu0 0.0
        %1053 = vmatpush.msra.mxu0 0.0
        %1054 = vmatpush.msra.mxu0 0.0
        %1055 = vmatpush.msra.mxu0 0.0
        %1056 = vmatpush.msra.mxu0 0.0
        %1057 = vmatpush.msra.mxu0 0.0
        %1058 = vmatpush.msra.mxu0 0.0
        %1059 = vmatpush.msra.mxu0 0.0
        %1060 = vmatpush.msra.mxu0 0.0
        %1061 = vmatpush.msra.mxu0 0.0
        %1062 = vmatpush.msra.mxu0 0.0
        %1063 = vmatpush.msra.mxu0 0.0
        %1064 = vmatpush.msra.mxu0 0.0
        %1065 = vmatpush.msra.mxu0 0.0
        %1066 = vmatpush.msra.mxu0 %v1049
        %1067 = vmatmul.f32.gmra.mxu0 %v953
        %v1068 = vpop.f32.mrf.mxu0
        %v1069 = vadd.f32 %v857, %v1068
        %1070 = vmatmul.f32.gmra.mxu0 %v956
        %v1071 = vpop.f32.mrf.mxu0
        %v1072 = vadd.f32 %v860, %v1071
        %1073 = vmatmul.f32.gmra.mxu0 %v959
        %v1074 = vpop.f32.mrf.mxu0
        %v1075 = vadd.f32 %v863, %v1074
        %1076 = vmatmul.f32.gmra.mxu0 %v962
        %v1077 = vpop.f32.mrf.mxu0
        %v1078 = vadd.f32 %v866, %v1077
        %1079 = vmatmul.f32.gmra.mxu0 %v965
        %v1080 = vpop.f32.mrf.mxu0
        %v1081 = vadd.f32 %v869, %v1080
        %1082 = vmatmul.f32.gmra.mxu0 %v968
        %v1083 = vpop.f32.mrf.mxu0
        %v1084 = vadd.f32 %v872, %v1083
        %1085 = vmatmul.f32.gmra.mxu0 %v971
        %v1086 = vpop.f32.mrf.mxu0
        %v1087 = vadd.f32 %v875, %v1086
        %1088 = vmatmul.f32.gmra.mxu0 %v974
        %v1089 = vpop.f32.mrf.mxu0
        %v1090 = vadd.f32 %v878, %v1089
        %1091 = vmatmul.f32.gmra.mxu0 %v977
        %v1092 = vpop.f32.mrf.mxu0
        %v1093 = vadd.f32 %v881, %v1092
        %1094 = vmatmul.f32.gmra.mxu0 %v980
        %v1095 = vpop.f32.mrf.mxu0
        %v1096 = vadd.f32 %v884, %v1095
        %1097 = vmatmul.f32.gmra.mxu0 %v983
        %v1098 = vpop.f32.mrf.mxu0
        %v1099 = vadd.f32 %v887, %v1098
        %1100 = vmatmul.f32.gmra.mxu0 %v986
        %v1101 = vpop.f32.mrf.mxu0
        %v1102 = vadd.f32 %v890, %v1101
        %1103 = vmatmul.f32.gmra.mxu0 %v989
        %v1104 = vpop.f32.mrf.mxu0
        %v1105 = vadd.f32 %v893, %v1104
        %1106 = vmatmul.f32.gmra.mxu0 %v992
        %v1107 = vpop.f32.mrf.mxu0
        %v1108 = vadd.f32 %v896, %v1107
        %1109 = vmatmul.f32.gmra.mxu0 %v995
        %v1110 = vpop.f32.mrf.mxu0
        %v1111 = vadd.f32 %v899, %v1110
        %1112 = vmatmul.f32.gmra.mxu0 %v998
        %v1113 = vpop.f32.mrf.mxu0
        %v1114 = vadd.f32 %v902, %v1113
        %1115 = vmatmul.f32.gmra.mxu0 %v1001
        %v1116 = vpop.f32.mrf.mxu0
        %v1117 = vadd.f32 %v905, %v1116
        %1118 = vmatmul.f32.gmra.mxu0 %v1004
        %v1119 = vpop.f32.mrf.mxu0
        %v1120 = vadd.f32 %v908, %v1119
        %1121 = vmatmul.f32.gmra.mxu0 %v1007
        %v1122 = vpop.f32.mrf.mxu0
        %v1123 = vadd.f32 %v911, %v1122
        %1124 = vmatmul.f32.gmra.mxu0 %v1010
        %v1125 = vpop.f32.mrf.mxu0
        %v1126 = vadd.f32 %v914, %v1125
        %1127 = vmatmul.f32.gmra.mxu0 %v1013
        %v1128 = vpop.f32.mrf.mxu0
        %v1129 = vadd.f32 %v917, %v1128
        %1130 = vmatmul.f32.gmra.mxu0 %v1016
        %v1131 = vpop.f32.mrf.mxu0
        %v1132 = vadd.f32 %v920, %v1131
        %1133 = vmatmul.f32.gmra.mxu0 %v1019
        %v1134 = vpop.f32.mrf.mxu0
        %v1135 = vadd.f32 %v923, %v1134
        %1136 = vmatmul.f32.gmra.mxu0 %v1022
        %v1137 = vpop.f32.mrf.mxu0
        %v1138 = vadd.f32 %v926, %v1137
        %1139 = vmatmul.f32.gmra.mxu0 %v1025
        %v1140 = vpop.f32.mrf.mxu0
        %v1141 = vadd.f32 %v929, %v1140
        %1142 = vmatmul.f32.gmra.mxu0 %v1028
        %v1143 = vpop.f32.mrf.mxu0
        %v1144 = vadd.f32 %v932, %v1143
        %1145 = vmatmul.f32.gmra.mxu0 %v1031
        %v1146 = vpop.f32.mrf.mxu0
        %v1147 = vadd.f32 %v935, %v1146
        %1148 = vmatmul.f32.gmra.mxu0 %v1034
        %v1149 = vpop.f32.mrf.mxu0
        %v1150 = vadd.f32 %v938, %v1149
        %1151 = vmatmul.f32.gmra.mxu0 %v1037
        %v1152 = vpop.f32.mrf.mxu0
        %v1153 = vadd.f32 %v941, %v1152
        %1154 = vmatmul.f32.gmra.mxu0 %v1040
        %v1155 = vpop.f32.mrf.mxu0
        %v1156 = vadd.f32 %v944, %v1155
        %1157 = vmatmul.f32.gmra.mxu0 %v1043
        %v1158 = vpop.f32.mrf.mxu0
        %v1159 = vadd.f32 %v947, %v1158
        %1160 = vmatmul.f32.gmra.mxu0 %v1046
        %v1161 = vpop.f32.mrf.mxu0
        %v1162 = vadd.f32 %v950, %v1161
        %1163 = vdwg.mxu0
        %v1164 = vld [vmem:[#allocation2 + $0x2] sm:$0xff]
        %v1165 = vld [vmem:[#allocation2 + $0xa] sm:$0xff]
        %v1166 = vld [vmem:[#allocation2 + $0x1a] sm:$0xff]
        %v1167 = vld [vmem:[#allocation2 + $0x22] sm:$0xff]
        %v1168 = vld [vmem:[#allocation2 + $0x32] sm:$0xff]
        %v1169 = vld [vmem:[#allocation2 + $0x3a] sm:$0xff]
        %v1170 = vld [vmem:[#allocation2 + $0x4a] sm:$0xff]
        %v1171 = vld [vmem:[#allocation2 + $0x52] sm:$0xff]
        %v1172 = vld [vmem:[#allocation2 + $0x62] sm:$0xff]
        %v1173 = vld [vmem:[#allocation2 + $0x6a] sm:$0xff]
        %v1174 = vld [vmem:[#allocation2 + $0x7a] sm:$0xff]
        %v1175 = vld [vmem:[#allocation2 + $0x82] sm:$0xff]
        %v1176 = vld [vmem:[#allocation2 + $0x92] sm:$0xff]
        %v1177 = vld [vmem:[#allocation2 + $0x9a] sm:$0xff]
        %v1178 = vld [vmem:[#allocation2 + $0xaa] sm:$0xff]
        %v1179 = vld [vmem:[#allocation2 + $0xb2] sm:$0xff]
        %v1180 = vld [vmem:[#allocation2 + $0xc2] sm:$0xff]
        %v1181 = vld [vmem:[#allocation2 + $0xca] sm:$0xff]
        %v1182 = vld [vmem:[#allocation2 + $0xda] sm:$0xff]
        %v1183 = vld [vmem:[#allocation2 + $0xe2] sm:$0xff]
        %v1184 = vld [vmem:[#allocation2 + $0xf2] sm:$0xff]
        %v1185 = vld [vmem:[#allocation2 + $0xfa] sm:$0xff]
        %v1186 = vld [vmem:[#allocation2 + $0x10a] sm:$0xff]
        %v1187 = vld [vmem:[#allocation2 + $0x112] sm:$0xff]
        %v1188 = vld [vmem:[#allocation2 + $0x122] sm:$0xff]
        %v1189 = vld [vmem:[#allocation2 + $0x12a] sm:$0xff]
        %v1190 = vld [vmem:[#allocation2 + $0x13a] sm:$0xff]
        %v1191 = vld [vmem:[#allocation2 + $0x142] sm:$0xff]
        %v1192 = vld [vmem:[#allocation2 + $0x152] sm:$0xff]
        %v1193 = vld [vmem:[#allocation2 + $0x15a] sm:$0xff]
        %v1194 = vld [vmem:[#allocation2 + $0x16a] sm:$0xff]
        %v1195 = vld [vmem:[#allocation2 + $0x172] sm:$0xff]
        %s1196 = scalar_lea.vmem %s2, 8
        %v1197 = vld [vmem:[%s1196] sm:$0xf]
        %v1199 = vsel %vm639, %v1164, 0
        %v1202 = vsel %vm639, %v1165, 0
        %v1205 = vsel %vm639, %v1166, 0
        %v1208 = vsel %vm639, %v1167, 0
        %v1211 = vsel %vm639, %v1168, 0
        %v1214 = vsel %vm639, %v1169, 0
        %v1217 = vsel %vm639, %v1170, 0
        %v1220 = vsel %vm639, %v1171, 0
        %v1223 = vsel %vm639, %v1172, 0
        %v1226 = vsel %vm639, %v1173, 0
        %v1229 = vsel %vm639, %v1174, 0
        %v1232 = vsel %vm639, %v1175, 0
        %v1235 = vsel %vm639, %v1176, 0
        %v1238 = vsel %vm639, %v1177, 0
        %v1241 = vsel %vm639, %v1178, 0
        %v1244 = vsel %vm639, %v1179, 0
        %v1247 = vsel %vm639, %v1180, 0
        %v1250 = vsel %vm639, %v1181, 0
        %v1253 = vsel %vm639, %v1182, 0
        %v1256 = vsel %vm639, %v1183, 0
        %v1259 = vsel %vm639, %v1184, 0
        %v1262 = vsel %vm639, %v1185, 0
        %v1265 = vsel %vm639, %v1186, 0
        %v1268 = vsel %vm639, %v1187, 0
        %v1271 = vsel %vm639, %v1188, 0
        %v1274 = vsel %vm639, %v1189, 0
        %v1277 = vsel %vm639, %v1190, 0
        %v1280 = vsel %vm639, %v1191, 0
        %v1283 = vsel %vm639, %v1192, 0
        %v1286 = vsel %vm639, %v1193, 0
        %v1289 = vsel %vm639, %v1194, 0
        %v1292 = vsel %vm639, %v1195, 0
        %v1295 = vsel %vm835, %v1197, 0
        %1297 = vmatpush.msra.mxu0 0.0
        %1298 = vmatpush.msra.mxu0 0.0
        %1299 = vmatpush.msra.mxu0 0.0
        %1300 = vmatpush.msra.mxu0 0.0
        %1301 = vmatpush.msra.mxu0 0.0
        %1302 = vmatpush.msra.mxu0 0.0
        %1303 = vmatpush.msra.mxu0 0.0
        %1304 = vmatpush.msra.mxu0 0.0
        %1305 = vmatpush.msra.mxu0 0.0
        %1306 = vmatpush.msra.mxu0 0.0
        %1307 = vmatpush.msra.mxu0 0.0
        %1308 = vmatpush.msra.mxu0 0.0
        %1309 = vmatpush.msra.mxu0 0.0
        %1310 = vmatpush.msra.mxu0 0.0
        %1311 = vmatpush.msra.mxu0 0.0
        %1312 = vmatpush.msra.mxu0 %v1295
        %1313 = vmatmul.f32.gmra.mxu0 %v1199
        %v1314 = vpop.f32.mrf.mxu0
        %v1315 = vadd.f32 0.0, %v1314
        %1316 = vmatmul.f32.gmra.mxu0 %v1202
        %v1317 = vpop.f32.mrf.mxu0
        %v1318 = vadd.f32 0.0, %v1317
        %1319 = vmatmul.f32.gmra.mxu0 %v1205
        %v1320 = vpop.f32.mrf.mxu0
        %v1321 = vadd.f32 0.0, %v1320
        %1322 = vmatmul.f32.gmra.mxu0 %v1208
        %v1323 = vpop.f32.mrf.mxu0
        %v1324 = vadd.f32 0.0, %v1323
        %1325 = vmatmul.f32.gmra.mxu0 %v1211
        %v1326 = vpop.f32.mrf.mxu0
        %v1327 = vadd.f32 0.0, %v1326
        %1328 = vmatmul.f32.gmra.mxu0 %v1214
        %v1329 = vpop.f32.mrf.mxu0
        %v1330 = vadd.f32 0.0, %v1329
        %1331 = vmatmul.f32.gmra.mxu0 %v1217
        %v1332 = vpop.f32.mrf.mxu0
        %v1333 = vadd.f32 0.0, %v1332
        %1334 = vmatmul.f32.gmra.mxu0 %v1220
        %v1335 = vpop.f32.mrf.mxu0
        %v1336 = vadd.f32 0.0, %v1335
        %1337 = vmatmul.f32.gmra.mxu0 %v1223
        %v1338 = vpop.f32.mrf.mxu0
        %v1339 = vadd.f32 0.0, %v1338
        %1340 = vmatmul.f32.gmra.mxu0 %v1226
        %v1341 = vpop.f32.mrf.mxu0
        %v1342 = vadd.f32 0.0, %v1341
        %1343 = vmatmul.f32.gmra.mxu0 %v1229
        %v1344 = vpop.f32.mrf.mxu0
        %v1345 = vadd.f32 0.0, %v1344
        %1346 = vmatmul.f32.gmra.mxu0 %v1232
        %v1347 = vpop.f32.mrf.mxu0
        %v1348 = vadd.f32 0.0, %v1347
        %1349 = vmatmul.f32.gmra.mxu0 %v1235
        %v1350 = vpop.f32.mrf.mxu0
        %v1351 = vadd.f32 0.0, %v1350
        %1352 = vmatmul.f32.gmra.mxu0 %v1238
        %v1353 = vpop.f32.mrf.mxu0
        %v1354 = vadd.f32 0.0, %v1353
        %1355 = vmatmul.f32.gmra.mxu0 %v1241
        %v1356 = vpop.f32.mrf.mxu0
        %v1357 = vadd.f32 0.0, %v1356
        %1358 = vmatmul.f32.gmra.mxu0 %v1244
        %v1359 = vpop.f32.mrf.mxu0
        %v1360 = vadd.f32 0.0, %v1359
        %1361 = vmatmul.f32.gmra.mxu0 %v1247
        %v1362 = vpop.f32.mrf.mxu0
        %v1363 = vadd.f32 0.0, %v1362
        %1364 = vmatmul.f32.gmra.mxu0 %v1250
        %v1365 = vpop.f32.mrf.mxu0
        %v1366 = vadd.f32 0.0, %v1365
        %1367 = vmatmul.f32.gmra.mxu0 %v1253
        %v1368 = vpop.f32.mrf.mxu0
        %v1369 = vadd.f32 0.0, %v1368
        %1370 = vmatmul.f32.gmra.mxu0 %v1256
        %v1371 = vpop.f32.mrf.mxu0
        %v1372 = vadd.f32 0.0, %v1371
        %1373 = vmatmul.f32.gmra.mxu0 %v1259
        %v1374 = vpop.f32.mrf.mxu0
        %v1375 = vadd.f32 0.0, %v1374
        %1376 = vmatmul.f32.gmra.mxu0 %v1262
        %v1377 = vpop.f32.mrf.mxu0
        %v1378 = vadd.f32 0.0, %v1377
        %1379 = vmatmul.f32.gmra.mxu0 %v1265
        %v1380 = vpop.f32.mrf.mxu0
        %v1381 = vadd.f32 0.0, %v1380
        %1382 = vmatmul.f32.gmra.mxu0 %v1268
        %v1383 = vpop.f32.mrf.mxu0
        %v1384 = vadd.f32 0.0, %v1383
        %1385 = vmatmul.f32.gmra.mxu0 %v1271
        %v1386 = vpop.f32.mrf.mxu0
        %v1387 = vadd.f32 0.0, %v1386
        %1388 = vmatmul.f32.gmra.mxu0 %v1274
        %v1389 = vpop.f32.mrf.mxu0
        %v1390 = vadd.f32 0.0, %v1389
        %1391 = vmatmul.f32.gmra.mxu0 %v1277
        %v1392 = vpop.f32.mrf.mxu0
        %v1393 = vadd.f32 0.0, %v1392
        %1394 = vmatmul.f32.gmra.mxu0 %v1280
        %v1395 = vpop.f32.mrf.mxu0
        %v1396 = vadd.f32 0.0, %v1395
        %1397 = vmatmul.f32.gmra.mxu0 %v1283
        %v1398 = vpop.f32.mrf.mxu0
        %v1399 = vadd.f32 0.0, %v1398
        %1400 = vmatmul.f32.gmra.mxu0 %v1286
        %v1401 = vpop.f32.mrf.mxu0
        %v1402 = vadd.f32 0.0, %v1401
        %1403 = vmatmul.f32.gmra.mxu0 %v1289
        %v1404 = vpop.f32.mrf.mxu0
        %v1405 = vadd.f32 0.0, %v1404
        %1406 = vmatmul.f32.gmra.mxu0 %v1292
        %v1407 = vpop.f32.mrf.mxu0
        %v1408 = vadd.f32 0.0, %v1407
        %1409 = vdwg.mxu0
        %v1410 = vadd.f32 %v1069, %v1315
        %v1411 = vadd.f32 %v1072, %v1318
        %v1412 = vadd.f32 %v1075, %v1321
        %v1413 = vadd.f32 %v1078, %v1324
        %v1414 = vadd.f32 %v1081, %v1327
        %v1415 = vadd.f32 %v1084, %v1330
        %v1416 = vadd.f32 %v1087, %v1333
        %v1417 = vadd.f32 %v1090, %v1336
        %v1418 = vadd.f32 %v1093, %v1339
        %v1419 = vadd.f32 %v1096, %v1342
        %v1420 = vadd.f32 %v1099, %v1345
        %v1421 = vadd.f32 %v1102, %v1348
        %v1422 = vadd.f32 %v1105, %v1351
        %v1423 = vadd.f32 %v1108, %v1354
        %v1424 = vadd.f32 %v1111, %v1357
        %v1425 = vadd.f32 %v1114, %v1360
        %v1426 = vadd.f32 %v1117, %v1363
        %v1427 = vadd.f32 %v1120, %v1366
        %v1428 = vadd.f32 %v1123, %v1369
        %v1429 = vadd.f32 %v1126, %v1372
        %v1430 = vadd.f32 %v1129, %v1375
        %v1431 = vadd.f32 %v1132, %v1378
        %v1432 = vadd.f32 %v1135, %v1381
        %v1433 = vadd.f32 %v1138, %v1384
        %v1434 = vadd.f32 %v1141, %v1387
        %v1435 = vadd.f32 %v1144, %v1390
        %v1436 = vadd.f32 %v1147, %v1393
        %v1437 = vadd.f32 %v1150, %v1396
        %v1438 = vadd.f32 %v1153, %v1399
        %v1439 = vadd.f32 %v1156, %v1402
        %v1440 = vadd.f32 %v1159, %v1405
        %v1441 = vadd.f32 %v1162, %v1408
        %v1442 = vld [vmem:[%s638] sm:$0xff]
        %v1443 = vld [vmem:[%s638 + $0x8] sm:$0xff]
        %v1444 = vld [vmem:[%s638 + $0x18] sm:$0xff]
        %v1445 = vld [vmem:[%s638 + $0x20] sm:$0xff]
        %v1446 = vld [vmem:[%s638 + $0x30] sm:$0xff]
        %v1447 = vld [vmem:[%s638 + $0x38] sm:$0xff]
        %v1448 = vld [vmem:[%s638 + $0x48] sm:$0xff]
        %v1449 = vld [vmem:[%s638 + $0x50] sm:$0xff]
        %v1450 = vld [vmem:[%s638 + $0x60] sm:$0xff]
        %v1451 = vld [vmem:[%s638 + $0x68] sm:$0xff]
        %v1452 = vld [vmem:[%s638 + $0x78] sm:$0xff]
        %v1453 = vld [vmem:[%s638 + $0x80] sm:$0xff]
        %v1454 = vld [vmem:[%s638 + $0x90] sm:$0xff]
        %v1455 = vld [vmem:[%s638 + $0x98] sm:$0xff]
        %v1456 = vld [vmem:[%s638 + $0xa8] sm:$0xff]
        %v1457 = vld [vmem:[%s638 + $0xb0] sm:$0xff]
        %v1458 = vld [vmem:[%s638 + $0xc0] sm:$0xff]
        %v1459 = vld [vmem:[%s638 + $0xc8] sm:$0xff]
        %v1460 = vld [vmem:[%s638 + $0xd8] sm:$0xff]
        %v1461 = vld [vmem:[%s638 + $0xe0] sm:$0xff]
        %v1462 = vld [vmem:[%s638 + $0xf0] sm:$0xff]
        %v1463 = vld [vmem:[%s638 + $0xf8] sm:$0xff]
        %v1464 = vld [vmem:[%s638 + $0x108] sm:$0xff]
        %v1465 = vld [vmem:[%s638 + $0x110] sm:$0xff]
        %v1466 = vld [vmem:[%s638 + $0x120] sm:$0xff]
        %v1467 = vld [vmem:[%s638 + $0x128] sm:$0xff]
        %v1468 = vld [vmem:[%s638 + $0x138] sm:$0xff]
        %v1469 = vld [vmem:[%s638 + $0x140] sm:$0xff]
        %v1470 = vld [vmem:[%s638 + $0x150] sm:$0xff]
        %v1471 = vld [vmem:[%s638 + $0x158] sm:$0xff]
        %v1472 = vld [vmem:[%s638 + $0x168] sm:$0xff]
        %v1473 = vld [vmem:[%s638 + $0x170] sm:$0xff]
        %s1474 = scalar_lea.vmem %s2, 12
        %v1475 = vld [vmem:[%s1474] sm:$0xf]
        %v1477 = vsel %vm639, %v1442, 0
        %v1480 = vsel %vm639, %v1443, 0
        %v1483 = vsel %vm639, %v1444, 0
        %v1486 = vsel %vm639, %v1445, 0
        %v1489 = vsel %vm639, %v1446, 0
        %v1492 = vsel %vm639, %v1447, 0
        %v1495 = vsel %vm639, %v1448, 0
        %v1498 = vsel %vm639, %v1449, 0
        %v1501 = vsel %vm639, %v1450, 0
        %v1504 = vsel %vm639, %v1451, 0
        %v1507 = vsel %vm639, %v1452, 0
        %v1510 = vsel %vm639, %v1453, 0
        %v1513 = vsel %vm639, %v1454, 0
        %v1516 = vsel %vm639, %v1455, 0
        %v1519 = vsel %vm639, %v1456, 0
        %v1522 = vsel %vm639, %v1457, 0
        %v1525 = vsel %vm639, %v1458, 0
        %v1528 = vsel %vm639, %v1459, 0
        %v1531 = vsel %vm639, %v1460, 0
        %v1534 = vsel %vm639, %v1461, 0
        %v1537 = vsel %vm639, %v1462, 0
        %v1540 = vsel %vm639, %v1463, 0
        %v1543 = vsel %vm639, %v1464, 0
        %v1546 = vsel %vm639, %v1465, 0
        %v1549 = vsel %vm639, %v1466, 0
        %v1552 = vsel %vm639, %v1467, 0
        %v1555 = vsel %vm639, %v1468, 0
        %v1558 = vsel %vm639, %v1469, 0
        %v1561 = vsel %vm639, %v1470, 0
        %v1564 = vsel %vm639, %v1471, 0
        %v1567 = vsel %vm639, %v1472, 0
        %v1570 = vsel %vm639, %v1473, 0
        %v1573 = vsel %vm835, %v1475, 0
        %1575 = vmatpush.msra.mxu0 0.0
        %1576 = vmatpush.msra.mxu0 0.0
        %1577 = vmatpush.msra.mxu0 0.0
        %1578 = vmatpush.msra.mxu0 0.0
        %1579 = vmatpush.msra.mxu0 0.0
        %1580 = vmatpush.msra.mxu0 0.0
        %1581 = vmatpush.msra.mxu0 0.0
        %1582 = vmatpush.msra.mxu0 0.0
        %1583 = vmatpush.msra.mxu0 0.0
        %1584 = vmatpush.msra.mxu0 0.0
        %1585 = vmatpush.msra.mxu0 0.0
        %1586 = vmatpush.msra.mxu0 0.0
        %1587 = vmatpush.msra.mxu0 0.0
        %1588 = vmatpush.msra.mxu0 0.0
        %1589 = vmatpush.msra.mxu0 0.0
        %1590 = vmatpush.msra.mxu0 %v1573
        %1591 = vmatmul.f32.gmra.mxu0 %v1477
        %v1592 = vpop.f32.mrf.mxu0
        %v1593 = vadd.f32 0.0, %v1592
        %1594 = vmatmul.f32.gmra.mxu0 %v1480
        %v1595 = vpop.f32.mrf.mxu0
        %v1596 = vadd.f32 0.0, %v1595
        %1597 = vmatmul.f32.gmra.mxu0 %v1483
        %v1598 = vpop.f32.mrf.mxu0
        %v1599 = vadd.f32 0.0, %v1598
        %1600 = vmatmul.f32.gmra.mxu0 %v1486
        %v1601 = vpop.f32.mrf.mxu0
        %v1602 = vadd.f32 0.0, %v1601
        %1603 = vmatmul.f32.gmra.mxu0 %v1489
        %v1604 = vpop.f32.mrf.mxu0
        %v1605 = vadd.f32 0.0, %v1604
        %1606 = vmatmul.f32.gmra.mxu0 %v1492
        %v1607 = vpop.f32.mrf.mxu0
        %v1608 = vadd.f32 0.0, %v1607
        %1609 = vmatmul.f32.gmra.mxu0 %v1495
        %v1610 = vpop.f32.mrf.mxu0
        %v1611 = vadd.f32 0.0, %v1610
        %1612 = vmatmul.f32.gmra.mxu0 %v1498
        %v1613 = vpop.f32.mrf.mxu0
        %v1614 = vadd.f32 0.0, %v1613
        %1615 = vmatmul.f32.gmra.mxu0 %v1501
        %v1616 = vpop.f32.mrf.mxu0
        %v1617 = vadd.f32 0.0, %v1616
        %1618 = vmatmul.f32.gmra.mxu0 %v1504
        %v1619 = vpop.f32.mrf.mxu0
        %v1620 = vadd.f32 0.0, %v1619
        %1621 = vmatmul.f32.gmra.mxu0 %v1507
        %v1622 = vpop.f32.mrf.mxu0
        %v1623 = vadd.f32 0.0, %v1622
        %1624 = vmatmul.f32.gmra.mxu0 %v1510
        %v1625 = vpop.f32.mrf.mxu0
        %v1626 = vadd.f32 0.0, %v1625
        %1627 = vmatmul.f32.gmra.mxu0 %v1513
        %v1628 = vpop.f32.mrf.mxu0
        %v1629 = vadd.f32 0.0, %v1628
        %1630 = vmatmul.f32.gmra.mxu0 %v1516
        %v1631 = vpop.f32.mrf.mxu0
        %v1632 = vadd.f32 0.0, %v1631
        %1633 = vmatmul.f32.gmra.mxu0 %v1519
        %v1634 = vpop.f32.mrf.mxu0
        %v1635 = vadd.f32 0.0, %v1634
        %1636 = vmatmul.f32.gmra.mxu0 %v1522
        %v1637 = vpop.f32.mrf.mxu0
        %v1638 = vadd.f32 0.0, %v1637
        %1639 = vmatmul.f32.gmra.mxu0 %v1525
        %v1640 = vpop.f32.mrf.mxu0
        %v1641 = vadd.f32 0.0, %v1640
        %1642 = vmatmul.f32.gmra.mxu0 %v1528
        %v1643 = vpop.f32.mrf.mxu0
        %v1644 = vadd.f32 0.0, %v1643
        %1645 = vmatmul.f32.gmra.mxu0 %v1531
        %v1646 = vpop.f32.mrf.mxu0
        %v1647 = vadd.f32 0.0, %v1646
        %1648 = vmatmul.f32.gmra.mxu0 %v1534
        %v1649 = vpop.f32.mrf.mxu0
        %v1650 = vadd.f32 0.0, %v1649
        %1651 = vmatmul.f32.gmra.mxu0 %v1537
        %v1652 = vpop.f32.mrf.mxu0
        %v1653 = vadd.f32 0.0, %v1652
        %1654 = vmatmul.f32.gmra.mxu0 %v1540
        %v1655 = vpop.f32.mrf.mxu0
        %v1656 = vadd.f32 0.0, %v1655
        %1657 = vmatmul.f32.gmra.mxu0 %v1543
        %v1658 = vpop.f32.mrf.mxu0
        %v1659 = vadd.f32 0.0, %v1658
        %1660 = vmatmul.f32.gmra.mxu0 %v1546
        %v1661 = vpop.f32.mrf.mxu0
        %v1662 = vadd.f32 0.0, %v1661
        %1663 = vmatmul.f32.gmra.mxu0 %v1549
        %v1664 = vpop.f32.mrf.mxu0
        %v1665 = vadd.f32 0.0, %v1664
        %1666 = vmatmul.f32.gmra.mxu0 %v1552
        %v1667 = vpop.f32.mrf.mxu0
        %v1668 = vadd.f32 0.0, %v1667
        %1669 = vmatmul.f32.gmra.mxu0 %v1555
        %v1670 = vpop.f32.mrf.mxu0
        %v1671 = vadd.f32 0.0, %v1670
        %1672 = vmatmul.f32.gmra.mxu0 %v1558
        %v1673 = vpop.f32.mrf.mxu0
        %v1674 = vadd.f32 0.0, %v1673
        %1675 = vmatmul.f32.gmra.mxu0 %v1561
        %v1676 = vpop.f32.mrf.mxu0
        %v1677 = vadd.f32 0.0, %v1676
        %1678 = vmatmul.f32.gmra.mxu0 %v1564
        %v1679 = vpop.f32.mrf.mxu0
        %v1680 = vadd.f32 0.0, %v1679
        %1681 = vmatmul.f32.gmra.mxu0 %v1567
        %v1682 = vpop.f32.mrf.mxu0
        %v1683 = vadd.f32 0.0, %v1682
        %1684 = vmatmul.f32.gmra.mxu0 %v1570
        %v1685 = vpop.f32.mrf.mxu0
        %v1686 = vadd.f32 0.0, %v1685
        %1687 = vdwg.mxu0
        %v1688 = vadd.f32 %v1410, %v1593
        %v1689 = vadd.f32 %v1411, %v1596
        %v1690 = vadd.f32 %v1412, %v1599
        %v1691 = vadd.f32 %v1413, %v1602
        %v1692 = vadd.f32 %v1414, %v1605
        %v1693 = vadd.f32 %v1415, %v1608
        %v1694 = vadd.f32 %v1416, %v1611
        %v1695 = vadd.f32 %v1417, %v1614
        %v1696 = vadd.f32 %v1418, %v1617
        %v1697 = vadd.f32 %v1419, %v1620
        %v1698 = vadd.f32 %v1420, %v1623
        %v1699 = vadd.f32 %v1421, %v1626
        %v1700 = vadd.f32 %v1422, %v1629
        %v1701 = vadd.f32 %v1423, %v1632
        %v1702 = vadd.f32 %v1424, %v1635
        %v1703 = vadd.f32 %v1425, %v1638
        %v1704 = vadd.f32 %v1426, %v1641
        %v1705 = vadd.f32 %v1427, %v1644
        %v1706 = vadd.f32 %v1428, %v1647
        %v1707 = vadd.f32 %v1429, %v1650
        %v1708 = vadd.f32 %v1430, %v1653
        %v1709 = vadd.f32 %v1431, %v1656
        %v1710 = vadd.f32 %v1432, %v1659
        %v1711 = vadd.f32 %v1433, %v1662
        %v1712 = vadd.f32 %v1434, %v1665
        %v1713 = vadd.f32 %v1435, %v1668
        %v1714 = vadd.f32 %v1436, %v1671
        %v1715 = vadd.f32 %v1437, %v1674
        %v1716 = vadd.f32 %v1438, %v1677
        %v1717 = vadd.f32 %v1439, %v1680
        %v1718 = vadd.f32 %v1440, %v1683
        %v1719 = vadd.f32 %v1441, %v1686
        %v1720 = vld [vmem:[%s638 + $0x1] sm:$0xff]
        %v1721 = vld [vmem:[%s638 + $0x9] sm:$0xff]
        %v1722 = vld [vmem:[%s638 + $0x19] sm:$0xff]
        %v1723 = vld [vmem:[%s638 + $0x21] sm:$0xff]
        %v1724 = vld [vmem:[%s638 + $0x31] sm:$0xff]
        %v1725 = vld [vmem:[%s638 + $0x39] sm:$0xff]
        %v1726 = vld [vmem:[%s638 + $0x49] sm:$0xff]
        %v1727 = vld [vmem:[%s638 + $0x51] sm:$0xff]
        %v1728 = vld [vmem:[%s638 + $0x61] sm:$0xff]
        %v1729 = vld [vmem:[%s638 + $0x69] sm:$0xff]
        %v1730 = vld [vmem:[%s638 + $0x79] sm:$0xff]
        %v1731 = vld [vmem:[%s638 + $0x81] sm:$0xff]
        %v1732 = vld [vmem:[%s638 + $0x91] sm:$0xff]
        %v1733 = vld [vmem:[%s638 + $0x99] sm:$0xff]
        %v1734 = vld [vmem:[%s638 + $0xa9] sm:$0xff]
        %v1735 = vld [vmem:[%s638 + $0xb1] sm:$0xff]
        %v1736 = vld [vmem:[%s638 + $0xc1] sm:$0xff]
        %v1737 = vld [vmem:[%s638 + $0xc9] sm:$0xff]
        %v1738 = vld [vmem:[%s638 + $0xd9] sm:$0xff]
        %v1739 = vld [vmem:[%s638 + $0xe1] sm:$0xff]
        %v1740 = vld [vmem:[%s638 + $0xf1] sm:$0xff]
        %v1741 = vld [vmem:[%s638 + $0xf9] sm:$0xff]
        %v1742 = vld [vmem:[%s638 + $0x109] sm:$0xff]
        %v1743 = vld [vmem:[%s638 + $0x111] sm:$0xff]
        %v1744 = vld [vmem:[%s638 + $0x121] sm:$0xff]
        %v1745 = vld [vmem:[%s638 + $0x129] sm:$0xff]
        %v1746 = vld [vmem:[%s638 + $0x139] sm:$0xff]
        %v1747 = vld [vmem:[%s638 + $0x141] sm:$0xff]
        %v1748 = vld [vmem:[%s638 + $0x151] sm:$0xff]
        %v1749 = vld [vmem:[%s638 + $0x159] sm:$0xff]
        %v1750 = vld [vmem:[%s638 + $0x169] sm:$0xff]
        %v1751 = vld [vmem:[%s638 + $0x171] sm:$0xff]
        %s1752 = scalar_lea.vmem %s2, 16
        %v1753 = vld [vmem:[%s1752] sm:$0xf]
        %v1755 = vsel %vm639, %v1720, 0
        %v1758 = vsel %vm639, %v1721, 0
        %v1761 = vsel %vm639, %v1722, 0
        %v1764 = vsel %vm639, %v1723, 0
        %v1767 = vsel %vm639, %v1724, 0
        %v1770 = vsel %vm639, %v1725, 0
        %v1773 = vsel %vm639, %v1726, 0
        %v1776 = vsel %vm639, %v1727, 0
        %v1779 = vsel %vm639, %v1728, 0
        %v1782 = vsel %vm639, %v1729, 0
        %v1785 = vsel %vm639, %v1730, 0
        %v1788 = vsel %vm639, %v1731, 0
        %v1791 = vsel %vm639, %v1732, 0
        %v1794 = vsel %vm639, %v1733, 0
        %v1797 = vsel %vm639, %v1734, 0
        %v1800 = vsel %vm639, %v1735, 0
        %v1803 = vsel %vm639, %v1736, 0
        %v1806 = vsel %vm639, %v1737, 0
        %v1809 = vsel %vm639, %v1738, 0
        %v1812 = vsel %vm639, %v1739, 0
        %v1815 = vsel %vm639, %v1740, 0
        %v1818 = vsel %vm639, %v1741, 0
        %v1821 = vsel %vm639, %v1742, 0
        %v1824 = vsel %vm639, %v1743, 0
        %v1827 = vsel %vm639, %v1744, 0
        %v1830 = vsel %vm639, %v1745, 0
        %v1833 = vsel %vm639, %v1746, 0
        %v1836 = vsel %vm639, %v1747, 0
        %v1839 = vsel %vm639, %v1748, 0
        %v1842 = vsel %vm639, %v1749, 0
        %v1845 = vsel %vm639, %v1750, 0
        %v1848 = vsel %vm639, %v1751, 0
        %v1851 = vsel %vm835, %v1753, 0
        %1853 = vmatpush.msra.mxu0 0.0
        %1854 = vmatpush.msra.mxu0 0.0
        %1855 = vmatpush.msra.mxu0 0.0
        %1856 = vmatpush.msra.mxu0 0.0
        %1857 = vmatpush.msra.mxu0 0.0
        %1858 = vmatpush.msra.mxu0 0.0
        %1859 = vmatpush.msra.mxu0 0.0
        %1860 = vmatpush.msra.mxu0 0.0
        %1861 = vmatpush.msra.mxu0 0.0
        %1862 = vmatpush.msra.mxu0 0.0
        %1863 = vmatpush.msra.mxu0 0.0
        %1864 = vmatpush.msra.mxu0 0.0
        %1865 = vmatpush.msra.mxu0 0.0
        %1866 = vmatpush.msra.mxu0 0.0
        %1867 = vmatpush.msra.mxu0 0.0
        %1868 = vmatpush.msra.mxu0 %v1851
        %1869 = vmatmul.f32.gmra.mxu0 %v1755
        %v1870 = vpop.f32.mrf.mxu0
        %v1871 = vadd.f32 0.0, %v1870
        %1872 = vmatmul.f32.gmra.mxu0 %v1758
        %v1873 = vpop.f32.mrf.mxu0
        %v1874 = vadd.f32 0.0, %v1873
        %1875 = vmatmul.f32.gmra.mxu0 %v1761
        %v1876 = vpop.f32.mrf.mxu0
        %v1877 = vadd.f32 0.0, %v1876
        %1878 = vmatmul.f32.gmra.mxu0 %v1764
        %v1879 = vpop.f32.mrf.mxu0
        %v1880 = vadd.f32 0.0, %v1879
        %1881 = vmatmul.f32.gmra.mxu0 %v1767
        %v1882 = vpop.f32.mrf.mxu0
        %v1883 = vadd.f32 0.0, %v1882
        %1884 = vmatmul.f32.gmra.mxu0 %v1770
        %v1885 = vpop.f32.mrf.mxu0
        %v1886 = vadd.f32 0.0, %v1885
        %1887 = vmatmul.f32.gmra.mxu0 %v1773
        %v1888 = vpop.f32.mrf.mxu0
        %v1889 = vadd.f32 0.0, %v1888
        %1890 = vmatmul.f32.gmra.mxu0 %v1776
        %v1891 = vpop.f32.mrf.mxu0
        %v1892 = vadd.f32 0.0, %v1891
        %1893 = vmatmul.f32.gmra.mxu0 %v1779
        %v1894 = vpop.f32.mrf.mxu0
        %v1895 = vadd.f32 0.0, %v1894
        %1896 = vmatmul.f32.gmra.mxu0 %v1782
        %v1897 = vpop.f32.mrf.mxu0
        %v1898 = vadd.f32 0.0, %v1897
        %1899 = vmatmul.f32.gmra.mxu0 %v1785
        %v1900 = vpop.f32.mrf.mxu0
        %v1901 = vadd.f32 0.0, %v1900
        %1902 = vmatmul.f32.gmra.mxu0 %v1788
        %v1903 = vpop.f32.mrf.mxu0
        %v1904 = vadd.f32 0.0, %v1903
        %1905 = vmatmul.f32.gmra.mxu0 %v1791
        %v1906 = vpop.f32.mrf.mxu0
        %v1907 = vadd.f32 0.0, %v1906
        %1908 = vmatmul.f32.gmra.mxu0 %v1794
        %v1909 = vpop.f32.mrf.mxu0
        %v1910 = vadd.f32 0.0, %v1909
        %1911 = vmatmul.f32.gmra.mxu0 %v1797
        %v1912 = vpop.f32.mrf.mxu0
        %v1913 = vadd.f32 0.0, %v1912
        %1914 = vmatmul.f32.gmra.mxu0 %v1800
        %v1915 = vpop.f32.mrf.mxu0
        %v1916 = vadd.f32 0.0, %v1915
        %1917 = vmatmul.f32.gmra.mxu0 %v1803
        %v1918 = vpop.f32.mrf.mxu0
        %v1919 = vadd.f32 0.0, %v1918
        %1920 = vmatmul.f32.gmra.mxu0 %v1806
        %v1921 = vpop.f32.mrf.mxu0
        %v1922 = vadd.f32 0.0, %v1921
        %1923 = vmatmul.f32.gmra.mxu0 %v1809
        %v1924 = vpop.f32.mrf.mxu0
        %v1925 = vadd.f32 0.0, %v1924
        %1926 = vmatmul.f32.gmra.mxu0 %v1812
        %v1927 = vpop.f32.mrf.mxu0
        %v1928 = vadd.f32 0.0, %v1927
        %1929 = vmatmul.f32.gmra.mxu0 %v1815
        %v1930 = vpop.f32.mrf.mxu0
        %v1931 = vadd.f32 0.0, %v1930
        %1932 = vmatmul.f32.gmra.mxu0 %v1818
        %v1933 = vpop.f32.mrf.mxu0
        %v1934 = vadd.f32 0.0, %v1933
        %1935 = vmatmul.f32.gmra.mxu0 %v1821
        %v1936 = vpop.f32.mrf.mxu0
        %v1937 = vadd.f32 0.0, %v1936
        %1938 = vmatmul.f32.gmra.mxu0 %v1824
        %v1939 = vpop.f32.mrf.mxu0
        %v1940 = vadd.f32 0.0, %v1939
        %1941 = vmatmul.f32.gmra.mxu0 %v1827
        %v1942 = vpop.f32.mrf.mxu0
        %v1943 = vadd.f32 0.0, %v1942
        %1944 = vmatmul.f32.gmra.mxu0 %v1830
        %v1945 = vpop.f32.mrf.mxu0
        %v1946 = vadd.f32 0.0, %v1945
        %1947 = vmatmul.f32.gmra.mxu0 %v1833
        %v1948 = vpop.f32.mrf.mxu0
        %v1949 = vadd.f32 0.0, %v1948
        %1950 = vmatmul.f32.gmra.mxu0 %v1836
        %v1951 = vpop.f32.mrf.mxu0
        %v1952 = vadd.f32 0.0, %v1951
        %1953 = vmatmul.f32.gmra.mxu0 %v1839
        %v1954 = vpop.f32.mrf.mxu0
        %v1955 = vadd.f32 0.0, %v1954
        %1956 = vmatmul.f32.gmra.mxu0 %v1842
        %v1957 = vpop.f32.mrf.mxu0
        %v1958 = vadd.f32 0.0, %v1957
        %1959 = vmatmul.f32.gmra.mxu0 %v1845
        %v1960 = vpop.f32.mrf.mxu0
        %v1961 = vadd.f32 0.0, %v1960
        %1962 = vmatmul.f32.gmra.mxu0 %v1848
        %v1963 = vpop.f32.mrf.mxu0
        %v1964 = vadd.f32 0.0, %v1963
        %1965 = vdwg.mxu0
        %v1966 = vadd.f32 %v1688, %v1871
        %v1967 = vadd.f32 %v1689, %v1874
        %v1968 = vadd.f32 %v1690, %v1877
        %v1969 = vadd.f32 %v1691, %v1880
        %v1970 = vadd.f32 %v1692, %v1883
        %v1971 = vadd.f32 %v1693, %v1886
        %v1972 = vadd.f32 %v1694, %v1889
        %v1973 = vadd.f32 %v1695, %v1892
        %v1974 = vadd.f32 %v1696, %v1895
        %v1975 = vadd.f32 %v1697, %v1898
        %v1976 = vadd.f32 %v1698, %v1901
        %v1977 = vadd.f32 %v1699, %v1904
        %v1978 = vadd.f32 %v1700, %v1907
        %v1979 = vadd.f32 %v1701, %v1910
        %v1980 = vadd.f32 %v1702, %v1913
        %v1981 = vadd.f32 %v1703, %v1916
        %v1982 = vadd.f32 %v1704, %v1919
        %v1983 = vadd.f32 %v1705, %v1922
        %v1984 = vadd.f32 %v1706, %v1925
        %v1985 = vadd.f32 %v1707, %v1928
        %v1986 = vadd.f32 %v1708, %v1931
        %v1987 = vadd.f32 %v1709, %v1934
        %v1988 = vadd.f32 %v1710, %v1937
        %v1989 = vadd.f32 %v1711, %v1940
        %v1990 = vadd.f32 %v1712, %v1943
        %v1991 = vadd.f32 %v1713, %v1946
        %v1992 = vadd.f32 %v1714, %v1949
        %v1993 = vadd.f32 %v1715, %v1952
        %v1994 = vadd.f32 %v1716, %v1955
        %v1995 = vadd.f32 %v1717, %v1958
        %v1996 = vadd.f32 %v1718, %v1961
        %v1997 = vadd.f32 %v1719, %v1964
        %v1998 = vld [vmem:[%s638 + $0x2] sm:$0xff]
        %v1999 = vld [vmem:[%s638 + $0xa] sm:$0xff]
        %v2000 = vld [vmem:[%s638 + $0x1a] sm:$0xff]
        %v2001 = vld [vmem:[%s638 + $0x22] sm:$0xff]
        %v2002 = vld [vmem:[%s638 + $0x32] sm:$0xff]
        %v2003 = vld [vmem:[%s638 + $0x3a] sm:$0xff]
        %v2004 = vld [vmem:[%s638 + $0x4a] sm:$0xff]
        %v2005 = vld [vmem:[%s638 + $0x52] sm:$0xff]
        %v2006 = vld [vmem:[%s638 + $0x62] sm:$0xff]
        %v2007 = vld [vmem:[%s638 + $0x6a] sm:$0xff]
        %v2008 = vld [vmem:[%s638 + $0x7a] sm:$0xff]
        %v2009 = vld [vmem:[%s638 + $0x82] sm:$0xff]
        %v2010 = vld [vmem:[%s638 + $0x92] sm:$0xff]
        %v2011 = vld [vmem:[%s638 + $0x9a] sm:$0xff]
        %v2012 = vld [vmem:[%s638 + $0xaa] sm:$0xff]
        %v2013 = vld [vmem:[%s638 + $0xb2] sm:$0xff]
        %v2014 = vld [vmem:[%s638 + $0xc2] sm:$0xff]
        %v2015 = vld [vmem:[%s638 + $0xca] sm:$0xff]
        %v2016 = vld [vmem:[%s638 + $0xda] sm:$0xff]
        %v2017 = vld [vmem:[%s638 + $0xe2] sm:$0xff]
        %v2018 = vld [vmem:[%s638 + $0xf2] sm:$0xff]
        %v2019 = vld [vmem:[%s638 + $0xfa] sm:$0xff]
        %v2020 = vld [vmem:[%s638 + $0x10a] sm:$0xff]
        %v2021 = vld [vmem:[%s638 + $0x112] sm:$0xff]
        %v2022 = vld [vmem:[%s638 + $0x122] sm:$0xff]
        %v2023 = vld [vmem:[%s638 + $0x12a] sm:$0xff]
        %v2024 = vld [vmem:[%s638 + $0x13a] sm:$0xff]
        %v2025 = vld [vmem:[%s638 + $0x142] sm:$0xff]
        %v2026 = vld [vmem:[%s638 + $0x152] sm:$0xff]
        %v2027 = vld [vmem:[%s638 + $0x15a] sm:$0xff]
        %v2028 = vld [vmem:[%s638 + $0x16a] sm:$0xff]
        %v2029 = vld [vmem:[%s638 + $0x172] sm:$0xff]
        %s2030 = scalar_lea.vmem %s2, 20
        %v2031 = vld [vmem:[%s2030] sm:$0xf]
        %v2033 = vsel %vm639, %v1998, 0
        %v2036 = vsel %vm639, %v1999, 0
        %v2039 = vsel %vm639, %v2000, 0
        %v2042 = vsel %vm639, %v2001, 0
        %v2045 = vsel %vm639, %v2002, 0
        %v2048 = vsel %vm639, %v2003, 0
        %v2051 = vsel %vm639, %v2004, 0
        %v2054 = vsel %vm639, %v2005, 0
        %v2057 = vsel %vm639, %v2006, 0
        %v2060 = vsel %vm639, %v2007, 0
        %v2063 = vsel %vm639, %v2008, 0
        %v2066 = vsel %vm639, %v2009, 0
        %v2069 = vsel %vm639, %v2010, 0
        %v2072 = vsel %vm639, %v2011, 0
        %v2075 = vsel %vm639, %v2012, 0
        %v2078 = vsel %vm639, %v2013, 0
        %v2081 = vsel %vm639, %v2014, 0
        %v2084 = vsel %vm639, %v2015, 0
        %v2087 = vsel %vm639, %v2016, 0
        %v2090 = vsel %vm639, %v2017, 0
        %v2093 = vsel %vm639, %v2018, 0
        %v2096 = vsel %vm639, %v2019, 0
        %v2099 = vsel %vm639, %v2020, 0
        %v2102 = vsel %vm639, %v2021, 0
        %v2105 = vsel %vm639, %v2022, 0
        %v2108 = vsel %vm639, %v2023, 0
        %v2111 = vsel %vm639, %v2024, 0
        %v2114 = vsel %vm639, %v2025, 0
        %v2117 = vsel %vm639, %v2026, 0
        %v2120 = vsel %vm639, %v2027, 0
        %v2123 = vsel %vm639, %v2028, 0
        %v2126 = vsel %vm639, %v2029, 0
        %v2129 = vsel %vm835, %v2031, 0
        %2131 = vmatpush.msra.mxu0 0.0
        %2132 = vmatpush.msra.mxu0 0.0
        %2133 = vmatpush.msra.mxu0 0.0
        %2134 = vmatpush.msra.mxu0 0.0
        %2135 = vmatpush.msra.mxu0 0.0
        %2136 = vmatpush.msra.mxu0 0.0
        %2137 = vmatpush.msra.mxu0 0.0
        %2138 = vmatpush.msra.mxu0 0.0
        %2139 = vmatpush.msra.mxu0 0.0
        %2140 = vmatpush.msra.mxu0 0.0
        %2141 = vmatpush.msra.mxu0 0.0
        %2142 = vmatpush.msra.mxu0 0.0
        %2143 = vmatpush.msra.mxu0 0.0
        %2144 = vmatpush.msra.mxu0 0.0
        %2145 = vmatpush.msra.mxu0 0.0
        %2146 = vmatpush.msra.mxu0 %v2129
        %2147 = vmatmul.f32.gmra.mxu0 %v2033
        %v2148 = vpop.f32.mrf.mxu0
        %v2149 = vadd.f32 0.0, %v2148
        %2150 = vmatmul.f32.gmra.mxu0 %v2036
        %v2151 = vpop.f32.mrf.mxu0
        %v2152 = vadd.f32 0.0, %v2151
        %2153 = vmatmul.f32.gmra.mxu0 %v2039
        %v2154 = vpop.f32.mrf.mxu0
        %v2155 = vadd.f32 0.0, %v2154
        %2156 = vmatmul.f32.gmra.mxu0 %v2042
        %v2157 = vpop.f32.mrf.mxu0
        %v2158 = vadd.f32 0.0, %v2157
        %2159 = vmatmul.f32.gmra.mxu0 %v2045
        %v2160 = vpop.f32.mrf.mxu0
        %v2161 = vadd.f32 0.0, %v2160
        %2162 = vmatmul.f32.gmra.mxu0 %v2048
        %v2163 = vpop.f32.mrf.mxu0
        %v2164 = vadd.f32 0.0, %v2163
        %2165 = vmatmul.f32.gmra.mxu0 %v2051
        %v2166 = vpop.f32.mrf.mxu0
        %v2167 = vadd.f32 0.0, %v2166
        %2168 = vmatmul.f32.gmra.mxu0 %v2054
        %v2169 = vpop.f32.mrf.mxu0
        %v2170 = vadd.f32 0.0, %v2169
        %2171 = vmatmul.f32.gmra.mxu0 %v2057
        %v2172 = vpop.f32.mrf.mxu0
        %v2173 = vadd.f32 0.0, %v2172
        %2174 = vmatmul.f32.gmra.mxu0 %v2060
        %v2175 = vpop.f32.mrf.mxu0
        %v2176 = vadd.f32 0.0, %v2175
        %2177 = vmatmul.f32.gmra.mxu0 %v2063
        %v2178 = vpop.f32.mrf.mxu0
        %v2179 = vadd.f32 0.0, %v2178
        %2180 = vmatmul.f32.gmra.mxu0 %v2066
        %v2181 = vpop.f32.mrf.mxu0
        %v2182 = vadd.f32 0.0, %v2181
        %2183 = vmatmul.f32.gmra.mxu0 %v2069
        %v2184 = vpop.f32.mrf.mxu0
        %v2185 = vadd.f32 0.0, %v2184
        %2186 = vmatmul.f32.gmra.mxu0 %v2072
        %v2187 = vpop.f32.mrf.mxu0
        %v2188 = vadd.f32 0.0, %v2187
        %2189 = vmatmul.f32.gmra.mxu0 %v2075
        %v2190 = vpop.f32.mrf.mxu0
        %v2191 = vadd.f32 0.0, %v2190
        %2192 = vmatmul.f32.gmra.mxu0 %v2078
        %v2193 = vpop.f32.mrf.mxu0
        %v2194 = vadd.f32 0.0, %v2193
        %2195 = vmatmul.f32.gmra.mxu0 %v2081
        %v2196 = vpop.f32.mrf.mxu0
        %v2197 = vadd.f32 0.0, %v2196
        %2198 = vmatmul.f32.gmra.mxu0 %v2084
        %v2199 = vpop.f32.mrf.mxu0
        %v2200 = vadd.f32 0.0, %v2199
        %2201 = vmatmul.f32.gmra.mxu0 %v2087
        %v2202 = vpop.f32.mrf.mxu0
        %v2203 = vadd.f32 0.0, %v2202
        %2204 = vmatmul.f32.gmra.mxu0 %v2090
        %v2205 = vpop.f32.mrf.mxu0
        %v2206 = vadd.f32 0.0, %v2205
        %2207 = vmatmul.f32.gmra.mxu0 %v2093
        %v2208 = vpop.f32.mrf.mxu0
        %v2209 = vadd.f32 0.0, %v2208
        %2210 = vmatmul.f32.gmra.mxu0 %v2096
        %v2211 = vpop.f32.mrf.mxu0
        %v2212 = vadd.f32 0.0, %v2211
        %2213 = vmatmul.f32.gmra.mxu0 %v2099
        %v2214 = vpop.f32.mrf.mxu0
        %v2215 = vadd.f32 0.0, %v2214
        %2216 = vmatmul.f32.gmra.mxu0 %v2102
        %v2217 = vpop.f32.mrf.mxu0
        %v2218 = vadd.f32 0.0, %v2217
        %2219 = vmatmul.f32.gmra.mxu0 %v2105
        %v2220 = vpop.f32.mrf.mxu0
        %v2221 = vadd.f32 0.0, %v2220
        %2222 = vmatmul.f32.gmra.mxu0 %v2108
        %v2223 = vpop.f32.mrf.mxu0
        %v2224 = vadd.f32 0.0, %v2223
        %2225 = vmatmul.f32.gmra.mxu0 %v2111
        %v2226 = vpop.f32.mrf.mxu0
        %v2227 = vadd.f32 0.0, %v2226
        %2228 = vmatmul.f32.gmra.mxu0 %v2114
        %v2229 = vpop.f32.mrf.mxu0
        %v2230 = vadd.f32 0.0, %v2229
        %2231 = vmatmul.f32.gmra.mxu0 %v2117
        %v2232 = vpop.f32.mrf.mxu0
        %v2233 = vadd.f32 0.0, %v2232
        %2234 = vmatmul.f32.gmra.mxu0 %v2120
        %v2235 = vpop.f32.mrf.mxu0
        %v2236 = vadd.f32 0.0, %v2235
        %2237 = vmatmul.f32.gmra.mxu0 %v2123
        %v2238 = vpop.f32.mrf.mxu0
        %v2239 = vadd.f32 0.0, %v2238
        %2240 = vmatmul.f32.gmra.mxu0 %v2126
        %v2241 = vpop.f32.mrf.mxu0
        %v2242 = vadd.f32 0.0, %v2241
        %2243 = vdwg.mxu0
        %v2244 = vadd.f32 %v1966, %v2149
        %v2245 = vadd.f32 %v1967, %v2152
        %v2246 = vadd.f32 %v1968, %v2155
        %v2247 = vadd.f32 %v1969, %v2158
        %v2248 = vadd.f32 %v1970, %v2161
        %v2249 = vadd.f32 %v1971, %v2164
        %v2250 = vadd.f32 %v1972, %v2167
        %v2251 = vadd.f32 %v1973, %v2170
        %v2252 = vadd.f32 %v1974, %v2173
        %v2253 = vadd.f32 %v1975, %v2176
        %v2254 = vadd.f32 %v1976, %v2179
        %v2255 = vadd.f32 %v1977, %v2182
        %v2256 = vadd.f32 %v1978, %v2185
        %v2257 = vadd.f32 %v1979, %v2188
        %v2258 = vadd.f32 %v1980, %v2191
        %v2259 = vadd.f32 %v1981, %v2194
        %v2260 = vadd.f32 %v1982, %v2197
        %v2261 = vadd.f32 %v1983, %v2200
        %v2262 = vadd.f32 %v1984, %v2203
        %v2263 = vadd.f32 %v1985, %v2206
        %v2264 = vadd.f32 %v1986, %v2209
        %v2265 = vadd.f32 %v1987, %v2212
        %v2266 = vadd.f32 %v1988, %v2215
        %v2267 = vadd.f32 %v1989, %v2218
        %v2268 = vadd.f32 %v1990, %v2221
        %v2269 = vadd.f32 %v1991, %v2224
        %v2270 = vadd.f32 %v1992, %v2227
        %v2271 = vadd.f32 %v1993, %v2230
        %v2272 = vadd.f32 %v1994, %v2233
        %v2273 = vadd.f32 %v1995, %v2236
        %v2274 = vadd.f32 %v1996, %v2239
        %v2275 = vadd.f32 %v1997, %v2242
        %s2276 = scalar_lea.vmem [#allocation2], 48
        %v2277 = vld [vmem:[%s2276] sm:$0xff]
        %v2278 = vld [vmem:[%s2276 + $0x8] sm:$0xff]
        %v2279 = vld [vmem:[%s2276 + $0x18] sm:$0xff]
        %v2280 = vld [vmem:[%s2276 + $0x20] sm:$0xff]
        %v2281 = vld [vmem:[%s2276 + $0x30] sm:$0xff]
        %v2282 = vld [vmem:[%s2276 + $0x38] sm:$0xff]
        %v2283 = vld [vmem:[%s2276 + $0x48] sm:$0xff]
        %v2284 = vld [vmem:[%s2276 + $0x50] sm:$0xff]
        %v2285 = vld [vmem:[%s2276 + $0x60] sm:$0xff]
        %v2286 = vld [vmem:[%s2276 + $0x68] sm:$0xff]
        %v2287 = vld [vmem:[%s2276 + $0x78] sm:$0xff]
        %v2288 = vld [vmem:[%s2276 + $0x80] sm:$0xff]
        %v2289 = vld [vmem:[%s2276 + $0x90] sm:$0xff]
        %v2290 = vld [vmem:[%s2276 + $0x98] sm:$0xff]
        %v2291 = vld [vmem:[%s2276 + $0xa8] sm:$0xff]
        %v2292 = vld [vmem:[%s2276 + $0xb0] sm:$0xff]
        %v2293 = vld [vmem:[%s2276 + $0xc0] sm:$0xff]
        %v2294 = vld [vmem:[%s2276 + $0xc8] sm:$0xff]
        %v2295 = vld [vmem:[%s2276 + $0xd8] sm:$0xff]
        %v2296 = vld [vmem:[%s2276 + $0xe0] sm:$0xff]
        %v2297 = vld [vmem:[%s2276 + $0xf0] sm:$0xff]
        %v2298 = vld [vmem:[%s2276 + $0xf8] sm:$0xff]
        %v2299 = vld [vmem:[%s2276 + $0x108] sm:$0xff]
        %v2300 = vld [vmem:[%s2276 + $0x110] sm:$0xff]
        %v2301 = vld [vmem:[%s2276 + $0x120] sm:$0xff]
        %v2302 = vld [vmem:[%s2276 + $0x128] sm:$0xff]
        %v2303 = vld [vmem:[%s2276 + $0x138] sm:$0xff]
        %v2304 = vld [vmem:[%s2276 + $0x140] sm:$0xff]
        %v2305 = vld [vmem:[%s2276 + $0x150] sm:$0xff]
        %v2306 = vld [vmem:[%s2276 + $0x158] sm:$0xff]
        %v2307 = vld [vmem:[%s2276 + $0x168] sm:$0xff]
        %v2308 = vld [vmem:[%s2276 + $0x170] sm:$0xff]
        %s2309 = scalar_lea.vmem %s2, 24
        %v2310 = vld [vmem:[%s2309] sm:$0xf]
        %v2312 = vsel %vm639, %v2277, 0
        %v2315 = vsel %vm639, %v2278, 0
        %v2318 = vsel %vm639, %v2279, 0
        %v2321 = vsel %vm639, %v2280, 0
        %v2324 = vsel %vm639, %v2281, 0
        %v2327 = vsel %vm639, %v2282, 0
        %v2330 = vsel %vm639, %v2283, 0
        %v2333 = vsel %vm639, %v2284, 0
        %v2336 = vsel %vm639, %v2285, 0
        %v2339 = vsel %vm639, %v2286, 0
        %v2342 = vsel %vm639, %v2287, 0
        %v2345 = vsel %vm639, %v2288, 0
        %v2348 = vsel %vm639, %v2289, 0
        %v2351 = vsel %vm639, %v2290, 0
        %v2354 = vsel %vm639, %v2291, 0
        %v2357 = vsel %vm639, %v2292, 0
        %v2360 = vsel %vm639, %v2293, 0
        %v2363 = vsel %vm639, %v2294, 0
        %v2366 = vsel %vm639, %v2295, 0
        %v2369 = vsel %vm639, %v2296, 0
        %v2372 = vsel %vm639, %v2297, 0
        %v2375 = vsel %vm639, %v2298, 0
        %v2378 = vsel %vm639, %v2299, 0
        %v2381 = vsel %vm639, %v2300, 0
        %v2384 = vsel %vm639, %v2301, 0
        %v2387 = vsel %vm639, %v2302, 0
        %v2390 = vsel %vm639, %v2303, 0
        %v2393 = vsel %vm639, %v2304, 0
        %v2396 = vsel %vm639, %v2305, 0
        %v2399 = vsel %vm639, %v2306, 0
        %v2402 = vsel %vm639, %v2307, 0
        %v2405 = vsel %vm639, %v2308, 0
        %v2408 = vsel %vm835, %v2310, 0
        %2410 = vmatpush.msra.mxu0 0.0
        %2411 = vmatpush.msra.mxu0 0.0
        %2412 = vmatpush.msra.mxu0 0.0
        %2413 = vmatpush.msra.mxu0 0.0
        %2414 = vmatpush.msra.mxu0 0.0
        %2415 = vmatpush.msra.mxu0 0.0
        %2416 = vmatpush.msra.mxu0 0.0
        %2417 = vmatpush.msra.mxu0 0.0
        %2418 = vmatpush.msra.mxu0 0.0
        %2419 = vmatpush.msra.mxu0 0.0
        %2420 = vmatpush.msra.mxu0 0.0
        %2421 = vmatpush.msra.mxu0 0.0
        %2422 = vmatpush.msra.mxu0 0.0
        %2423 = vmatpush.msra.mxu0 0.0
        %2424 = vmatpush.msra.mxu0 0.0
        %2425 = vmatpush.msra.mxu0 %v2408
        %2426 = vmatmul.f32.gmra.mxu0 %v2312
        %v2427 = vpop.f32.mrf.mxu0
        %v2428 = vadd.f32 0.0, %v2427
        %2429 = vmatmul.f32.gmra.mxu0 %v2315
        %v2430 = vpop.f32.mrf.mxu0
        %v2431 = vadd.f32 0.0, %v2430
        %2432 = vmatmul.f32.gmra.mxu0 %v2318
        %v2433 = vpop.f32.mrf.mxu0
        %v2434 = vadd.f32 0.0, %v2433
        %2435 = vmatmul.f32.gmra.mxu0 %v2321
        %v2436 = vpop.f32.mrf.mxu0
        %v2437 = vadd.f32 0.0, %v2436
        %2438 = vmatmul.f32.gmra.mxu0 %v2324
        %v2439 = vpop.f32.mrf.mxu0
        %v2440 = vadd.f32 0.0, %v2439
        %2441 = vmatmul.f32.gmra.mxu0 %v2327
        %v2442 = vpop.f32.mrf.mxu0
        %v2443 = vadd.f32 0.0, %v2442
        %2444 = vmatmul.f32.gmra.mxu0 %v2330
        %v2445 = vpop.f32.mrf.mxu0
        %v2446 = vadd.f32 0.0, %v2445
        %2447 = vmatmul.f32.gmra.mxu0 %v2333
        %v2448 = vpop.f32.mrf.mxu0
        %v2449 = vadd.f32 0.0, %v2448
        %2450 = vmatmul.f32.gmra.mxu0 %v2336
        %v2451 = vpop.f32.mrf.mxu0
        %v2452 = vadd.f32 0.0, %v2451
        %2453 = vmatmul.f32.gmra.mxu0 %v2339
        %v2454 = vpop.f32.mrf.mxu0
        %v2455 = vadd.f32 0.0, %v2454
        %2456 = vmatmul.f32.gmra.mxu0 %v2342
        %v2457 = vpop.f32.mrf.mxu0
        %v2458 = vadd.f32 0.0, %v2457
        %2459 = vmatmul.f32.gmra.mxu0 %v2345
        %v2460 = vpop.f32.mrf.mxu0
        %v2461 = vadd.f32 0.0, %v2460
        %2462 = vmatmul.f32.gmra.mxu0 %v2348
        %v2463 = vpop.f32.mrf.mxu0
        %v2464 = vadd.f32 0.0, %v2463
        %2465 = vmatmul.f32.gmra.mxu0 %v2351
        %v2466 = vpop.f32.mrf.mxu0
        %v2467 = vadd.f32 0.0, %v2466
        %2468 = vmatmul.f32.gmra.mxu0 %v2354
        %v2469 = vpop.f32.mrf.mxu0
        %v2470 = vadd.f32 0.0, %v2469
        %2471 = vmatmul.f32.gmra.mxu0 %v2357
        %v2472 = vpop.f32.mrf.mxu0
        %v2473 = vadd.f32 0.0, %v2472
        %2474 = vmatmul.f32.gmra.mxu0 %v2360
        %v2475 = vpop.f32.mrf.mxu0
        %v2476 = vadd.f32 0.0, %v2475
        %2477 = vmatmul.f32.gmra.mxu0 %v2363
        %v2478 = vpop.f32.mrf.mxu0
        %v2479 = vadd.f32 0.0, %v2478
        %2480 = vmatmul.f32.gmra.mxu0 %v2366
        %v2481 = vpop.f32.mrf.mxu0
        %v2482 = vadd.f32 0.0, %v2481
        %2483 = vmatmul.f32.gmra.mxu0 %v2369
        %v2484 = vpop.f32.mrf.mxu0
        %v2485 = vadd.f32 0.0, %v2484
        %2486 = vmatmul.f32.gmra.mxu0 %v2372
        %v2487 = vpop.f32.mrf.mxu0
        %v2488 = vadd.f32 0.0, %v2487
        %2489 = vmatmul.f32.gmra.mxu0 %v2375
        %v2490 = vpop.f32.mrf.mxu0
        %v2491 = vadd.f32 0.0, %v2490
        %2492 = vmatmul.f32.gmra.mxu0 %v2378
        %v2493 = vpop.f32.mrf.mxu0
        %v2494 = vadd.f32 0.0, %v2493
        %2495 = vmatmul.f32.gmra.mxu0 %v2381
        %v2496 = vpop.f32.mrf.mxu0
        %v2497 = vadd.f32 0.0, %v2496
        %2498 = vmatmul.f32.gmra.mxu0 %v2384
        %v2499 = vpop.f32.mrf.mxu0
        %v2500 = vadd.f32 0.0, %v2499
        %2501 = vmatmul.f32.gmra.mxu0 %v2387
        %v2502 = vpop.f32.mrf.mxu0
        %v2503 = vadd.f32 0.0, %v2502
        %2504 = vmatmul.f32.gmra.mxu0 %v2390
        %v2505 = vpop.f32.mrf.mxu0
        %v2506 = vadd.f32 0.0, %v2505
        %2507 = vmatmul.f32.gmra.mxu0 %v2393
        %v2508 = vpop.f32.mrf.mxu0
        %v2509 = vadd.f32 0.0, %v2508
        %2510 = vmatmul.f32.gmra.mxu0 %v2396
        %v2511 = vpop.f32.mrf.mxu0
        %v2512 = vadd.f32 0.0, %v2511
        %2513 = vmatmul.f32.gmra.mxu0 %v2399
        %v2514 = vpop.f32.mrf.mxu0
        %v2515 = vadd.f32 0.0, %v2514
        %2516 = vmatmul.f32.gmra.mxu0 %v2402
        %v2517 = vpop.f32.mrf.mxu0
        %v2518 = vadd.f32 0.0, %v2517
        %2519 = vmatmul.f32.gmra.mxu0 %v2405
        %v2520 = vpop.f32.mrf.mxu0
        %v2521 = vadd.f32 0.0, %v2520
        %2522 = vdwg.mxu0
        %v2523 = vadd.f32 %v2244, %v2428
        %v2524 = vadd.f32 %v2245, %v2431
        %v2525 = vadd.f32 %v2246, %v2434
        %v2526 = vadd.f32 %v2247, %v2437
        %v2527 = vadd.f32 %v2248, %v2440
        %v2528 = vadd.f32 %v2249, %v2443
        %v2529 = vadd.f32 %v2250, %v2446
        %v2530 = vadd.f32 %v2251, %v2449
        %v2531 = vadd.f32 %v2252, %v2452
        %v2532 = vadd.f32 %v2253, %v2455
        %v2533 = vadd.f32 %v2254, %v2458
        %v2534 = vadd.f32 %v2255, %v2461
        %v2535 = vadd.f32 %v2256, %v2464
        %v2536 = vadd.f32 %v2257, %v2467
        %v2537 = vadd.f32 %v2258, %v2470
        %v2538 = vadd.f32 %v2259, %v2473
        %v2539 = vadd.f32 %v2260, %v2476
        %v2540 = vadd.f32 %v2261, %v2479
        %v2541 = vadd.f32 %v2262, %v2482
        %v2542 = vadd.f32 %v2263, %v2485
        %v2543 = vadd.f32 %v2264, %v2488
        %v2544 = vadd.f32 %v2265, %v2491
        %v2545 = vadd.f32 %v2266, %v2494
        %v2546 = vadd.f32 %v2267, %v2497
        %v2547 = vadd.f32 %v2268, %v2500
        %v2548 = vadd.f32 %v2269, %v2503
        %v2549 = vadd.f32 %v2270, %v2506
        %v2550 = vadd.f32 %v2271, %v2509
        %v2551 = vadd.f32 %v2272, %v2512
        %v2552 = vadd.f32 %v2273, %v2515
        %v2553 = vadd.f32 %v2274, %v2518
        %v2554 = vadd.f32 %v2275, %v2521
        %v2555 = vld [vmem:[%s2276 + $0x1] sm:$0xff]
        %v2556 = vld [vmem:[%s2276 + $0x9] sm:$0xff]
        %v2557 = vld [vmem:[%s2276 + $0x19] sm:$0xff]
        %v2558 = vld [vmem:[%s2276 + $0x21] sm:$0xff]
        %v2559 = vld [vmem:[%s2276 + $0x31] sm:$0xff]
        %v2560 = vld [vmem:[%s2276 + $0x39] sm:$0xff]
        %v2561 = vld [vmem:[%s2276 + $0x49] sm:$0xff]
        %v2562 = vld [vmem:[%s2276 + $0x51] sm:$0xff]
        %v2563 = vld [vmem:[%s2276 + $0x61] sm:$0xff]
        %v2564 = vld [vmem:[%s2276 + $0x69] sm:$0xff]
        %v2565 = vld [vmem:[%s2276 + $0x79] sm:$0xff]
        %v2566 = vld [vmem:[%s2276 + $0x81] sm:$0xff]
        %v2567 = vld [vmem:[%s2276 + $0x91] sm:$0xff]
        %v2568 = vld [vmem:[%s2276 + $0x99] sm:$0xff]
        %v2569 = vld [vmem:[%s2276 + $0xa9] sm:$0xff]
        %v2570 = vld [vmem:[%s2276 + $0xb1] sm:$0xff]
        %v2571 = vld [vmem:[%s2276 + $0xc1] sm:$0xff]
        %v2572 = vld [vmem:[%s2276 + $0xc9] sm:$0xff]
        %v2573 = vld [vmem:[%s2276 + $0xd9] sm:$0xff]
        %v2574 = vld [vmem:[%s2276 + $0xe1] sm:$0xff]
        %v2575 = vld [vmem:[%s2276 + $0xf1] sm:$0xff]
        %v2576 = vld [vmem:[%s2276 + $0xf9] sm:$0xff]
        %v2577 = vld [vmem:[%s2276 + $0x109] sm:$0xff]
        %v2578 = vld [vmem:[%s2276 + $0x111] sm:$0xff]
        %v2579 = vld [vmem:[%s2276 + $0x121] sm:$0xff]
        %v2580 = vld [vmem:[%s2276 + $0x129] sm:$0xff]
        %v2581 = vld [vmem:[%s2276 + $0x139] sm:$0xff]
        %v2582 = vld [vmem:[%s2276 + $0x141] sm:$0xff]
        %v2583 = vld [vmem:[%s2276 + $0x151] sm:$0xff]
        %v2584 = vld [vmem:[%s2276 + $0x159] sm:$0xff]
        %v2585 = vld [vmem:[%s2276 + $0x169] sm:$0xff]
        %v2586 = vld [vmem:[%s2276 + $0x171] sm:$0xff]
        %s2587 = scalar_lea.vmem %s2, 28
        %v2588 = vld [vmem:[%s2587] sm:$0xf]
        %v2590 = vsel %vm639, %v2555, 0
        %v2593 = vsel %vm639, %v2556, 0
        %v2596 = vsel %vm639, %v2557, 0
        %v2599 = vsel %vm639, %v2558, 0
        %v2602 = vsel %vm639, %v2559, 0
        %v2605 = vsel %vm639, %v2560, 0
        %v2608 = vsel %vm639, %v2561, 0
        %v2611 = vsel %vm639, %v2562, 0
        %v2614 = vsel %vm639, %v2563, 0
        %v2617 = vsel %vm639, %v2564, 0
        %v2620 = vsel %vm639, %v2565, 0
        %v2623 = vsel %vm639, %v2566, 0
        %v2626 = vsel %vm639, %v2567, 0
        %v2629 = vsel %vm639, %v2568, 0
        %v2632 = vsel %vm639, %v2569, 0
        %v2635 = vsel %vm639, %v2570, 0
        %v2638 = vsel %vm639, %v2571, 0
        %v2641 = vsel %vm639, %v2572, 0
        %v2644 = vsel %vm639, %v2573, 0
        %v2647 = vsel %vm639, %v2574, 0
        %v2650 = vsel %vm639, %v2575, 0
        %v2653 = vsel %vm639, %v2576, 0
        %v2656 = vsel %vm639, %v2577, 0
        %v2659 = vsel %vm639, %v2578, 0
        %v2662 = vsel %vm639, %v2579, 0
        %v2665 = vsel %vm639, %v2580, 0
        %v2668 = vsel %vm639, %v2581, 0
        %v2671 = vsel %vm639, %v2582, 0
        %v2674 = vsel %vm639, %v2583, 0
        %v2677 = vsel %vm639, %v2584, 0
        %v2680 = vsel %vm639, %v2585, 0
        %v2683 = vsel %vm639, %v2586, 0
        %v2686 = vsel %vm835, %v2588, 0
        %2688 = vmatpush.msra.mxu0 0.0
        %2689 = vmatpush.msra.mxu0 0.0
        %2690 = vmatpush.msra.mxu0 0.0
        %2691 = vmatpush.msra.mxu0 0.0
        %2692 = vmatpush.msra.mxu0 0.0
        %2693 = vmatpush.msra.mxu0 0.0
        %2694 = vmatpush.msra.mxu0 0.0
        %2695 = vmatpush.msra.mxu0 0.0
        %2696 = vmatpush.msra.mxu0 0.0
        %2697 = vmatpush.msra.mxu0 0.0
        %2698 = vmatpush.msra.mxu0 0.0
        %2699 = vmatpush.msra.mxu0 0.0
        %2700 = vmatpush.msra.mxu0 0.0
        %2701 = vmatpush.msra.mxu0 0.0
        %2702 = vmatpush.msra.mxu0 0.0
        %2703 = vmatpush.msra.mxu0 %v2686
        %2704 = vmatmul.f32.gmra.mxu0 %v2590
        %v2705 = vpop.f32.mrf.mxu0
        %v2706 = vadd.f32 0.0, %v2705
        %2707 = vmatmul.f32.gmra.mxu0 %v2593
        %v2708 = vpop.f32.mrf.mxu0
        %v2709 = vadd.f32 0.0, %v2708
        %2710 = vmatmul.f32.gmra.mxu0 %v2596
        %v2711 = vpop.f32.mrf.mxu0
        %v2712 = vadd.f32 0.0, %v2711
        %2713 = vmatmul.f32.gmra.mxu0 %v2599
        %v2714 = vpop.f32.mrf.mxu0
        %v2715 = vadd.f32 0.0, %v2714
        %2716 = vmatmul.f32.gmra.mxu0 %v2602
        %v2717 = vpop.f32.mrf.mxu0
        %v2718 = vadd.f32 0.0, %v2717
        %2719 = vmatmul.f32.gmra.mxu0 %v2605
        %v2720 = vpop.f32.mrf.mxu0
        %v2721 = vadd.f32 0.0, %v2720
        %2722 = vmatmul.f32.gmra.mxu0 %v2608
        %v2723 = vpop.f32.mrf.mxu0
        %v2724 = vadd.f32 0.0, %v2723
        %2725 = vmatmul.f32.gmra.mxu0 %v2611
        %v2726 = vpop.f32.mrf.mxu0
        %v2727 = vadd.f32 0.0, %v2726
        %2728 = vmatmul.f32.gmra.mxu0 %v2614
        %v2729 = vpop.f32.mrf.mxu0
        %v2730 = vadd.f32 0.0, %v2729
        %2731 = vmatmul.f32.gmra.mxu0 %v2617
        %v2732 = vpop.f32.mrf.mxu0
        %v2733 = vadd.f32 0.0, %v2732
        %2734 = vmatmul.f32.gmra.mxu0 %v2620
        %v2735 = vpop.f32.mrf.mxu0
        %v2736 = vadd.f32 0.0, %v2735
        %2737 = vmatmul.f32.gmra.mxu0 %v2623
        %v2738 = vpop.f32.mrf.mxu0
        %v2739 = vadd.f32 0.0, %v2738
        %2740 = vmatmul.f32.gmra.mxu0 %v2626
        %v2741 = vpop.f32.mrf.mxu0
        %v2742 = vadd.f32 0.0, %v2741
        %2743 = vmatmul.f32.gmra.mxu0 %v2629
        %v2744 = vpop.f32.mrf.mxu0
        %v2745 = vadd.f32 0.0, %v2744
        %2746 = vmatmul.f32.gmra.mxu0 %v2632
        %v2747 = vpop.f32.mrf.mxu0
        %v2748 = vadd.f32 0.0, %v2747
        %2749 = vmatmul.f32.gmra.mxu0 %v2635
        %v2750 = vpop.f32.mrf.mxu0
        %v2751 = vadd.f32 0.0, %v2750
        %2752 = vmatmul.f32.gmra.mxu0 %v2638
        %v2753 = vpop.f32.mrf.mxu0
        %v2754 = vadd.f32 0.0, %v2753
        %2755 = vmatmul.f32.gmra.mxu0 %v2641
        %v2756 = vpop.f32.mrf.mxu0
        %v2757 = vadd.f32 0.0, %v2756
        %2758 = vmatmul.f32.gmra.mxu0 %v2644
        %v2759 = vpop.f32.mrf.mxu0
        %v2760 = vadd.f32 0.0, %v2759
        %2761 = vmatmul.f32.gmra.mxu0 %v2647
        %v2762 = vpop.f32.mrf.mxu0
        %v2763 = vadd.f32 0.0, %v2762
        %2764 = vmatmul.f32.gmra.mxu0 %v2650
        %v2765 = vpop.f32.mrf.mxu0
        %v2766 = vadd.f32 0.0, %v2765
        %2767 = vmatmul.f32.gmra.mxu0 %v2653
        %v2768 = vpop.f32.mrf.mxu0
        %v2769 = vadd.f32 0.0, %v2768
        %2770 = vmatmul.f32.gmra.mxu0 %v2656
        %v2771 = vpop.f32.mrf.mxu0
        %v2772 = vadd.f32 0.0, %v2771
        %2773 = vmatmul.f32.gmra.mxu0 %v2659
        %v2774 = vpop.f32.mrf.mxu0
        %v2775 = vadd.f32 0.0, %v2774
        %2776 = vmatmul.f32.gmra.mxu0 %v2662
        %v2777 = vpop.f32.mrf.mxu0
        %v2778 = vadd.f32 0.0, %v2777
        %2779 = vmatmul.f32.gmra.mxu0 %v2665
        %v2780 = vpop.f32.mrf.mxu0
        %v2781 = vadd.f32 0.0, %v2780
        %2782 = vmatmul.f32.gmra.mxu0 %v2668
        %v2783 = vpop.f32.mrf.mxu0
        %v2784 = vadd.f32 0.0, %v2783
        %2785 = vmatmul.f32.gmra.mxu0 %v2671
        %v2786 = vpop.f32.mrf.mxu0
        %v2787 = vadd.f32 0.0, %v2786
        %2788 = vmatmul.f32.gmra.mxu0 %v2674
        %v2789 = vpop.f32.mrf.mxu0
        %v2790 = vadd.f32 0.0, %v2789
        %2791 = vmatmul.f32.gmra.mxu0 %v2677
        %v2792 = vpop.f32.mrf.mxu0
        %v2793 = vadd.f32 0.0, %v2792
        %2794 = vmatmul.f32.gmra.mxu0 %v2680
        %v2795 = vpop.f32.mrf.mxu0
        %v2796 = vadd.f32 0.0, %v2795
        %2797 = vmatmul.f32.gmra.mxu0 %v2683
        %v2798 = vpop.f32.mrf.mxu0
        %v2799 = vadd.f32 0.0, %v2798
        %2800 = vdwg.mxu0
        %v2801 = vadd.f32 %v2523, %v2706
        %v2802 = vadd.f32 %v2524, %v2709
        %v2803 = vadd.f32 %v2525, %v2712
        %v2804 = vadd.f32 %v2526, %v2715
        %v2805 = vadd.f32 %v2527, %v2718
        %v2806 = vadd.f32 %v2528, %v2721
        %v2807 = vadd.f32 %v2529, %v2724
        %v2808 = vadd.f32 %v2530, %v2727
        %v2809 = vadd.f32 %v2531, %v2730
        %v2810 = vadd.f32 %v2532, %v2733
        %v2811 = vadd.f32 %v2533, %v2736
        %v2812 = vadd.f32 %v2534, %v2739
        %v2813 = vadd.f32 %v2535, %v2742
        %v2814 = vadd.f32 %v2536, %v2745
        %v2815 = vadd.f32 %v2537, %v2748
        %v2816 = vadd.f32 %v2538, %v2751
        %v2817 = vadd.f32 %v2539, %v2754
        %v2818 = vadd.f32 %v2540, %v2757
        %v2819 = vadd.f32 %v2541, %v2760
        %v2820 = vadd.f32 %v2542, %v2763
        %v2821 = vadd.f32 %v2543, %v2766
        %v2822 = vadd.f32 %v2544, %v2769
        %v2823 = vadd.f32 %v2545, %v2772
        %v2824 = vadd.f32 %v2546, %v2775
        %v2825 = vadd.f32 %v2547, %v2778
        %v2826 = vadd.f32 %v2548, %v2781
        %v2827 = vadd.f32 %v2549, %v2784
        %v2828 = vadd.f32 %v2550, %v2787
        %v2829 = vadd.f32 %v2551, %v2790
        %v2830 = vadd.f32 %v2552, %v2793
        %v2831 = vadd.f32 %v2553, %v2796
        %v2832 = vadd.f32 %v2554, %v2799
        %v2833 = vld [vmem:[%s2276 + $0x2] sm:$0xff]
        %v2834 = vld [vmem:[%s2276 + $0xa] sm:$0xff]
        %v2835 = vld [vmem:[%s2276 + $0x1a] sm:$0xff]
        %v2836 = vld [vmem:[%s2276 + $0x22] sm:$0xff]
        %v2837 = vld [vmem:[%s2276 + $0x32] sm:$0xff]
        %v2838 = vld [vmem:[%s2276 + $0x3a] sm:$0xff]
        %v2839 = vld [vmem:[%s2276 + $0x4a] sm:$0xff]
        %v2840 = vld [vmem:[%s2276 + $0x52] sm:$0xff]
        %v2841 = vld [vmem:[%s2276 + $0x62] sm:$0xff]
        %v2842 = vld [vmem:[%s2276 + $0x6a] sm:$0xff]
        %v2843 = vld [vmem:[%s2276 + $0x7a] sm:$0xff]
        %v2844 = vld [vmem:[%s2276 + $0x82] sm:$0xff]
        %v2845 = vld [vmem:[%s2276 + $0x92] sm:$0xff]
        %v2846 = vld [vmem:[%s2276 + $0x9a] sm:$0xff]
        %v2847 = vld [vmem:[%s2276 + $0xaa] sm:$0xff]
        %v2848 = vld [vmem:[%s2276 + $0xb2] sm:$0xff]
        %v2849 = vld [vmem:[%s2276 + $0xc2] sm:$0xff]
        %v2850 = vld [vmem:[%s2276 + $0xca] sm:$0xff]
        %v2851 = vld [vmem:[%s2276 + $0xda] sm:$0xff]
        %v2852 = vld [vmem:[%s2276 + $0xe2] sm:$0xff]
        %v2853 = vld [vmem:[%s2276 + $0xf2] sm:$0xff]
        %v2854 = vld [vmem:[%s2276 + $0xfa] sm:$0xff]
        %v2855 = vld [vmem:[%s2276 + $0x10a] sm:$0xff]
        %v2856 = vld [vmem:[%s2276 + $0x112] sm:$0xff]
        %v2857 = vld [vmem:[%s2276 + $0x122] sm:$0xff]
        %v2858 = vld [vmem:[%s2276 + $0x12a] sm:$0xff]
        %v2859 = vld [vmem:[%s2276 + $0x13a] sm:$0xff]
        %v2860 = vld [vmem:[%s2276 + $0x142] sm:$0xff]
        %v2861 = vld [vmem:[%s2276 + $0x152] sm:$0xff]
        %v2862 = vld [vmem:[%s2276 + $0x15a] sm:$0xff]
        %v2863 = vld [vmem:[%s2276 + $0x16a] sm:$0xff]
        %v2864 = vld [vmem:[%s2276 + $0x172] sm:$0xff]
        %s2865 = scalar_lea.vmem %s2, 32
        %v2866 = vld [vmem:[%s2865] sm:$0xf]
        %v2868 = vsel %vm639, %v2833, 0
        %v2871 = vsel %vm639, %v2834, 0
        %v2874 = vsel %vm639, %v2835, 0
        %v2877 = vsel %vm639, %v2836, 0
        %v2880 = vsel %vm639, %v2837, 0
        %v2883 = vsel %vm639, %v2838, 0
        %v2886 = vsel %vm639, %v2839, 0
        %v2889 = vsel %vm639, %v2840, 0
        %v2892 = vsel %vm639, %v2841, 0
        %v2895 = vsel %vm639, %v2842, 0
        %v2898 = vsel %vm639, %v2843, 0
        %v2901 = vsel %vm639, %v2844, 0
        %v2904 = vsel %vm639, %v2845, 0
        %v2907 = vsel %vm639, %v2846, 0
        %v2910 = vsel %vm639, %v2847, 0
        %v2913 = vsel %vm639, %v2848, 0
        %v2916 = vsel %vm639, %v2849, 0
        %v2919 = vsel %vm639, %v2850, 0
        %v2922 = vsel %vm639, %v2851, 0
        %v2925 = vsel %vm639, %v2852, 0
        %v2928 = vsel %vm639, %v2853, 0
        %v2931 = vsel %vm639, %v2854, 0
        %v2934 = vsel %vm639, %v2855, 0
        %v2937 = vsel %vm639, %v2856, 0
        %v2940 = vsel %vm639, %v2857, 0
        %v2943 = vsel %vm639, %v2858, 0
        %v2946 = vsel %vm639, %v2859, 0
        %v2949 = vsel %vm639, %v2860, 0
        %v2952 = vsel %vm639, %v2861, 0
        %v2955 = vsel %vm639, %v2862, 0
        %v2958 = vsel %vm639, %v2863, 0
        %v2961 = vsel %vm639, %v2864, 0
        %v2964 = vsel %vm835, %v2866, 0
        %2966 = vmatpush.msra.mxu0 0.0
        %2967 = vmatpush.msra.mxu0 0.0
        %2968 = vmatpush.msra.mxu0 0.0
        %2969 = vmatpush.msra.mxu0 0.0
        %2970 = vmatpush.msra.mxu0 0.0
        %2971 = vmatpush.msra.mxu0 0.0
        %2972 = vmatpush.msra.mxu0 0.0
        %2973 = vmatpush.msra.mxu0 0.0
        %2974 = vmatpush.msra.mxu0 0.0
        %2975 = vmatpush.msra.mxu0 0.0
        %2976 = vmatpush.msra.mxu0 0.0
        %2977 = vmatpush.msra.mxu0 0.0
        %2978 = vmatpush.msra.mxu0 0.0
        %2979 = vmatpush.msra.mxu0 0.0
        %2980 = vmatpush.msra.mxu0 0.0
        %2981 = vmatpush.msra.mxu0 %v2964
        %2982 = vmatmul.f32.gmra.mxu0 %v2868
        %v2983 = vpop.f32.mrf.mxu0
        %v2984 = vadd.f32 0.0, %v2983
        %2985 = vmatmul.f32.gmra.mxu0 %v2871
        %v2986 = vpop.f32.mrf.mxu0
        %v2987 = vadd.f32 0.0, %v2986
        %2988 = vmatmul.f32.gmra.mxu0 %v2874
        %v2989 = vpop.f32.mrf.mxu0
        %v2990 = vadd.f32 0.0, %v2989
        %2991 = vmatmul.f32.gmra.mxu0 %v2877
        %v2992 = vpop.f32.mrf.mxu0
        %v2993 = vadd.f32 0.0, %v2992
        %2994 = vmatmul.f32.gmra.mxu0 %v2880
        %v2995 = vpop.f32.mrf.mxu0
        %v2996 = vadd.f32 0.0, %v2995
        %2997 = vmatmul.f32.gmra.mxu0 %v2883
        %v2998 = vpop.f32.mrf.mxu0
        %v2999 = vadd.f32 0.0, %v2998
        %3000 = vmatmul.f32.gmra.mxu0 %v2886
        %v3001 = vpop.f32.mrf.mxu0
        %v3002 = vadd.f32 0.0, %v3001
        %3003 = vmatmul.f32.gmra.mxu0 %v2889
        %v3004 = vpop.f32.mrf.mxu0
        %v3005 = vadd.f32 0.0, %v3004
        %3006 = vmatmul.f32.gmra.mxu0 %v2892
        %v3007 = vpop.f32.mrf.mxu0
        %v3008 = vadd.f32 0.0, %v3007
        %3009 = vmatmul.f32.gmra.mxu0 %v2895
        %v3010 = vpop.f32.mrf.mxu0
        %v3011 = vadd.f32 0.0, %v3010
        %3012 = vmatmul.f32.gmra.mxu0 %v2898
        %v3013 = vpop.f32.mrf.mxu0
        %v3014 = vadd.f32 0.0, %v3013
        %3015 = vmatmul.f32.gmra.mxu0 %v2901
        %v3016 = vpop.f32.mrf.mxu0
        %v3017 = vadd.f32 0.0, %v3016
        %3018 = vmatmul.f32.gmra.mxu0 %v2904
        %v3019 = vpop.f32.mrf.mxu0
        %v3020 = vadd.f32 0.0, %v3019
        %3021 = vmatmul.f32.gmra.mxu0 %v2907
        %v3022 = vpop.f32.mrf.mxu0
        %v3023 = vadd.f32 0.0, %v3022
        %3024 = vmatmul.f32.gmra.mxu0 %v2910
        %v3025 = vpop.f32.mrf.mxu0
        %v3026 = vadd.f32 0.0, %v3025
        %3027 = vmatmul.f32.gmra.mxu0 %v2913
        %v3028 = vpop.f32.mrf.mxu0
        %v3029 = vadd.f32 0.0, %v3028
        %3030 = vmatmul.f32.gmra.mxu0 %v2916
        %v3031 = vpop.f32.mrf.mxu0
        %v3032 = vadd.f32 0.0, %v3031
        %3033 = vmatmul.f32.gmra.mxu0 %v2919
        %v3034 = vpop.f32.mrf.mxu0
        %v3035 = vadd.f32 0.0, %v3034
        %3036 = vmatmul.f32.gmra.mxu0 %v2922
        %v3037 = vpop.f32.mrf.mxu0
        %v3038 = vadd.f32 0.0, %v3037
        %3039 = vmatmul.f32.gmra.mxu0 %v2925
        %v3040 = vpop.f32.mrf.mxu0
        %v3041 = vadd.f32 0.0, %v3040
        %3042 = vmatmul.f32.gmra.mxu0 %v2928
        %v3043 = vpop.f32.mrf.mxu0
        %v3044 = vadd.f32 0.0, %v3043
        %3045 = vmatmul.f32.gmra.mxu0 %v2931
        %v3046 = vpop.f32.mrf.mxu0
        %v3047 = vadd.f32 0.0, %v3046
        %3048 = vmatmul.f32.gmra.mxu0 %v2934
        %v3049 = vpop.f32.mrf.mxu0
        %v3050 = vadd.f32 0.0, %v3049
        %3051 = vmatmul.f32.gmra.mxu0 %v2937
        %v3052 = vpop.f32.mrf.mxu0
        %v3053 = vadd.f32 0.0, %v3052
        %3054 = vmatmul.f32.gmra.mxu0 %v2940
        %v3055 = vpop.f32.mrf.mxu0
        %v3056 = vadd.f32 0.0, %v3055
        %3057 = vmatmul.f32.gmra.mxu0 %v2943
        %v3058 = vpop.f32.mrf.mxu0
        %v3059 = vadd.f32 0.0, %v3058
        %3060 = vmatmul.f32.gmra.mxu0 %v2946
        %v3061 = vpop.f32.mrf.mxu0
        %v3062 = vadd.f32 0.0, %v3061
        %3063 = vmatmul.f32.gmra.mxu0 %v2949
        %v3064 = vpop.f32.mrf.mxu0
        %v3065 = vadd.f32 0.0, %v3064
        %3066 = vmatmul.f32.gmra.mxu0 %v2952
        %v3067 = vpop.f32.mrf.mxu0
        %v3068 = vadd.f32 0.0, %v3067
        %3069 = vmatmul.f32.gmra.mxu0 %v2955
        %v3070 = vpop.f32.mrf.mxu0
        %v3071 = vadd.f32 0.0, %v3070
        %3072 = vmatmul.f32.gmra.mxu0 %v2958
        %v3073 = vpop.f32.mrf.mxu0
        %v3074 = vadd.f32 0.0, %v3073
        %3075 = vmatmul.f32.gmra.mxu0 %v2961
        %v3076 = vpop.f32.mrf.mxu0
        %v3077 = vadd.f32 0.0, %v3076
        %3078 = vdwg.mxu0
        %v3079 = vadd.f32 %v2801, %v2984
        %v3080 = vadd.f32 %v2802, %v2987
        %v3081 = vadd.f32 %v2803, %v2990
        %v3082 = vadd.f32 %v2804, %v2993
        %v3083 = vadd.f32 %v2805, %v2996
        %v3084 = vadd.f32 %v2806, %v2999
        %v3085 = vadd.f32 %v2807, %v3002
        %v3086 = vadd.f32 %v2808, %v3005
        %v3087 = vadd.f32 %v2809, %v3008
        %v3088 = vadd.f32 %v2810, %v3011
        %v3089 = vadd.f32 %v2811, %v3014
        %v3090 = vadd.f32 %v2812, %v3017
        %v3091 = vadd.f32 %v2813, %v3020
        %v3092 = vadd.f32 %v2814, %v3023
        %v3093 = vadd.f32 %v2815, %v3026
        %v3094 = vadd.f32 %v2816, %v3029
        %v3095 = vadd.f32 %v2817, %v3032
        %v3096 = vadd.f32 %v2818, %v3035
        %v3097 = vadd.f32 %v2819, %v3038
        %v3098 = vadd.f32 %v2820, %v3041
        %v3099 = vadd.f32 %v2821, %v3044
        %v3100 = vadd.f32 %v2822, %v3047
        %v3101 = vadd.f32 %v2823, %v3050
        %v3102 = vadd.f32 %v2824, %v3053
        %v3103 = vadd.f32 %v2825, %v3056
        %v3104 = vadd.f32 %v2826, %v3059
        %v3105 = vadd.f32 %v2827, %v3062
        %v3106 = vadd.f32 %v2828, %v3065
        %v3107 = vadd.f32 %v2829, %v3068
        %v3108 = vadd.f32 %v2830, %v3071
        %v3109 = vadd.f32 %v2831, %v3074
        %v3110 = vadd.f32 %v2832, %v3077
        %v3111 = vld [vmem:[%s5] sm:$0x1]
        %v3113 = vperm.slane %v3111, 0
        %v3115 = vadd.f32 %v3079, %v3113
        %v3116 = vadd.f32 %v3080, %v3113
        %v3117 = vadd.f32 %v3081, %v3113
        %v3118 = vadd.f32 %v3082, %v3113
        %v3119 = vadd.f32 %v3083, %v3113
        %v3120 = vadd.f32 %v3084, %v3113
        %v3121 = vadd.f32 %v3085, %v3113
        %v3122 = vadd.f32 %v3086, %v3113
        %v3123 = vadd.f32 %v3087, %v3113
        %v3124 = vadd.f32 %v3088, %v3113
        %v3125 = vadd.f32 %v3089, %v3113
        %v3126 = vadd.f32 %v3090, %v3113
        %v3127 = vadd.f32 %v3091, %v3113
        %v3128 = vadd.f32 %v3092, %v3113
        %v3129 = vadd.f32 %v3093, %v3113
        %v3130 = vadd.f32 %v3094, %v3113
        %v3131 = vadd.f32 %v3095, %v3113
        %v3132 = vadd.f32 %v3096, %v3113
        %v3133 = vadd.f32 %v3097, %v3113
        %v3134 = vadd.f32 %v3098, %v3113
        %v3135 = vadd.f32 %v3099, %v3113
        %v3136 = vadd.f32 %v3100, %v3113
        %v3137 = vadd.f32 %v3101, %v3113
        %v3138 = vadd.f32 %v3102, %v3113
        %v3139 = vadd.f32 %v3103, %v3113
        %v3140 = vadd.f32 %v3104, %v3113
        %v3141 = vadd.f32 %v3105, %v3113
        %v3142 = vadd.f32 %v3106, %v3113
        %v3143 = vadd.f32 %v3107, %v3113
        %v3144 = vadd.f32 %v3108, %v3113
        %v3145 = vadd.f32 %v3109, %v3113
        %v3146 = vadd.f32 %v3110, %v3113
        %v3147 = vmax.f32 %v3115, 0.0
        %v3148 = vmax.f32 %v3116, 0.0
        %v3149 = vmax.f32 %v3117, 0.0
        %v3150 = vmax.f32 %v3118, 0.0
        %v3151 = vmax.f32 %v3119, 0.0
        %v3152 = vmax.f32 %v3120, 0.0
        %v3153 = vmax.f32 %v3121, 0.0
        %v3154 = vmax.f32 %v3122, 0.0
        %v3155 = vmax.f32 %v3123, 0.0
        %v3156 = vmax.f32 %v3124, 0.0
        %v3157 = vmax.f32 %v3125, 0.0
        %v3158 = vmax.f32 %v3126, 0.0
        %v3159 = vmax.f32 %v3127, 0.0
        %v3160 = vmax.f32 %v3128, 0.0
        %v3161 = vmax.f32 %v3129, 0.0
        %v3162 = vmax.f32 %v3130, 0.0
        %v3163 = vmax.f32 %v3131, 0.0
        %v3164 = vmax.f32 %v3132, 0.0
        %v3165 = vmax.f32 %v3133, 0.0
        %v3166 = vmax.f32 %v3134, 0.0
        %v3167 = vmax.f32 %v3135, 0.0
        %v3168 = vmax.f32 %v3136, 0.0
        %v3169 = vmax.f32 %v3137, 0.0
        %v3170 = vmax.f32 %v3138, 0.0
        %v3171 = vmax.f32 %v3139, 0.0
        %v3172 = vmax.f32 %v3140, 0.0
        %v3173 = vmax.f32 %v3141, 0.0
        %v3174 = vmax.f32 %v3142, 0.0
        %v3175 = vmax.f32 %v3143, 0.0
        %v3176 = vmax.f32 %v3144, 0.0
        %v3177 = vmax.f32 %v3145, 0.0
        %v3178 = vmax.f32 %v3146, 0.0
        %v3179 = vld [vmem:[%s3] sm:$0xf]
        %v3180 = vld [vmem:[%s6] sm:$0x1]
        %v3182 = vperm.slane %v3180, 0
        %v3185 = vsel %vm639, %v3147, 0
        %v3188 = vsel %vm639, %v3148, 0
        %v3191 = vsel %vm639, %v3149, 0
        %v3194 = vsel %vm639, %v3150, 0
        %v3197 = vsel %vm639, %v3151, 0
        %v3200 = vsel %vm639, %v3152, 0
        %v3203 = vsel %vm639, %v3153, 0
        %v3206 = vsel %vm639, %v3154, 0
        %v3209 = vsel %vm639, %v3155, 0
        %v3212 = vsel %vm639, %v3156, 0
        %v3215 = vsel %vm639, %v3157, 0
        %v3218 = vsel %vm639, %v3158, 0
        %v3221 = vsel %vm639, %v3159, 0
        %v3224 = vsel %vm639, %v3160, 0
        %v3227 = vsel %vm639, %v3161, 0
        %v3230 = vsel %vm639, %v3162, 0
        %v3233 = vsel %vm639, %v3163, 0
        %v3236 = vsel %vm639, %v3164, 0
        %v3239 = vsel %vm639, %v3165, 0
        %v3242 = vsel %vm639, %v3166, 0
        %v3245 = vsel %vm639, %v3167, 0
        %v3248 = vsel %vm639, %v3168, 0
        %v3251 = vsel %vm639, %v3169, 0
        %v3254 = vsel %vm639, %v3170, 0
        %v3257 = vsel %vm639, %v3171, 0
        %v3260 = vsel %vm639, %v3172, 0
        %v3263 = vsel %vm639, %v3173, 0
        %v3266 = vsel %vm639, %v3174, 0
        %v3269 = vsel %vm639, %v3175, 0
        %v3272 = vsel %vm639, %v3176, 0
        %v3275 = vsel %vm639, %v3177, 0
        %v3278 = vsel %vm639, %v3178, 0
        %v3281 = vsel %vm835, %v3179, 0
        %3283 = vmatpush.msra.mxu0 0.0
        %3284 = vmatpush.msra.mxu0 0.0
        %3285 = vmatpush.msra.mxu0 0.0
        %3286 = vmatpush.msra.mxu0 0.0
        %3287 = vmatpush.msra.mxu0 0.0
        %3288 = vmatpush.msra.mxu0 0.0
        %3289 = vmatpush.msra.mxu0 0.0
        %3290 = vmatpush.msra.mxu0 0.0
        %3291 = vmatpush.msra.mxu0 0.0
        %3292 = vmatpush.msra.mxu0 0.0
        %3293 = vmatpush.msra.mxu0 0.0
        %3294 = vmatpush.msra.mxu0 0.0
        %3295 = vmatpush.msra.mxu0 0.0
        %3296 = vmatpush.msra.mxu0 0.0
        %3297 = vmatpush.msra.mxu0 0.0
        %3298 = vmatpush.msra.mxu0 %v3281
        %3299 = vmatmul.f32.gmra.mxu0 %v3185
        %v3300 = vpop.f32.mrf.mxu0
        %v3301 = vadd.f32 %v3182, %v3300
        %3302 = vmatmul.f32.gmra.mxu0 %v3188
        %v3303 = vpop.f32.mrf.mxu0
        %v3304 = vadd.f32 %v3182, %v3303
        %3305 = vmatmul.f32.gmra.mxu0 %v3191
        %v3306 = vpop.f32.mrf.mxu0
        %v3307 = vadd.f32 %v3182, %v3306
        %3308 = vmatmul.f32.gmra.mxu0 %v3194
        %v3309 = vpop.f32.mrf.mxu0
        %v3310 = vadd.f32 %v3182, %v3309
        %3311 = vmatmul.f32.gmra.mxu0 %v3197
        %v3312 = vpop.f32.mrf.mxu0
        %v3313 = vadd.f32 %v3182, %v3312
        %3314 = vmatmul.f32.gmra.mxu0 %v3200
        %v3315 = vpop.f32.mrf.mxu0
        %v3316 = vadd.f32 %v3182, %v3315
        %3317 = vmatmul.f32.gmra.mxu0 %v3203
        %v3318 = vpop.f32.mrf.mxu0
        %v3319 = vadd.f32 %v3182, %v3318
        %3320 = vmatmul.f32.gmra.mxu0 %v3206
        %v3321 = vpop.f32.mrf.mxu0
        %v3322 = vadd.f32 %v3182, %v3321
        %3323 = vmatmul.f32.gmra.mxu0 %v3209
        %v3324 = vpop.f32.mrf.mxu0
        %v3325 = vadd.f32 %v3182, %v3324
        %3326 = vmatmul.f32.gmra.mxu0 %v3212
        %v3327 = vpop.f32.mrf.mxu0
        %v3328 = vadd.f32 %v3182, %v3327
        %3329 = vmatmul.f32.gmra.mxu0 %v3215
        %v3330 = vpop.f32.mrf.mxu0
        %v3331 = vadd.f32 %v3182, %v3330
        %3332 = vmatmul.f32.gmra.mxu0 %v3218
        %v3333 = vpop.f32.mrf.mxu0
        %v3334 = vadd.f32 %v3182, %v3333
        %3335 = vmatmul.f32.gmra.mxu0 %v3221
        %v3336 = vpop.f32.mrf.mxu0
        %v3337 = vadd.f32 %v3182, %v3336
        %3338 = vmatmul.f32.gmra.mxu0 %v3224
        %v3339 = vpop.f32.mrf.mxu0
        %v3340 = vadd.f32 %v3182, %v3339
        %3341 = vmatmul.f32.gmra.mxu0 %v3227
        %v3342 = vpop.f32.mrf.mxu0
        %v3343 = vadd.f32 %v3182, %v3342
        %3344 = vmatmul.f32.gmra.mxu0 %v3230
        %v3345 = vpop.f32.mrf.mxu0
        %v3346 = vadd.f32 %v3182, %v3345
        %3347 = vmatmul.f32.gmra.mxu0 %v3233
        %v3348 = vpop.f32.mrf.mxu0
        %v3349 = vadd.f32 %v3182, %v3348
        %3350 = vmatmul.f32.gmra.mxu0 %v3236
        %v3351 = vpop.f32.mrf.mxu0
        %v3352 = vadd.f32 %v3182, %v3351
        %3353 = vmatmul.f32.gmra.mxu0 %v3239
        %v3354 = vpop.f32.mrf.mxu0
        %v3355 = vadd.f32 %v3182, %v3354
        %3356 = vmatmul.f32.gmra.mxu0 %v3242
        %v3357 = vpop.f32.mrf.mxu0
        %v3358 = vadd.f32 %v3182, %v3357
        %3359 = vmatmul.f32.gmra.mxu0 %v3245
        %v3360 = vpop.f32.mrf.mxu0
        %v3361 = vadd.f32 %v3182, %v3360
        %3362 = vmatmul.f32.gmra.mxu0 %v3248
        %v3363 = vpop.f32.mrf.mxu0
        %v3364 = vadd.f32 %v3182, %v3363
        %3365 = vmatmul.f32.gmra.mxu0 %v3251
        %v3366 = vpop.f32.mrf.mxu0
        %v3367 = vadd.f32 %v3182, %v3366
        %3368 = vmatmul.f32.gmra.mxu0 %v3254
        %v3369 = vpop.f32.mrf.mxu0
        %v3370 = vadd.f32 %v3182, %v3369
        %3371 = vmatmul.f32.gmra.mxu0 %v3257
        %v3372 = vpop.f32.mrf.mxu0
        %v3373 = vadd.f32 %v3182, %v3372
        %3374 = vmatmul.f32.gmra.mxu0 %v3260
        %v3375 = vpop.f32.mrf.mxu0
        %v3376 = vadd.f32 %v3182, %v3375
        %3377 = vmatmul.f32.gmra.mxu0 %v3263
        %v3378 = vpop.f32.mrf.mxu0
        %v3379 = vadd.f32 %v3182, %v3378
        %3380 = vmatmul.f32.gmra.mxu0 %v3266
        %v3381 = vpop.f32.mrf.mxu0
        %v3382 = vadd.f32 %v3182, %v3381
        %3383 = vmatmul.f32.gmra.mxu0 %v3269
        %v3384 = vpop.f32.mrf.mxu0
        %v3385 = vadd.f32 %v3182, %v3384
        %3386 = vmatmul.f32.gmra.mxu0 %v3272
        %v3387 = vpop.f32.mrf.mxu0
        %v3388 = vadd.f32 %v3182, %v3387
        %3389 = vmatmul.f32.gmra.mxu0 %v3275
        %v3390 = vpop.f32.mrf.mxu0
        %v3391 = vadd.f32 %v3182, %v3390
        %3392 = vmatmul.f32.gmra.mxu0 %v3278
        %v3393 = vpop.f32.mrf.mxu0
        %v3394 = vadd.f32 %v3182, %v3393
        %3395 = vdwg.mxu0
        %v3396 = vld [vmem:[%s267] sm:$0xff]
        %v3397 = vld [vmem:[%s267 + $0x8] sm:$0xff]
        %v3398 = vld [vmem:[%s267 + $0x10] sm:$0xff]
        %v3399 = vld [vmem:[%s267 + $0x18] sm:$0xff]
        %v3400 = vld [vmem:[%s267 + $0x20] sm:$0xff]
        %v3401 = vld [vmem:[%s267 + $0x28] sm:$0xff]
        %v3402 = vld [vmem:[%s267 + $0x30] sm:$0xff]
        %v3403 = vld [vmem:[%s267 + $0x38] sm:$0xff]
        %v3404 = vld [vmem:[%s267 + $0x40] sm:$0xff]
        %v3405 = vld [vmem:[%s267 + $0x48] sm:$0xff]
        %v3406 = vld [vmem:[%s267 + $0x50] sm:$0xff]
        %v3407 = vld [vmem:[%s267 + $0x58] sm:$0xff]
        %v3408 = vld [vmem:[%s267 + $0x60] sm:$0xff]
        %v3409 = vld [vmem:[%s267 + $0x68] sm:$0xff]
        %v3410 = vld [vmem:[%s267 + $0x70] sm:$0xff]
        %v3411 = vld [vmem:[%s267 + $0x78] sm:$0xff]
        %v3412 = vld [vmem:[%s267 + $0x80] sm:$0xff]
        %v3413 = vld [vmem:[%s267 + $0x88] sm:$0xff]
        %v3414 = vld [vmem:[%s267 + $0x90] sm:$0xff]
        %v3415 = vld [vmem:[%s267 + $0x98] sm:$0xff]
        %v3416 = vld [vmem:[%s267 + $0xa0] sm:$0xff]
        %v3417 = vld [vmem:[%s267 + $0xa8] sm:$0xff]
        %v3418 = vld [vmem:[%s267 + $0xb0] sm:$0xff]
        %v3419 = vld [vmem:[%s267 + $0xb8] sm:$0xff]
        %v3420 = vld [vmem:[%s267 + $0xc0] sm:$0xff]
        %v3421 = vld [vmem:[%s267 + $0xc8] sm:$0xff]
        %v3422 = vld [vmem:[%s267 + $0xd0] sm:$0xff]
        %v3423 = vld [vmem:[%s267 + $0xd8] sm:$0xff]
        %v3424 = vld [vmem:[%s267 + $0xe0] sm:$0xff]
        %v3425 = vld [vmem:[%s267 + $0xe8] sm:$0xff]
        %v3426 = vld [vmem:[%s267 + $0xf0] sm:$0xff]
        %v3427 = vld [vmem:[%s267 + $0xf8] sm:$0xff]
        %v3428 = vadd.f32 %v3301, %v3396
        %v3429 = vadd.f32 %v3304, %v3397
        %v3430 = vadd.f32 %v3307, %v3398
        %v3431 = vadd.f32 %v3310, %v3399
        %v3432 = vadd.f32 %v3313, %v3400
        %v3433 = vadd.f32 %v3316, %v3401
        %v3434 = vadd.f32 %v3319, %v3402
        %v3435 = vadd.f32 %v3322, %v3403
        %v3436 = vadd.f32 %v3325, %v3404
        %v3437 = vadd.f32 %v3328, %v3405
        %v3438 = vadd.f32 %v3331, %v3406
        %v3439 = vadd.f32 %v3334, %v3407
        %v3440 = vadd.f32 %v3337, %v3408
        %v3441 = vadd.f32 %v3340, %v3409
        %v3442 = vadd.f32 %v3343, %v3410
        %v3443 = vadd.f32 %v3346, %v3411
        %v3444 = vadd.f32 %v3349, %v3412
        %v3445 = vadd.f32 %v3352, %v3413
        %v3446 = vadd.f32 %v3355, %v3414
        %v3447 = vadd.f32 %v3358, %v3415
        %v3448 = vadd.f32 %v3361, %v3416
        %v3449 = vadd.f32 %v3364, %v3417
        %v3450 = vadd.f32 %v3367, %v3418
        %v3451 = vadd.f32 %v3370, %v3419
        %v3452 = vadd.f32 %v3373, %v3420
        %v3453 = vadd.f32 %v3376, %v3421
        %v3454 = vadd.f32 %v3379, %v3422
        %v3455 = vadd.f32 %v3382, %v3423
        %v3456 = vadd.f32 %v3385, %v3424
        %v3457 = vadd.f32 %v3388, %v3425
        %v3458 = vadd.f32 %v3391, %v3426
        %v3459 = vadd.f32 %v3394, %v3427
        %v3460 = vmax.f32 %v3428, 0.0
        %v3461 = vmax.f32 %v3429, 0.0
        %v3462 = vmax.f32 %v3430, 0.0
        %v3463 = vmax.f32 %v3431, 0.0
        %v3464 = vmax.f32 %v3432, 0.0
        %v3465 = vmax.f32 %v3433, 0.0
        %v3466 = vmax.f32 %v3434, 0.0
        %v3467 = vmax.f32 %v3435, 0.0
        %v3468 = vmax.f32 %v3436, 0.0
        %v3469 = vmax.f32 %v3437, 0.0
        %v3470 = vmax.f32 %v3438, 0.0
        %v3471 = vmax.f32 %v3439, 0.0
        %v3472 = vmax.f32 %v3440, 0.0
        %v3473 = vmax.f32 %v3441, 0.0
        %v3474 = vmax.f32 %v3442, 0.0
        %v3475 = vmax.f32 %v3443, 0.0
        %v3476 = vmax.f32 %v3444, 0.0
        %v3477 = vmax.f32 %v3445, 0.0
        %v3478 = vmax.f32 %v3446, 0.0
        %v3479 = vmax.f32 %v3447, 0.0
        %v3480 = vmax.f32 %v3448, 0.0
        %v3481 = vmax.f32 %v3449, 0.0
        %v3482 = vmax.f32 %v3450, 0.0
        %v3483 = vmax.f32 %v3451, 0.0
        %v3484 = vmax.f32 %v3452, 0.0
        %v3485 = vmax.f32 %v3453, 0.0
        %v3486 = vmax.f32 %v3454, 0.0
        %v3487 = vmax.f32 %v3455, 0.0
        %v3488 = vmax.f32 %v3456, 0.0
        %v3489 = vmax.f32 %v3457, 0.0
        %v3490 = vmax.f32 %v3458, 0.0
        %v3491 = vmax.f32 %v3459, 0.0
        %3492 = vst.msk [vmem:[%s298] sm:$0xff] %vm396, %v3460
        %3493 = vst.msk [vmem:[%s298 + $0x8] sm:$0xff] %vm396, %v3461
        %3494 = vst.msk [vmem:[%s298 + $0x10] sm:$0xff] %vm396, %v3462
        %3495 = vst.msk [vmem:[%s298 + $0x18] sm:$0xff] %vm396, %v3463
        %3496 = vst.msk [vmem:[%s298 + $0x20] sm:$0xff] %vm396, %v3464
        %3497 = vst.msk [vmem:[%s298 + $0x28] sm:$0xff] %vm396, %v3465
        %3498 = vst.msk [vmem:[%s298 + $0x30] sm:$0xff] %vm396, %v3466
        %3499 = vst.msk [vmem:[%s298 + $0x38] sm:$0xff] %vm396, %v3467
        %3500 = vst.msk [vmem:[%s298 + $0x40] sm:$0xff] %vm396, %v3468
        %3501 = vst.msk [vmem:[%s298 + $0x48] sm:$0xff] %vm396, %v3469
        %3502 = vst.msk [vmem:[%s298 + $0x50] sm:$0xff] %vm396, %v3470
        %3503 = vst.msk [vmem:[%s298 + $0x58] sm:$0xff] %vm396, %v3471
        %3504 = vst.msk [vmem:[%s298 + $0x60] sm:$0xff] %vm396, %v3472
        %3505 = vst.msk [vmem:[%s298 + $0x68] sm:$0xff] %vm396, %v3473
        %3506 = vst.msk [vmem:[%s298 + $0x70] sm:$0xff] %vm396, %v3474
        %3507 = vst.msk [vmem:[%s298 + $0x78] sm:$0xff] %vm396, %v3475
        %3508 = vst.msk [vmem:[%s298 + $0x80] sm:$0xff] %vm396, %v3476
        %3509 = vst.msk [vmem:[%s298 + $0x88] sm:$0xff] %vm396, %v3477
        %3510 = vst.msk [vmem:[%s298 + $0x90] sm:$0xff] %vm396, %v3478
        %3511 = vst.msk [vmem:[%s298 + $0x98] sm:$0xff] %vm396, %v3479
        %3512 = vst.msk [vmem:[%s298 + $0xa0] sm:$0xff] %vm396, %v3480
        %3513 = vst.msk [vmem:[%s298 + $0xa8] sm:$0xff] %vm396, %v3481
        %3514 = vst.msk [vmem:[%s298 + $0xb0] sm:$0xff] %vm396, %v3482
        %3515 = vst.msk [vmem:[%s298 + $0xb8] sm:$0xff] %vm396, %v3483
        %3516 = vst.msk [vmem:[%s298 + $0xc0] sm:$0xff] %vm396, %v3484
        %3517 = vst.msk [vmem:[%s298 + $0xc8] sm:$0xff] %vm396, %v3485
        %3518 = vst.msk [vmem:[%s298 + $0xd0] sm:$0xff] %vm396, %v3486
        %3519 = vst.msk [vmem:[%s298 + $0xd8] sm:$0xff] %vm396, %v3487
        %3520 = vst.msk [vmem:[%s298 + $0xe0] sm:$0xff] %vm396, %v3488
        %3521 = vst.msk [vmem:[%s298 + $0xe8] sm:$0xff] %vm396, %v3489
        %3522 = vst.msk [vmem:[%s298 + $0xf0] sm:$0xff] %vm396, %v3490
        %3523 = vst.msk [vmem:[%s298 + $0xf8] sm:$0xff] %vm396, %v3491
        %s3524 = sand.u32 %s184, 1
        %s3525 = scalar_lea.sflag [#allocation5], %s3524
        %s3526 = sand.u32 %s184, 1
        %s3527 = smul.addr %s3526, 256
        %s3528 = scalar_lea.vmem [#allocation6], %s3527
        // Predicated region
        $region57: #{tpu_custom_call.1} parent=47 // pred_check
          %p3529 = pneg %p194
        $region58: #{tpu_custom_call.1} parent=47 // pred_check_branch
          %3531 = sbr.rel (%p3529) target = $region60
        $region59: #{tpu_custom_call.1} parent=47 // pred_region
          %3533 = vsyncadd %s3525, 0
          %s3534 = smul.addr %s24, 32
          %s3535 = smul.addr %s3534, 8
          %s3536 = scalar_lea.hbm %s7, %s3535
          %s3537 = sshll.u32 %s3528, 4
          %s3538 = int_to_ptr.vmem [resolvable:$true] %s3537
          %s3539 = sshll.u32 %s3536, 4
          %s3540 = int_to_ptr.hbm [resolvable:$true] %s3539
          %3545 = dma.vmem_to_hbm [thread:$0]  %s3538, 4096, %s3540, %s3525, 128, 128, 8
        $region60: #{tpu_custom_call.1} parent=47 // pred_fallthru
          _
      $region48: #{tpu_custom_call.1} parent=5 // pred_fallthru
        _
      %p3546 = scmp.le.s32.totalorder 2, %s19
      // Predicated region
      $region61: #{tpu_custom_call.1} parent=5 // pred_check
        %p3547 = pneg %p3546
      $region62: #{tpu_custom_call.1} parent=5 // pred_check_branch
        %3549 = sbr.rel (%p3547) target = $region64
      $region63: #{tpu_custom_call.1} parent=5 // pred_region
        %s3550 = ssub.s32 %s19, 2
        // Predicated region
        $region65: #{tpu_custom_call.1} parent=63 // pred_check
          %p3551 = pneg %p200
        $region66: #{tpu_custom_call.1} parent=63 // pred_check_branch
          %3553 = sbr.rel (%p3551) target = $region68
        $region67: #{tpu_custom_call.1} parent=63 // pred_region
          %s3554 = sand.u32 %s185, 1
          %s3555 = scalar_lea.sflag [#allocation5], %s3554
          %s3556 = sand.u32 %s185, 1
          %s3557 = smul.addr %s3556, 256
          %s3558 = scalar_lea.vmem [#allocation6], %s3557
          %3560 = dma.done %s3555, 4096
        $region68: #{tpu_custom_call.1} parent=63 // pred_fallthru
          _
      $region64: #{tpu_custom_call.1} parent=5 // pred_fallthru
        _
    $region6: #{tpu_custom_call.1} parent=1 // loop_footer
      %s23 = sadd.s32 1, %s19
    $region7: #{tpu_custom_call.1} parent=1 // loop_footer_branch
      %18 = sbr.rel target = $region3
    $region8: #{tpu_custom_call.1} parent=1 // loop_exit
      _
    %3561 = vsyncpa [#allocation4], 1
    %s3562 = scalar_lea.sflag [#allocation4], 1
    %3563 = vsyncpa %s3562, 1
    %3564 = vsyncpa [#allocation5], 1
    %s3565 = scalar_lea.sflag [#allocation5], 1
    %3566 = vsyncpa %s3565, 1

</llo_original>
